<compile_context>
chip_gen: v7x
topology: tpu7x:2x2x1
jax: 0.10.0
libtpu: 0.0.40
codegen_flags: <defaults>
</compile_context>

<pallas_src>
import jax
import jax.numpy as jnp
from jax.experimental import pallas as pl
from jax.experimental.pallas import tpu as pltpu

NUM_FEATURES = 2048        # ResNet-101: layer4[-1] second-to-last child num_features
NUM_CLASSES = 10
NUM_CLASSES_PADDED = 128   # lane-dense kernel output; wrapper slices to NUM_CLASSES
BN_EPS = 1e-5


def _round_up(x, m):
    return ((x + m - 1) // m) * m


# ---------------------------------------------------------------------------
# Kernel: bf16 matmul chain (BN already folded into the weights), ReLU between
# layers, lane-dense padded logits out.  One grid step = one batch tile.
# ---------------------------------------------------------------------------
def _head_kernel(feat_ref, wf_ref, bf_ref, w1_ref, b1_ref, w2_ref, b2_ref,
                 w3_ref, b3_ref, w4_ref, b4_ref, logit_ref):
    f = feat_ref[...].astype(jnp.bfloat16)
    # trunk projection C -> 2048 with BatchNorm1d(2048) folded in
    h = jnp.dot(f, wf_ref[...], preferred_element_type=jnp.float32) + bf_ref[...]
    # Linear 2048->512 (+BN folded) + ReLU  (Dropout = identity in eval)
    h = jnp.maximum(jnp.dot(h.astype(jnp.bfloat16), w1_ref[...],
                            preferred_element_type=jnp.float32) + b1_ref[...], 0.0)
    # Linear 512->256 (+BN folded) + ReLU
    h = jnp.maximum(jnp.dot(h.astype(jnp.bfloat16), w2_ref[...],
                            preferred_element_type=jnp.float32) + b2_ref[...], 0.0)
    # Linear 256->128 (+BN folded) + ReLU
    h = jnp.maximum(jnp.dot(h.astype(jnp.bfloat16), w3_ref[...],
                            preferred_element_type=jnp.float32) + b3_ref[...], 0.0)
    # Linear 128->num_classes (padded to 128 lanes)
    logit_ref[...] = (jnp.dot(h.astype(jnp.bfloat16), w4_ref[...],
                              preferred_element_type=jnp.float32) + b4_ref[...])


# ---------------------------------------------------------------------------
# Wrapper
# ---------------------------------------------------------------------------
def new_resnet_forward(x_nchw, kparams, tile_n=128):
    """Forward pass. tile_n: batch tile (128 suits v5e's 128-deep MXU; use 256
    on v6e/v7x for larger batches)."""
    n, c, hh, ww = x_nchw.shape

    # Trunk stand-in GAP done in XLA; kernel never sees the (N, C, H*W) tensor.
    feat = jnp.mean(x_nchw.astype(jnp.float32).reshape(n, c, hh * ww), axis=-1)

    tile_n = min(tile_n, _round_up(n, 8))          # multiple of 8 sublanes
    n_pad = _round_up(n, tile_n)
    if n_pad != n:
        feat = jnp.pad(feat, ((0, n_pad - n), (0, 0)))

    weights = (kparams["wf"], kparams["bf"],
               kparams["w1"], kparams["b1"],
               kparams["w2"], kparams["b2"],
               kparams["w3"], kparams["b3"],
               kparams["w4"], kparams["b4"])

    def resident(arr):
        # Constant block index => weight stays resident in VMEM across batch tiles.
        nd = arr.ndim
        return pl.BlockSpec(arr.shape, lambda i, _nd=nd: (0,) * _nd)

    grid = (n_pad // tile_n,)
    logits_padded = pl.pallas_call(
        _head_kernel,
        out_shape=jax.ShapeDtypeStruct((n_pad, NUM_CLASSES_PADDED), jnp.float32),
        grid=grid,
        in_specs=[pl.BlockSpec((tile_n, c), lambda i: (i, 0))]
                 + [resident(w) for w in weights],
        out_specs=pl.BlockSpec((tile_n, NUM_CLASSES_PADDED), lambda i: (i, 0)),
        compiler_params=pltpu.CompilerParams(
            dimension_semantics=("parallel",)),
    )(feat, *weights)

    logit = logits_padded[:n, :NUM_CLASSES]
    prob = jax.nn.softmax(logit, axis=1)           # tiny; cheaper in XLA than masked lanes
    return logit, prob


# ---------------------------------------------------------------------------
# Parameter construction (raw PyTorch-like params) and BN folding
# ---------------------------------------------------------------------------
def _bn_fold(key, nfeat):
    """Eval-mode BatchNorm1d expressed as per-feature scale/shift."""
    kg, kb, km, kv = jax.random.split(key, 4)
    gamma = 1.0 + 0.1 * jax.random.normal(kg, (nfeat,), jnp.float32)
    beta = 0.1 * jax.random.normal(kb, (nfeat,), jnp.float32)
    running_mean = 0.1 * jax.random.normal(km, (nfeat,), jnp.float32)
    running_var = jnp.abs(jax.random.normal(kv, (nfeat,), jnp.float32)) + 0.5
    scale = gamma / jnp.sqrt(running_var + BN_EPS)
    shift = beta - running_mean * scale
    return scale.reshape(1, nfeat), shift.reshape(1, nfeat)


def _linear(key, fan_in, fan_out):
    kw, kb = jax.random.split(key)
    wgt = jax.random.normal(kw, (fan_in, fan_out), jnp.float32) / jnp.sqrt(float(fan_in))
    bias = 0.01 * jax.random.normal(kb, (1, fan_out), jnp.float32)
    return wgt, bias


def init_params(key, in_channels):
    keys = jax.random.split(key, 9)
    p = {}
    p["w_feat"] = jax.random.normal(keys[0], (in_channels, NUM_FEATURES),
                                    jnp.float32) / jnp.sqrt(float(in_channels))
    p["s0"], p["t0"] = _bn_fold(keys[1], NUM_FEATURES)
    p["w1"], p["b1"] = _linear(keys[2], NUM_FEATURES, 512)
    p["s1"], p["t1"] = _bn_fold(keys[3], 512)
    p["w2"], p["b2"] = _linear(keys[4], 512, 256)
    p["s2"], p["t2"] = _bn_fold(keys[5], 256)
    p["w3"], p["b3"] = _linear(keys[6], 256, 128)
    p["s3"], p["t3"] = _bn_fold(keys[7], 128)
    p["w4"], p["b4"] = _linear(keys[8], 128, NUM_CLASSES)
    return p


def fold_params(p, weight_dtype=jnp.bfloat16):
    """Fold eval-mode BatchNorm1d into the adjacent Linear weights/biases and
    pad the classifier to a lane-dense 128-wide output.  Exact in f32."""
    kp = {}
    # BN(2048) sits *before* Linear(2048->512): fold it into the trunk projection.
    kp["wf"] = (p["w_feat"] * p["s0"]).astype(weight_dtype)     # (C,2048)*(1,2048)
    kp["bf"] = p["t0"].astype(jnp.float32)
    # Linear followed by BN:  (x@w + b)*s + t  ==  x@(w*s) + (b*s + t)
    kp["w1"] = (p["w1"] * p["s1"]).astype(weight_dtype)
    kp["b1"] = (p["b1"] * p["s1"] + p["t1"]).astype(jnp.float32)
    kp["w2"] = (p["w2"] * p["s2"]).astype(weight_dtype)
    kp["b2"] = (p["b2"] * p["s2"] + p["t2"]).astype(jnp.float32)
    kp["w3"] = (p["w3"] * p["s3"]).astype(weight_dtype)
    kp["b3"] = (p["b3"] * p["s3"] + p["t3"]).astype(jnp.float32)
    pad = NUM_CLASSES_PADDED - NUM_CLASSES
    kp["w4"] = jnp.pad(p["w4"], ((0, 0), (0, pad))).astype(weight_dtype)
    kp["b4"] = jnp.pad(p["b4"], ((0, 0), (0, pad))).astype(jnp.float32)
    return kp


# ---------------------------------------------------------------------------
# References
# ---------------------------------------------------------------------------
def _reference_folded(x_nchw, kp, compute_dtype=jnp.bfloat16):
    """Same math path as the kernel (folded params, compute_dtype matmul inputs,
    f32 accumulation), in plain JAX."""
    n, c, h, w = x_nchw.shape
    feat = jnp.mean(x_nchw.astype(jnp.float32).reshape(n, c, h * w), axis=-1)

    def mm(a, wgt):
        return jnp.dot(a.astype(compute_dtype), wgt.astype(compute_dtype),
                       preferred_element_type=jnp.float32,
                       precision=jax.lax.Precision.HIGHEST)

    hdn = mm(feat, kp["wf"]) + kp["bf"]
    hdn = jnp.maximum(mm(hdn, kp["w1"]) + kp["b1"], 0.0)
    hdn = jnp.maximum(mm(hdn, kp["w2"]) + kp["b2"], 0.0)
    hdn = jnp.maximum(mm(hdn, kp["w3"]) + kp["b3"], 0.0)
    logit = (mm(hdn, kp["w4"]) + kp["b4"])[:, :NUM_CLASSES]
    return logit, jax.nn.softmax(logit, axis=1)


def _reference_unfolded(x_nchw, p):
    """f32 reference of the original (un-folded) module math."""
    n, c, h, w = x_nchw.shape
    feat = jnp.mean(x_nchw.astype(jnp.float32).reshape(n, c, h * w), axis=-1)

    def mm(a, wgt):
        return jnp.dot(a, wgt, preferred_element_type=jnp.float32,
                       precision=jax.lax.Precision.HIGHEST)

    hdn = mm(feat, p["w_feat"])
    hdn = hdn * p["s0"] + p["t0"]
    hdn = jnp.maximum((mm(hdn, p["w1"]) + p["b1"]) * p["s1"] + p["t1"], 0.0)
    hdn = jnp.maximum((mm(hdn, p["w2"]) + p["b2"]) * p["s2"] + p["t2"], 0.0)
    hdn = jnp.maximum((mm(hdn, p["w3"]) + p["b3"]) * p["s3"] + p["t3"], 0.0)
    logit = mm(hdn, p["w4"]) + p["b4"]
    return logit, jax.nn.softmax(logit, axis=1)


if __name__ == "__main__":
    key = jax.random.PRNGKey(0)
    k_x, k_p = jax.random.split(key)

    batch, channels, spatial = 2, 4, 16
    x = jax.random.normal(k_x, (batch, channels, spatial, spatial), jnp.float32)
    raw_params = init_params(k_p, channels)
    kparams = fold_params(raw_params)                     # bf16 weights, f32 biases

    logit, prob = new_resnet_forward(x, kparams)
    jax.block_until_ready((logit, prob))

    # 1) Kernel matches the same-math (folded, bf16) XLA reference.
    ref_logit, ref_prob = _reference_folded(x, kparams)
    assert logit.shape == (batch, NUM_CLASSES) and prob.shape == (batch, NUM_CLASSES)
    assert jnp.allclose(logit, ref_logit, rtol=1e-3, atol=1e-3)
    assert jnp.allclose(prob, ref_prob, rtol=1e-3, atol=1e-4)
    assert jnp.allclose(jnp.sum(prob, axis=1), 1.0, atol=1e-5)

    # 2) BN-folding algebra is exact: f32 folded path == f32 un-folded module math.
    kparams_f32 = fold_params(raw_params, weight_dtype=jnp.float32)
    fold_logit, _ = _reference_folded(x, kparams_f32, compute_dtype=jnp.float32)
    orig_logit, _ = _reference_unfolded(x, raw_params)
    assert jnp.allclose(fold_logit, orig_logit, rtol=1e-4, atol=1e-4)

    print("KERNEL_OK")
</pallas_src>

<mosaic_0001>
module attributes {stable_mosaic.version = 11 : i64} {
  func.func @_head_kernel(%arg0: i32, %arg1: memref<8x4xf32, #tpu.memory_space<vmem>>, %arg2: memref<4x2048xbf16, #tpu.memory_space<vmem>>, %arg3: memref<1x2048xf32, #tpu.memory_space<vmem>>, %arg4: memref<2048x512xbf16, #tpu.memory_space<vmem>>, %arg5: memref<1x512xf32, #tpu.memory_space<vmem>>, %arg6: memref<512x256xbf16, #tpu.memory_space<vmem>>, %arg7: memref<1x256xf32, #tpu.memory_space<vmem>>, %arg8: memref<256x128xbf16, #tpu.memory_space<vmem>>, %arg9: memref<1x128xf32, #tpu.memory_space<vmem>>, %arg10: memref<128x128xbf16, #tpu.memory_space<vmem>>, %arg11: memref<1x128xf32, #tpu.memory_space<vmem>>, %arg12: memref<8x128xf32, #tpu.memory_space<vmem>>) attributes {dimension_semantics = [#tpu.dimension_semantics<parallel>], iteration_bounds = array<i64: 1>, scalar_prefetch = 0 : i64, scratch_operands = 0 : i64, tpu.core_type = #tpu.core_type<tc>, window_params = [{transform_indices = @transform_0, window_bounds = array<i64: 8, 4>}, {pipeline_mode = #tpu.pipeline_mode<synchronous>, transform_indices = @transform_1, window_bounds = array<i64: 4, 2048>}, {pipeline_mode = #tpu.pipeline_mode<synchronous>, transform_indices = @transform_2, window_bounds = array<i64: 1, 2048>}, {pipeline_mode = #tpu.pipeline_mode<synchronous>, transform_indices = @transform_3, window_bounds = array<i64: 2048, 512>}, {pipeline_mode = #tpu.pipeline_mode<synchronous>, transform_indices = @transform_4, window_bounds = array<i64: 1, 512>}, {pipeline_mode = #tpu.pipeline_mode<synchronous>, transform_indices = @transform_5, window_bounds = array<i64: 512, 256>}, {pipeline_mode = #tpu.pipeline_mode<synchronous>, transform_indices = @transform_6, window_bounds = array<i64: 1, 256>}, {pipeline_mode = #tpu.pipeline_mode<synchronous>, transform_indices = @transform_7, window_bounds = array<i64: 256, 128>}, {pipeline_mode = #tpu.pipeline_mode<synchronous>, transform_indices = @transform_8, window_bounds = array<i64: 1, 128>}, {pipeline_mode = #tpu.pipeline_mode<synchronous>, transform_indices = @transform_9, window_bounds = array<i64: 128, 128>}, {pipeline_mode = #tpu.pipeline_mode<synchronous>, transform_indices = @transform_10, window_bounds = array<i64: 1, 128>}, {transform_indices = @transform_11, window_bounds = array<i64: 8, 128>}]} {
    %c0 = arith.constant 0 : index
    %c0_0 = arith.constant 0 : index
    %0 = vector.load %arg1[%c0, %c0_0] : memref<8x4xf32, #tpu.memory_space<vmem>>, vector<8x4xf32>
    %1 = arith.truncf %0 : vector<8x4xf32> to vector<8x4xbf16>
    %c0_1 = arith.constant 0 : index
    %c0_2 = arith.constant 0 : index
    %2 = vector.load %arg2[%c0_1, %c0_2] : memref<4x2048xbf16, #tpu.memory_space<vmem>>, vector<4x2048xbf16>
    %cst = arith.constant dense<0.000000e+00> : vector<8x2048xf32>
    %3 = tpu.matmul %1, %2, %cst {dimension_numbers = #tpu.dot_dimension_numbers<[1], [0], [0], [1], [0, 0, 1, 1], [], []>} : vector<8x4xbf16>, vector<4x2048xbf16>, vector<8x2048xf32> -> vector<8x2048xf32>
    %c0_3 = arith.constant 0 : index
    %c0_4 = arith.constant 0 : index
    %4 = vector.load %arg3[%c0_3, %c0_4] : memref<1x2048xf32, #tpu.memory_space<vmem>>, vector<1x2048xf32>
    %5 = vector.broadcast %4 : vector<1x2048xf32> to vector<8x2048xf32>
    %6 = arith.addf %3, %5 : vector<8x2048xf32>
    %7 = arith.truncf %6 : vector<8x2048xf32> to vector<8x2048xbf16>
    %c0_5 = arith.constant 0 : index
    %c0_6 = arith.constant 0 : index
    %8 = vector.load %arg4[%c0_5, %c0_6] : memref<2048x512xbf16, #tpu.memory_space<vmem>>, vector<2048x512xbf16>
    %cst_7 = arith.constant dense<0.000000e+00> : vector<8x512xf32>
    %9 = tpu.matmul %7, %8, %cst_7 {dimension_numbers = #tpu.dot_dimension_numbers<[1], [0], [0], [1], [0, 0, 1, 1], [], []>} : vector<8x2048xbf16>, vector<2048x512xbf16>, vector<8x512xf32> -> vector<8x512xf32>
    %c0_8 = arith.constant 0 : index
    %c0_9 = arith.constant 0 : index
    %10 = vector.load %arg5[%c0_8, %c0_9] : memref<1x512xf32, #tpu.memory_space<vmem>>, vector<1x512xf32>
    %11 = vector.broadcast %10 : vector<1x512xf32> to vector<8x512xf32>
    %12 = arith.addf %9, %11 : vector<8x512xf32>
    %cst_10 = arith.constant 0.000000e+00 : f32
    %13 = vector.broadcast %cst_10 : f32 to vector<8x512xf32>
    %14 = arith.maximumf %12, %13 : vector<8x512xf32>
    %15 = arith.truncf %14 : vector<8x512xf32> to vector<8x512xbf16>
    %c0_11 = arith.constant 0 : index
    %c0_12 = arith.constant 0 : index
    %16 = vector.load %arg6[%c0_11, %c0_12] : memref<512x256xbf16, #tpu.memory_space<vmem>>, vector<512x256xbf16>
    %cst_13 = arith.constant dense<0.000000e+00> : vector<8x256xf32>
    %17 = tpu.matmul %15, %16, %cst_13 {dimension_numbers = #tpu.dot_dimension_numbers<[1], [0], [0], [1], [0, 0, 1, 1], [], []>} : vector<8x512xbf16>, vector<512x256xbf16>, vector<8x256xf32> -> vector<8x256xf32>
    %c0_14 = arith.constant 0 : index
    %c0_15 = arith.constant 0 : index
    %18 = vector.load %arg7[%c0_14, %c0_15] : memref<1x256xf32, #tpu.memory_space<vmem>>, vector<1x256xf32>
    %19 = vector.broadcast %18 : vector<1x256xf32> to vector<8x256xf32>
    %20 = arith.addf %17, %19 : vector<8x256xf32>
    %cst_16 = arith.constant 0.000000e+00 : f32
    %21 = vector.broadcast %cst_16 : f32 to vector<8x256xf32>
    %22 = arith.maximumf %20, %21 : vector<8x256xf32>
    %23 = arith.truncf %22 : vector<8x256xf32> to vector<8x256xbf16>
    %c0_17 = arith.constant 0 : index
    %c0_18 = arith.constant 0 : index
    %24 = vector.load %arg8[%c0_17, %c0_18] : memref<256x128xbf16, #tpu.memory_space<vmem>>, vector<256x128xbf16>
    %cst_19 = arith.constant dense<0.000000e+00> : vector<8x128xf32>
    %25 = tpu.matmul %23, %24, %cst_19 {dimension_numbers = #tpu.dot_dimension_numbers<[1], [0], [0], [1], [0, 0, 1, 1], [], []>} : vector<8x256xbf16>, vector<256x128xbf16>, vector<8x128xf32> -> vector<8x128xf32>
    %c0_20 = arith.constant 0 : index
    %c0_21 = arith.constant 0 : index
    %26 = vector.load %arg9[%c0_20, %c0_21] : memref<1x128xf32, #tpu.memory_space<vmem>>, vector<1x128xf32>
    %27 = vector.broadcast %26 : vector<1x128xf32> to vector<8x128xf32>
    %28 = arith.addf %25, %27 : vector<8x128xf32>
    %cst_22 = arith.constant 0.000000e+00 : f32
    %29 = vector.broadcast %cst_22 : f32 to vector<8x128xf32>
    %30 = arith.maximumf %28, %29 : vector<8x128xf32>
    %31 = arith.truncf %30 : vector<8x128xf32> to vector<8x128xbf16>
    %c0_23 = arith.constant 0 : index
    %c0_24 = arith.constant 0 : index
    %32 = vector.load %arg10[%c0_23, %c0_24] : memref<128x128xbf16, #tpu.memory_space<vmem>>, vector<128x128xbf16>
    %cst_25 = arith.constant dense<0.000000e+00> : vector<8x128xf32>
    %33 = tpu.matmul %31, %32, %cst_25 {dimension_numbers = #tpu.dot_dimension_numbers<[1], [0], [0], [1], [0, 0, 1, 1], [], []>} : vector<8x128xbf16>, vector<128x128xbf16>, vector<8x128xf32> -> vector<8x128xf32>
    %c0_26 = arith.constant 0 : index
    %c0_27 = arith.constant 0 : index
    %34 = vector.load %arg11[%c0_26, %c0_27] : memref<1x128xf32, #tpu.memory_space<vmem>>, vector<1x128xf32>
    %35 = vector.broadcast %34 : vector<1x128xf32> to vector<8x128xf32>
    %36 = arith.addf %33, %35 : vector<8x128xf32>
    %c0_28 = arith.constant 0 : index
    %c0_29 = arith.constant 0 : index
    %37 = vector.load %arg12[%c0_28, %c0_29] : memref<8x128xf32, #tpu.memory_space<vmem>>, vector<8x128xf32>
    tpu.vector_store %arg12[%c0_28, %c0_29], %36 {strides = array<i32>} : memref<8x128xf32, #tpu.memory_space<vmem>>, vector<8x128xf32>,
    return
  }
  func.func @transform_0(%arg0: i32) -> (i32, i32) {
    %c0_i32 = arith.constant 0 : i32
    %c0_i32_0 = arith.constant 0 : i32
    return %arg0, %c0_i32 : i32, i32
  }
  func.func @transform_1(%arg0: i32) -> (i32, i32) {
    %c0_i32 = arith.constant 0 : i32
    %c0_i32_0 = arith.constant 0 : i32
    %c0_i32_1 = arith.constant 0 : i32
    return %c0_i32, %c0_i32_0 : i32, i32
  }
  func.func @transform_2(%arg0: i32) -> (i32, i32) {
    %c0_i32 = arith.constant 0 : i32
    %c0_i32_0 = arith.constant 0 : i32
    %c0_i32_1 = arith.constant 0 : i32
    return %c0_i32, %c0_i32_0 : i32, i32
  }
  func.func @transform_3(%arg0: i32) -> (i32, i32) {
    %c0_i32 = arith.constant 0 : i32
    %c0_i32_0 = arith.constant 0 : i32
    %c0_i32_1 = arith.constant 0 : i32
    return %c0_i32, %c0_i32_0 : i32, i32
  }
  func.func @transform_4(%arg0: i32) -> (i32, i32) {
    %c0_i32 = arith.constant 0 : i32
    %c0_i32_0 = arith.constant 0 : i32
    %c0_i32_1 = arith.constant 0 : i32
    return %c0_i32, %c0_i32_0 : i32, i32
  }
  func.func @transform_5(%arg0: i32) -> (i32, i32) {
    %c0_i32 = arith.constant 0 : i32
    %c0_i32_0 = arith.constant 0 : i32
    %c0_i32_1 = arith.constant 0 : i32
    return %c0_i32, %c0_i32_0 : i32, i32
  }
  func.func @transform_6(%arg0: i32) -> (i32, i32) {
    %c0_i32 = arith.constant 0 : i32
    %c0_i32_0 = arith.constant 0 : i32
    %c0_i32_1 = arith.constant 0 : i32
    return %c0_i32, %c0_i32_0 : i32, i32
  }
  func.func @transform_7(%arg0: i32) -> (i32, i32) {
    %c0_i32 = arith.constant 0 : i32
    %c0_i32_0 = arith.constant 0 : i32
    %c0_i32_1 = arith.constant 0 : i32
    return %c0_i32, %c0_i32_0 : i32, i32
  }
  func.func @transform_8(%arg0: i32) -> (i32, i32) {
    %c0_i32 = arith.constant 0 : i32
    %c0_i32_0 = arith.constant 0 : i32
    %c0_i32_1 = arith.constant 0 : i32
    return %c0_i32, %c0_i32_0 : i32, i32
  }
  func.func @transform_9(%arg0: i32) -> (i32, i32) {
    %c0_i32 = arith.constant 0 : i32
    %c0_i32_0 = arith.constant 0 : i32
    %c0_i32_1 = arith.constant 0 : i32
    return %c0_i32, %c0_i32_0 : i32, i32
  }
  func.func @transform_10(%arg0: i32) -> (i32, i32) {
    %c0_i32 = arith.constant 0 : i32
    %c0_i32_0 = arith.constant 0 : i32
    %c0_i32_1 = arith.constant 0 : i32
    return %c0_i32, %c0_i32_0 : i32, i32
  }
  func.func @transform_11(%arg0: i32) -> (i32, i32) {
    %c0_i32 = arith.constant 0 : i32
    %c0_i32_0 = arith.constant 0 : i32
    return %arg0, %c0_i32 : i32, i32
  }
}

</mosaic_0001>

<llo_original>
// kernel: tpu_custom_call.1
$region0: #{tpu_custom_call.1}
  #allocation0 [shape = 'u32[]', space=smem, size = 0x4, offset = 0x4, fixed_abs, tag = 'smem constant byte address 0x4 - core index']
  #allocation1 [shape = 'u32[144,128]{1,0:T(1,128)}', space=vmem, size = 0x12000, scoped, tag = 'internal scratch']
  %s0 = inlined_call_operand.vmem [shape: f32[8,4], index: 0, kind: input, shape index: {}]
  %s1 = inlined_call_operand.hbm [shape: bf16[4,2048], index: 1, kind: input, shape index: {}]
  %s2 = inlined_call_operand.hbm [shape: f32[1,2048], index: 2, kind: input, shape index: {}]
  %s3 = inlined_call_operand.hbm [shape: bf16[2048,512], index: 3, kind: input, shape index: {}]
  %s4 = inlined_call_operand.hbm [shape: f32[1,512], index: 4, kind: input, shape index: {}]
  %s5 = inlined_call_operand.hbm [shape: bf16[512,256], index: 5, kind: input, shape index: {}]
  %s6 = inlined_call_operand.hbm [shape: f32[1,256], index: 6, kind: input, shape index: {}]
  %s7 = inlined_call_operand.hbm [shape: bf16[256,128], index: 7, kind: input, shape index: {}]
  %s8 = inlined_call_operand.hbm [shape: f32[1,128], index: 8, kind: input, shape index: {}]
  %s9 = inlined_call_operand.hbm [shape: bf16[128,128], index: 9, kind: input, shape index: {}]
  %s10 = inlined_call_operand.hbm [shape: f32[1,128], index: 10, kind: input, shape index: {}]
  %s11 = inlined_call_operand.hbm [shape: f32[8,128], index: 11, kind: output, shape index: {}]
  %s12 = sld [smem:[#allocation0]]
  $region94: #{tpu_custom_call.1} parent=0
    _
  %s14 = ssub.s32 1, %s12
  %s15 = scalar_select 0, %s14, %s12
  $region1: #{tpu_custom_call.1} parent=0
    #allocation2 [shape = 'u8[16384]{0}', space=vmem, size = 0x4000, scoped, tag = 'input window, operand 1, single buffered']
    #allocation3 [shape = 's32[1]{0}', space=sflag, size = 0x4, scoped, tag = 'scoped memory for tpu_custom_call.1']
    #allocation4 [shape = 's32[1]{0}', space=sflag, size = 0x4, scoped, tag = 'scoped memory for tpu_custom_call.1']
    #allocation5 [shape = 'u8[8192]{0}', space=vmem, size = 0x2000, scoped, tag = 'input window, operand 2, single buffered']
    #allocation6 [shape = 's32[1]{0}', space=sflag, size = 0x4, scoped, tag = 'scoped memory for tpu_custom_call.1']
    #allocation7 [shape = 'u8[2097152]{0}', space=vmem, size = 0x200000, scoped, tag = 'input window, operand 3, single buffered']
    #allocation8 [shape = 'u8[2048]{0}', space=vmem, size = 0x800, scoped, tag = 'input window, operand 4, single buffered']
    #allocation9 [shape = 's32[1]{0}', space=sflag, size = 0x4, scoped, tag = 'scoped memory for tpu_custom_call.1']
    #allocation10 [shape = 'u8[262144]{0}', space=vmem, size = 0x40000, scoped, tag = 'input window, operand 5, single buffered']
    #allocation11 [shape = 'u8[1024]{0}', space=vmem, size = 0x400, scoped, tag = 'input window, operand 6, single buffered']
    #allocation12 [shape = 's32[1]{0}', space=sflag, size = 0x4, scoped, tag = 'scoped memory for tpu_custom_call.1']
    #allocation13 [shape = 'u8[65536]{0}', space=vmem, size = 0x10000, scoped, tag = 'input window, operand 7, single buffered']
    #allocation14 [shape = 'u8[512]{0}', space=vmem, size = 0x400, scoped, tag = 'input window, operand 8, single buffered']
    #allocation15 [shape = 's32[1]{0}', space=sflag, size = 0x4, scoped, tag = 'scoped memory for tpu_custom_call.1']
    #allocation16 [shape = 'u8[32768]{0}', space=vmem, size = 0x8000, scoped, tag = 'input window, operand 9, single buffered']
    #allocation17 [shape = 'u8[512]{0}', space=vmem, size = 0x400, scoped, tag = 'input window, operand 10, single buffered']
    #allocation18 [shape = 's32[1]{0}', space=sflag, size = 0x4, scoped, tag = 'scoped memory for tpu_custom_call.1']
    #allocation19 [shape = 'u8[4096]{0}', space=vmem, size = 0x1000, scoped, tag = 'output window, operand 0, single buffered']
    %16 = vsyncpa [#allocation3], 0
    %17 = vsyncpa [#allocation6], 0
    %18 = vsyncpa [#allocation9], 0
    %19 = vsyncpa [#allocation12], 0
    %20 = vsyncpa [#allocation15], 0
    %21 = vsyncpa [#allocation18], 0
    %22 = vsyncpa [#allocation4], 0
    // Predicated region
    $region2: #{tpu_custom_call.1} parent=1 // pred_check
      _
    $region3: #{tpu_custom_call.1} parent=1 // pred_check_branch
      %24 = sbr.rel (0) target = $region5
    $region4: #{tpu_custom_call.1} parent=1 // pred_region
      _
    $region5: #{tpu_custom_call.1} parent=1 // pred_fallthru
      _
    // Predicated region
    $region6: #{tpu_custom_call.1} parent=1 // pred_check
      _
    $region7: #{tpu_custom_call.1} parent=1 // pred_check_branch
      %26 = sbr.rel (0) target = $region9
    $region8: #{tpu_custom_call.1} parent=1 // pred_region
      %s28 = ssub.s32 512, 512
      %29 = vsyncadd [#allocation3], %s28
      %s31 = sshll.u32 [#allocation2], 4
      %s32 = int_to_ptr.vmem [resolvable:$true] %s31
      %34 = dma.hbm_to_vmem [thread:$0]  %s1, 512, %s32, [#allocation3]
    $region9: #{tpu_custom_call.1} parent=1 // pred_fallthru
      _
    // Predicated region
    $region10: #{tpu_custom_call.1} parent=1 // pred_check
      _
    $region11: #{tpu_custom_call.1} parent=1 // pred_check_branch
      %36 = sbr.rel (0) target = $region13
    $region12: #{tpu_custom_call.1} parent=1 // pred_region
      %s38 = ssub.s32 256, 256
      %39 = vsyncadd [#allocation6], %s38
      %s41 = sshll.u32 [#allocation5], 4
      %s42 = int_to_ptr.vmem [resolvable:$true] %s41
      %44 = dma.hbm_to_vmem [thread:$0]  %s2, 256, %s42, [#allocation6]
    $region13: #{tpu_custom_call.1} parent=1 // pred_fallthru
      _
    // Predicated region
    $region14: #{tpu_custom_call.1} parent=1 // pred_check
      _
    $region15: #{tpu_custom_call.1} parent=1 // pred_check_branch
      %46 = sbr.rel (0) target = $region17
    $region16: #{tpu_custom_call.1} parent=1 // pred_region
      %s48 = ssub.s32 65536, 65536
      %49 = vsyncadd [#allocation6], %s48
      %s50 = sshll.u32 [#allocation7], 4
      %s51 = int_to_ptr.vmem [resolvable:$true] %s50
      %56 = dma.hbm_to_vmem [thread:$0]  %s3, 65536, %s51, [#allocation6], 256, 256, 16
    $region17: #{tpu_custom_call.1} parent=1 // pred_fallthru
      _
    // Predicated region
    $region18: #{tpu_custom_call.1} parent=1 // pred_check
      _
    $region19: #{tpu_custom_call.1} parent=1 // pred_check_branch
      %58 = sbr.rel (0) target = $region21
    $region20: #{tpu_custom_call.1} parent=1 // pred_region
      %s60 = ssub.s32 64, 64
      %61 = vsyncadd [#allocation9], %s60
      %s63 = sshll.u32 [#allocation8], 4
      %s64 = int_to_ptr.vmem [resolvable:$true] %s63
      %66 = dma.hbm_to_vmem [thread:$0]  %s4, 64, %s64, [#allocation9]
    $region21: #{tpu_custom_call.1} parent=1 // pred_fallthru
      _
    // Predicated region
    $region22: #{tpu_custom_call.1} parent=1 // pred_check
      _
    $region23: #{tpu_custom_call.1} parent=1 // pred_check_branch
      %68 = sbr.rel (0) target = $region25
    $region24: #{tpu_custom_call.1} parent=1 // pred_region
      %s70 = ssub.s32 8192, 8192
      %71 = vsyncadd [#allocation9], %s70
      %s72 = sshll.u32 [#allocation10], 4
      %s73 = int_to_ptr.vmem [resolvable:$true] %s72
      %78 = dma.hbm_to_vmem [thread:$0]  %s5, 8192, %s73, [#allocation9], 128, 128, 8
    $region25: #{tpu_custom_call.1} parent=1 // pred_fallthru
      _
    // Predicated region
    $region26: #{tpu_custom_call.1} parent=1 // pred_check
      _
    $region27: #{tpu_custom_call.1} parent=1 // pred_check_branch
      %80 = sbr.rel (0) target = $region29
    $region28: #{tpu_custom_call.1} parent=1 // pred_region
      %s82 = ssub.s32 32, 32
      %83 = vsyncadd [#allocation12], %s82
      %s85 = sshll.u32 [#allocation11], 4
      %s86 = int_to_ptr.vmem [resolvable:$true] %s85
      %88 = dma.hbm_to_vmem [thread:$0]  %s6, 32, %s86, [#allocation12]
    $region29: #{tpu_custom_call.1} parent=1 // pred_fallthru
      _
    // Predicated region
    $region30: #{tpu_custom_call.1} parent=1 // pred_check
      _
    $region31: #{tpu_custom_call.1} parent=1 // pred_check_branch
      %90 = sbr.rel (0) target = $region33
    $region32: #{tpu_custom_call.1} parent=1 // pred_region
      %s92 = ssub.s32 2048, 2048
      %93 = vsyncadd [#allocation12], %s92
      %s94 = sshll.u32 [#allocation13], 4
      %s95 = int_to_ptr.vmem [resolvable:$true] %s94
      %100 = dma.hbm_to_vmem [thread:$0]  %s7, 2048, %s95, [#allocation12], 64, 64, 4
    $region33: #{tpu_custom_call.1} parent=1 // pred_fallthru
      _
    // Predicated region
    $region34: #{tpu_custom_call.1} parent=1 // pred_check
      _
    $region35: #{tpu_custom_call.1} parent=1 // pred_check_branch
      %102 = sbr.rel (0) target = $region37
    $region36: #{tpu_custom_call.1} parent=1 // pred_region
      %s104 = ssub.s32 16, 16
      %105 = vsyncadd [#allocation15], %s104
      %s107 = sshll.u32 [#allocation14], 4
      %s108 = int_to_ptr.vmem [resolvable:$true] %s107
      %110 = dma.hbm_to_vmem [thread:$0]  %s8, 16, %s108, [#allocation15]
    $region37: #{tpu_custom_call.1} parent=1 // pred_fallthru
      _
    // Predicated region
    $region38: #{tpu_custom_call.1} parent=1 // pred_check
      _
    $region39: #{tpu_custom_call.1} parent=1 // pred_check_branch
      %112 = sbr.rel (0) target = $region41
    $region40: #{tpu_custom_call.1} parent=1 // pred_region
      %s114 = ssub.s32 1024, 1024
      %115 = vsyncadd [#allocation15], %s114
      %s116 = sshll.u32 [#allocation16], 4
      %s117 = int_to_ptr.vmem [resolvable:$true] %s116
      %122 = dma.hbm_to_vmem [thread:$0]  %s9, 1024, %s117, [#allocation15], 64, 64, 4
    $region41: #{tpu_custom_call.1} parent=1 // pred_fallthru
      _
    // Predicated region
    $region42: #{tpu_custom_call.1} parent=1 // pred_check
      _
    $region43: #{tpu_custom_call.1} parent=1 // pred_check_branch
      %124 = sbr.rel (0) target = $region45
    $region44: #{tpu_custom_call.1} parent=1 // pred_region
      %s126 = ssub.s32 16, 16
      %127 = vsyncadd [#allocation18], %s126
      %s129 = sshll.u32 [#allocation17], 4
      %s130 = int_to_ptr.vmem [resolvable:$true] %s129
      %132 = dma.hbm_to_vmem [thread:$0]  %s10, 16, %s130, [#allocation18]
    $region45: #{tpu_custom_call.1} parent=1 // pred_fallthru
      _
    // Predicated region
    $region46: #{tpu_custom_call.1} parent=1 // pred_check
      _
    $region47: #{tpu_custom_call.1} parent=1 // pred_check_branch
      %134 = sbr.rel (0) target = $region49
    $region48: #{tpu_custom_call.1} parent=1 // pred_region
      %135 = dma.done [#allocation3], 512
    $region49: #{tpu_custom_call.1} parent=1 // pred_fallthru
      _
    // Predicated region
    $region50: #{tpu_custom_call.1} parent=1 // pred_check
      _
    $region51: #{tpu_custom_call.1} parent=1 // pred_check_branch
      %137 = sbr.rel (0) target = $region53
    $region52: #{tpu_custom_call.1} parent=1 // pred_region
      %138 = dma.done [#allocation6], 256
    $region53: #{tpu_custom_call.1} parent=1 // pred_fallthru
      _
    // Predicated region
    $region54: #{tpu_custom_call.1} parent=1 // pred_check
      _
    $region55: #{tpu_custom_call.1} parent=1 // pred_check_branch
      %140 = sbr.rel (0) target = $region57
    $region56: #{tpu_custom_call.1} parent=1 // pred_region
      %141 = dma.done [#allocation6], 65536
    $region57: #{tpu_custom_call.1} parent=1 // pred_fallthru
      _
    // Predicated region
    $region58: #{tpu_custom_call.1} parent=1 // pred_check
      _
    $region59: #{tpu_custom_call.1} parent=1 // pred_check_branch
      %143 = sbr.rel (0) target = $region61
    $region60: #{tpu_custom_call.1} parent=1 // pred_region
      %144 = dma.done [#allocation9], 64
    $region61: #{tpu_custom_call.1} parent=1 // pred_fallthru
      _
    // Predicated region
    $region62: #{tpu_custom_call.1} parent=1 // pred_check
      _
    $region63: #{tpu_custom_call.1} parent=1 // pred_check_branch
      %146 = sbr.rel (0) target = $region65
    $region64: #{tpu_custom_call.1} parent=1 // pred_region
      %147 = dma.done [#allocation9], 8192
    $region65: #{tpu_custom_call.1} parent=1 // pred_fallthru
      _
    // Predicated region
    $region66: #{tpu_custom_call.1} parent=1 // pred_check
      _
    $region67: #{tpu_custom_call.1} parent=1 // pred_check_branch
      %149 = sbr.rel (0) target = $region69
    $region68: #{tpu_custom_call.1} parent=1 // pred_region
      %150 = dma.done [#allocation12], 32
    $region69: #{tpu_custom_call.1} parent=1 // pred_fallthru
      _
    // Predicated region
    $region70: #{tpu_custom_call.1} parent=1 // pred_check
      _
    $region71: #{tpu_custom_call.1} parent=1 // pred_check_branch
      %152 = sbr.rel (0) target = $region73
    $region72: #{tpu_custom_call.1} parent=1 // pred_region
      %153 = dma.done [#allocation12], 2048
    $region73: #{tpu_custom_call.1} parent=1 // pred_fallthru
      _
    // Predicated region
    $region74: #{tpu_custom_call.1} parent=1 // pred_check
      _
    $region75: #{tpu_custom_call.1} parent=1 // pred_check_branch
      %155 = sbr.rel (0) target = $region77
    $region76: #{tpu_custom_call.1} parent=1 // pred_region
      %156 = dma.done [#allocation15], 16
    $region77: #{tpu_custom_call.1} parent=1 // pred_fallthru
      _
    // Predicated region
    $region78: #{tpu_custom_call.1} parent=1 // pred_check
      _
    $region79: #{tpu_custom_call.1} parent=1 // pred_check_branch
      %158 = sbr.rel (0) target = $region81
    $region80: #{tpu_custom_call.1} parent=1 // pred_region
      %159 = dma.done [#allocation15], 1024
    $region81: #{tpu_custom_call.1} parent=1 // pred_fallthru
      _
    // Predicated region
    $region82: #{tpu_custom_call.1} parent=1 // pred_check
      _
    $region83: #{tpu_custom_call.1} parent=1 // pred_check_branch
      %161 = sbr.rel (0) target = $region85
    $region84: #{tpu_custom_call.1} parent=1 // pred_region
      %162 = dma.done [#allocation18], 16
    $region85: #{tpu_custom_call.1} parent=1 // pred_fallthru
      _
    %v164 = vld [vmem:[%s0] sm:$0xff]
    %v165 = vpack.c.bf16 %v164, %v164
    %v166 = vld [vmem:[#allocation2] sm:$0xff]
    %v167 = vld [vmem:[#allocation2 + $0x8] sm:$0xff]
    %v168 = vld [vmem:[#allocation2 + $0x10] sm:$0xff]
    %v169 = vld [vmem:[#allocation2 + $0x18] sm:$0xff]
    %v170 = vld [vmem:[#allocation5] sm:$0xff]
    %v171 = vld [vmem:[#allocation5 + $0x8] sm:$0xff]
    %v174 = vlaneseq
    %v175 = vshrl.u32 %v174, 7
    %v176 = vsub.s32 0, %v175
    %v177 = vrot.slane %v170, %v176
    %v178 = vlaneseq
    %v179 = vshrl.u32 %v178, 7
    %v180 = vsub.s32 1, %v179
    %v181 = vrot.slane %v170, %v180
    %v182 = vlaneseq
    %v183 = vshrl.u32 %v182, 7
    %v184 = vsub.s32 2, %v183
    %v185 = vrot.slane %v170, %v184
    %v186 = vlaneseq
    %v187 = vshrl.u32 %v186, 7
    %v188 = vsub.s32 3, %v187
    %v189 = vrot.slane %v170, %v188
    %v190 = vlaneseq
    %v191 = vshrl.u32 %v190, 7
    %v192 = vsub.s32 4, %v191
    %v193 = vrot.slane %v170, %v192
    %v194 = vlaneseq
    %v195 = vshrl.u32 %v194, 7
    %v196 = vsub.s32 5, %v195
    %v197 = vrot.slane %v170, %v196
    %v198 = vlaneseq
    %v199 = vshrl.u32 %v198, 7
    %v200 = vsub.s32 6, %v199
    %v201 = vrot.slane %v170, %v200
    %v202 = vlaneseq
    %v203 = vshrl.u32 %v202, 7
    %v204 = vsub.s32 7, %v203
    %v205 = vrot.slane %v170, %v204
    %v206 = vlaneseq
    %v207 = vshrl.u32 %v206, 7
    %v208 = vsub.s32 0, %v207
    %v209 = vrot.slane %v171, %v208
    %v210 = vlaneseq
    %v211 = vshrl.u32 %v210, 7
    %v212 = vsub.s32 1, %v211
    %v213 = vrot.slane %v171, %v212
    %v214 = vlaneseq
    %v215 = vshrl.u32 %v214, 7
    %v216 = vsub.s32 2, %v215
    %v217 = vrot.slane %v171, %v216
    %v218 = vlaneseq
    %v219 = vshrl.u32 %v218, 7
    %v220 = vsub.s32 3, %v219
    %v221 = vrot.slane %v171, %v220
    %v222 = vlaneseq
    %v223 = vshrl.u32 %v222, 7
    %v224 = vsub.s32 4, %v223
    %v225 = vrot.slane %v171, %v224
    %v226 = vlaneseq
    %v227 = vshrl.u32 %v226, 7
    %v228 = vsub.s32 5, %v227
    %v229 = vrot.slane %v171, %v228
    %v230 = vlaneseq
    %v231 = vshrl.u32 %v230, 7
    %v232 = vsub.s32 6, %v231
    %v233 = vrot.slane %v171, %v232
    %v234 = vlaneseq
    %v235 = vshrl.u32 %v234, 7
    %v236 = vsub.s32 7, %v235
    %v237 = vrot.slane %v171, %v236
    %v258 = vcombine.high %v166, %v166
    %v260 = vunpack.c.l.s4 1983009808
    %v261 = vunpack.c.0.s8 %v260
    %v262 = vlaneseq
    %v263 = vshrl.u32 %v262, 7
    %v264 = vsub.s32 %v261, %v263
    %v265 = vrot.slane %v166, %v264
    %v267 = vunpack.c.l.s4 1983009808
    %v268 = vunpack.c.0.s8 %v267
    %v269 = vlaneseq
    %v270 = vshrl.u32 %v269, 7
    %v271 = vsub.s32 %v268, %v270
    %v272 = vrot.slane %v258, %v271
    %v273 = vcombine.high %v265, %v265
    %v274 = vcombine.high %v272, %v272
    %v275 = vcombine.high %v167, %v167
    %v277 = vunpack.c.l.s4 1983009808
    %v278 = vunpack.c.0.s8 %v277
    %v279 = vlaneseq
    %v280 = vshrl.u32 %v279, 7
    %v281 = vsub.s32 %v278, %v280
    %v282 = vrot.slane %v167, %v281
    %v284 = vunpack.c.l.s4 1983009808
    %v285 = vunpack.c.0.s8 %v284
    %v286 = vlaneseq
    %v287 = vshrl.u32 %v286, 7
    %v288 = vsub.s32 %v285, %v287
    %v289 = vrot.slane %v275, %v288
    %v290 = vcombine.high %v282, %v282
    %v291 = vcombine.high %v289, %v289
    %v292 = vcombine.high %v168, %v168
    %v294 = vunpack.c.l.s4 1983009808
    %v295 = vunpack.c.0.s8 %v294
    %v296 = vlaneseq
    %v297 = vshrl.u32 %v296, 7
    %v298 = vsub.s32 %v295, %v297
    %v299 = vrot.slane %v168, %v298
    %v301 = vunpack.c.l.s4 1983009808
    %v302 = vunpack.c.0.s8 %v301
    %v303 = vlaneseq
    %v304 = vshrl.u32 %v303, 7
    %v305 = vsub.s32 %v302, %v304
    %v306 = vrot.slane %v292, %v305
    %v307 = vcombine.high %v299, %v299
    %v308 = vcombine.high %v306, %v306
    %v309 = vcombine.high %v169, %v169
    %v311 = vunpack.c.l.s4 1983009808
    %v312 = vunpack.c.0.s8 %v311
    %v313 = vlaneseq
    %v314 = vshrl.u32 %v313, 7
    %v315 = vsub.s32 %v312, %v314
    %v316 = vrot.slane %v169, %v315
    %v318 = vunpack.c.l.s4 1983009808
    %v319 = vunpack.c.0.s8 %v318
    %v320 = vlaneseq
    %v321 = vshrl.u32 %v320, 7
    %v322 = vsub.s32 %v319, %v321
    %v323 = vrot.slane %v309, %v322
    %v324 = vcombine.high %v316, %v316
    %v325 = vcombine.high %v323, %v323
    %vm326 = vcmask 31744
    %v328 = vsel %vm326, %v165, 0
    %vm330 = vcmask 1041408
    %v332 = vsel %vm330, %v265, 0
    %v335 = vsel %vm330, %v273, 0
    %v338 = vsel %vm330, %v272, 0
    %v341 = vsel %vm330, %v274, 0
    %v344 = vsel %vm330, %v282, 0
    %v347 = vsel %vm330, %v290, 0
    %v350 = vsel %vm330, %v289, 0
    %v353 = vsel %vm330, %v291, 0
    %v356 = vsel %vm330, %v299, 0
    %v359 = vsel %vm330, %v307, 0
    %v362 = vsel %vm330, %v306, 0
    %v365 = vsel %vm330, %v308, 0
    %v368 = vsel %vm330, %v316, 0
    %v371 = vsel %vm330, %v324, 0
    %v374 = vsel %vm330, %v323, 0
    %v377 = vsel %vm330, %v325, 0
    %379 = vmatprep.subr.bf16.mxu0 %v335
    %380 = vmatpush1.bf16.msra.mxu0 %v332
    %381 = vmatprep.subr.bf16.mxu0 0
    %382 = vmatpush1.bf16.msra.mxu0 0
    %383 = vmatprep.subr.bf16.mxu0 0
    %384 = vmatpush1.bf16.msra.mxu0 0
    %385 = vmatprep.subr.bf16.mxu0 0
    %386 = vmatpush1.bf16.msra.mxu0 0
    %387 = vmatprep.subr.bf16.mxu0 0
    %388 = vmatpush1.bf16.msra.mxu0 0
    %389 = vmatprep.subr.bf16.mxu0 0
    %390 = vmatpush1.bf16.msra.mxu0 0
    %391 = vmatprep.subr.bf16.mxu0 0
    %392 = vmatpush1.bf16.msra.mxu0 0
    %393 = vmatprep.subr.bf16.mxu0 0
    %394 = vmatpush1.bf16.msra.mxu0 0
    %395 = vmatprep.subr.bf16.mxu0 0
    %396 = vmatpush1.bf16.msra.mxu0 0
    %397 = vmatprep.subr.bf16.mxu0 0
    %398 = vmatpush1.bf16.msra.mxu0 0
    %399 = vmatprep.subr.bf16.mxu0 0
    %400 = vmatpush1.bf16.msra.mxu0 0
    %401 = vmatprep.subr.bf16.mxu0 0
    %402 = vmatpush1.bf16.msra.mxu0 0
    %403 = vmatprep.subr.bf16.mxu0 0
    %404 = vmatpush1.bf16.msra.mxu0 0
    %405 = vmatprep.subr.bf16.mxu0 0
    %406 = vmatpush1.bf16.msra.mxu0 0
    %407 = vmatprep.subr.bf16.mxu0 0
    %408 = vmatpush1.bf16.msra.mxu0 0
    %409 = vmatprep.subr.bf16.mxu0 0
    %410 = vmatpush1.bf16.msra.mxu0 0
    %411 = vmatprep.mubr.bf16.mxu0 0
    %412 = vmatmul.mubr.bf16.gmra.mrb[0].mxu0 %v328
    %v413 = vpop.f32.mrb[0].mxu0
    %v414 = vadd.f32 %v177, %v413
    %v415 = vpop.f32.mrb[0].mxu0
    %v416 = vadd.f32 %v181, %v415
    %v417 = vpop.f32.mrb[0].mxu0
    %v418 = vpop.f32.mrb[0].mxu0
    %419 = vdwg.mxu0
    %420 = vmatprep.subr.bf16.mxu0 %v341
    %421 = vmatpush1.bf16.msra.mxu0 %v338
    %422 = vmatprep.subr.bf16.mxu0 0
    %423 = vmatpush1.bf16.msra.mxu0 0
    %424 = vmatprep.subr.bf16.mxu0 0
    %425 = vmatpush1.bf16.msra.mxu0 0
    %426 = vmatprep.subr.bf16.mxu0 0
    %427 = vmatpush1.bf16.msra.mxu0 0
    %428 = vmatprep.subr.bf16.mxu0 0
    %429 = vmatpush1.bf16.msra.mxu0 0
    %430 = vmatprep.subr.bf16.mxu0 0
    %431 = vmatpush1.bf16.msra.mxu0 0
    %432 = vmatprep.subr.bf16.mxu0 0
    %433 = vmatpush1.bf16.msra.mxu0 0
    %434 = vmatprep.subr.bf16.mxu0 0
    %435 = vmatpush1.bf16.msra.mxu0 0
    %436 = vmatprep.subr.bf16.mxu0 0
    %437 = vmatpush1.bf16.msra.mxu0 0
    %438 = vmatprep.subr.bf16.mxu0 0
    %439 = vmatpush1.bf16.msra.mxu0 0
    %440 = vmatprep.subr.bf16.mxu0 0
    %441 = vmatpush1.bf16.msra.mxu0 0
    %442 = vmatprep.subr.bf16.mxu0 0
    %443 = vmatpush1.bf16.msra.mxu0 0
    %444 = vmatprep.subr.bf16.mxu0 0
    %445 = vmatpush1.bf16.msra.mxu0 0
    %446 = vmatprep.subr.bf16.mxu0 0
    %447 = vmatpush1.bf16.msra.mxu0 0
    %448 = vmatprep.subr.bf16.mxu0 0
    %449 = vmatpush1.bf16.msra.mxu0 0
    %450 = vmatprep.subr.bf16.mxu0 0
    %451 = vmatpush1.bf16.msra.mxu0 0
    %452 = vmatprep.mubr.bf16.mxu0 0
    %453 = vmatmul.mubr.bf16.gmra.mrb[0].mxu0 %v328
    %v454 = vpop.f32.mrb[0].mxu0
    %v455 = vadd.f32 %v185, %v454
    %v456 = vpop.f32.mrb[0].mxu0
    %v457 = vadd.f32 %v189, %v456
    %v458 = vpop.f32.mrb[0].mxu0
    %v459 = vpop.f32.mrb[0].mxu0
    %460 = vdwg.mxu0
    %461 = vmatprep.subr.bf16.mxu0 %v347
    %462 = vmatpush1.bf16.msra.mxu0 %v344
    %463 = vmatprep.subr.bf16.mxu0 0
    %464 = vmatpush1.bf16.msra.mxu0 0
    %465 = vmatprep.subr.bf16.mxu0 0
    %466 = vmatpush1.bf16.msra.mxu0 0
    %467 = vmatprep.subr.bf16.mxu0 0
    %468 = vmatpush1.bf16.msra.mxu0 0
    %469 = vmatprep.subr.bf16.mxu0 0
    %470 = vmatpush1.bf16.msra.mxu0 0
    %471 = vmatprep.subr.bf16.mxu0 0
    %472 = vmatpush1.bf16.msra.mxu0 0
    %473 = vmatprep.subr.bf16.mxu0 0
    %474 = vmatpush1.bf16.msra.mxu0 0
    %475 = vmatprep.subr.bf16.mxu0 0
    %476 = vmatpush1.bf16.msra.mxu0 0
    %477 = vmatprep.subr.bf16.mxu0 0
    %478 = vmatpush1.bf16.msra.mxu0 0
    %479 = vmatprep.subr.bf16.mxu0 0
    %480 = vmatpush1.bf16.msra.mxu0 0
    %481 = vmatprep.subr.bf16.mxu0 0
    %482 = vmatpush1.bf16.msra.mxu0 0
    %483 = vmatprep.subr.bf16.mxu0 0
    %484 = vmatpush1.bf16.msra.mxu0 0
    %485 = vmatprep.subr.bf16.mxu0 0
    %486 = vmatpush1.bf16.msra.mxu0 0
    %487 = vmatprep.subr.bf16.mxu0 0
    %488 = vmatpush1.bf16.msra.mxu0 0
    %489 = vmatprep.subr.bf16.mxu0 0
    %490 = vmatpush1.bf16.msra.mxu0 0
    %491 = vmatprep.subr.bf16.mxu0 0
    %492 = vmatpush1.bf16.msra.mxu0 0
    %493 = vmatprep.mubr.bf16.mxu0 0
    %494 = vmatmul.mubr.bf16.gmra.mrb[0].mxu0 %v328
    %v495 = vpop.f32.mrb[0].mxu0
    %v496 = vadd.f32 %v193, %v495
    %v497 = vpop.f32.mrb[0].mxu0
    %v498 = vadd.f32 %v197, %v497
    %v499 = vpop.f32.mrb[0].mxu0
    %v500 = vpop.f32.mrb[0].mxu0
    %501 = vdwg.mxu0
    %502 = vmatprep.subr.bf16.mxu0 %v353
    %503 = vmatpush1.bf16.msra.mxu0 %v350
    %504 = vmatprep.subr.bf16.mxu0 0
    %505 = vmatpush1.bf16.msra.mxu0 0
    %506 = vmatprep.subr.bf16.mxu0 0
    %507 = vmatpush1.bf16.msra.mxu0 0
    %508 = vmatprep.subr.bf16.mxu0 0
    %509 = vmatpush1.bf16.msra.mxu0 0
    %510 = vmatprep.subr.bf16.mxu0 0
    %511 = vmatpush1.bf16.msra.mxu0 0
    %512 = vmatprep.subr.bf16.mxu0 0
    %513 = vmatpush1.bf16.msra.mxu0 0
    %514 = vmatprep.subr.bf16.mxu0 0
    %515 = vmatpush1.bf16.msra.mxu0 0
    %516 = vmatprep.subr.bf16.mxu0 0
    %517 = vmatpush1.bf16.msra.mxu0 0
    %518 = vmatprep.subr.bf16.mxu0 0
    %519 = vmatpush1.bf16.msra.mxu0 0
    %520 = vmatprep.subr.bf16.mxu0 0
    %521 = vmatpush1.bf16.msra.mxu0 0
    %522 = vmatprep.subr.bf16.mxu0 0
    %523 = vmatpush1.bf16.msra.mxu0 0
    %524 = vmatprep.subr.bf16.mxu0 0
    %525 = vmatpush1.bf16.msra.mxu0 0
    %526 = vmatprep.subr.bf16.mxu0 0
    %527 = vmatpush1.bf16.msra.mxu0 0
    %528 = vmatprep.subr.bf16.mxu0 0
    %529 = vmatpush1.bf16.msra.mxu0 0
    %530 = vmatprep.subr.bf16.mxu0 0
    %531 = vmatpush1.bf16.msra.mxu0 0
    %532 = vmatprep.subr.bf16.mxu0 0
    %533 = vmatpush1.bf16.msra.mxu0 0
    %534 = vmatprep.mubr.bf16.mxu0 0
    %535 = vmatmul.mubr.bf16.gmra.mrb[0].mxu0 %v328
    %v536 = vpop.f32.mrb[0].mxu0
    %v537 = vadd.f32 %v201, %v536
    %v538 = vpop.f32.mrb[0].mxu0
    %v539 = vadd.f32 %v205, %v538
    %v540 = vpop.f32.mrb[0].mxu0
    %v541 = vpop.f32.mrb[0].mxu0
    %542 = vdwg.mxu0
    %543 = vmatprep.subr.bf16.mxu0 %v359
    %544 = vmatpush1.bf16.msra.mxu0 %v356
    %545 = vmatprep.subr.bf16.mxu0 0
    %546 = vmatpush1.bf16.msra.mxu0 0
    %547 = vmatprep.subr.bf16.mxu0 0
    %548 = vmatpush1.bf16.msra.mxu0 0
    %549 = vmatprep.subr.bf16.mxu0 0
    %550 = vmatpush1.bf16.msra.mxu0 0
    %551 = vmatprep.subr.bf16.mxu0 0
    %552 = vmatpush1.bf16.msra.mxu0 0
    %553 = vmatprep.subr.bf16.mxu0 0
    %554 = vmatpush1.bf16.msra.mxu0 0
    %555 = vmatprep.subr.bf16.mxu0 0
    %556 = vmatpush1.bf16.msra.mxu0 0
    %557 = vmatprep.subr.bf16.mxu0 0
    %558 = vmatpush1.bf16.msra.mxu0 0
    %559 = vmatprep.subr.bf16.mxu0 0
    %560 = vmatpush1.bf16.msra.mxu0 0
    %561 = vmatprep.subr.bf16.mxu0 0
    %562 = vmatpush1.bf16.msra.mxu0 0
    %563 = vmatprep.subr.bf16.mxu0 0
    %564 = vmatpush1.bf16.msra.mxu0 0
    %565 = vmatprep.subr.bf16.mxu0 0
    %566 = vmatpush1.bf16.msra.mxu0 0
    %567 = vmatprep.subr.bf16.mxu0 0
    %568 = vmatpush1.bf16.msra.mxu0 0
    %569 = vmatprep.subr.bf16.mxu0 0
    %570 = vmatpush1.bf16.msra.mxu0 0
    %571 = vmatprep.subr.bf16.mxu0 0
    %572 = vmatpush1.bf16.msra.mxu0 0
    %573 = vmatprep.subr.bf16.mxu0 0
    %574 = vmatpush1.bf16.msra.mxu0 0
    %575 = vmatprep.mubr.bf16.mxu0 0
    %576 = vmatmul.mubr.bf16.gmra.mrb[0].mxu0 %v328
    %v577 = vpop.f32.mrb[0].mxu0
    %v578 = vadd.f32 %v209, %v577
    %v579 = vpop.f32.mrb[0].mxu0
    %v580 = vadd.f32 %v213, %v579
    %v581 = vpop.f32.mrb[0].mxu0
    %v582 = vpop.f32.mrb[0].mxu0
    %583 = vdwg.mxu0
    %584 = vmatprep.subr.bf16.mxu0 %v365
    %585 = vmatpush1.bf16.msra.mxu0 %v362
    %586 = vmatprep.subr.bf16.mxu0 0
    %587 = vmatpush1.bf16.msra.mxu0 0
    %588 = vmatprep.subr.bf16.mxu0 0
    %589 = vmatpush1.bf16.msra.mxu0 0
    %590 = vmatprep.subr.bf16.mxu0 0
    %591 = vmatpush1.bf16.msra.mxu0 0
    %592 = vmatprep.subr.bf16.mxu0 0
    %593 = vmatpush1.bf16.msra.mxu0 0
    %594 = vmatprep.subr.bf16.mxu0 0
    %595 = vmatpush1.bf16.msra.mxu0 0
    %596 = vmatprep.subr.bf16.mxu0 0
    %597 = vmatpush1.bf16.msra.mxu0 0
    %598 = vmatprep.subr.bf16.mxu0 0
    %599 = vmatpush1.bf16.msra.mxu0 0
    %600 = vmatprep.subr.bf16.mxu0 0
    %601 = vmatpush1.bf16.msra.mxu0 0
    %602 = vmatprep.subr.bf16.mxu0 0
    %603 = vmatpush1.bf16.msra.mxu0 0
    %604 = vmatprep.subr.bf16.mxu0 0
    %605 = vmatpush1.bf16.msra.mxu0 0
    %606 = vmatprep.subr.bf16.mxu0 0
    %607 = vmatpush1.bf16.msra.mxu0 0
    %608 = vmatprep.subr.bf16.mxu0 0
    %609 = vmatpush1.bf16.msra.mxu0 0
    %610 = vmatprep.subr.bf16.mxu0 0
    %611 = vmatpush1.bf16.msra.mxu0 0
    %612 = vmatprep.subr.bf16.mxu0 0
    %613 = vmatpush1.bf16.msra.mxu0 0
    %614 = vmatprep.subr.bf16.mxu0 0
    %615 = vmatpush1.bf16.msra.mxu0 0
    %616 = vmatprep.mubr.bf16.mxu0 0
    %617 = vmatmul.mubr.bf16.gmra.mrb[0].mxu0 %v328
    %v618 = vpop.f32.mrb[0].mxu0
    %v619 = vadd.f32 %v217, %v618
    %v620 = vpop.f32.mrb[0].mxu0
    %v621 = vadd.f32 %v221, %v620
    %v622 = vpop.f32.mrb[0].mxu0
    %v623 = vpop.f32.mrb[0].mxu0
    %624 = vdwg.mxu0
    %625 = vmatprep.subr.bf16.mxu0 %v371
    %626 = vmatpush1.bf16.msra.mxu0 %v368
    %627 = vmatprep.subr.bf16.mxu0 0
    %628 = vmatpush1.bf16.msra.mxu0 0
    %629 = vmatprep.subr.bf16.mxu0 0
    %630 = vmatpush1.bf16.msra.mxu0 0
    %631 = vmatprep.subr.bf16.mxu0 0
    %632 = vmatpush1.bf16.msra.mxu0 0
    %633 = vmatprep.subr.bf16.mxu0 0
    %634 = vmatpush1.bf16.msra.mxu0 0
    %635 = vmatprep.subr.bf16.mxu0 0
    %636 = vmatpush1.bf16.msra.mxu0 0
    %637 = vmatprep.subr.bf16.mxu0 0
    %638 = vmatpush1.bf16.msra.mxu0 0
    %639 = vmatprep.subr.bf16.mxu0 0
    %640 = vmatpush1.bf16.msra.mxu0 0
    %641 = vmatprep.subr.bf16.mxu0 0
    %642 = vmatpush1.bf16.msra.mxu0 0
    %643 = vmatprep.subr.bf16.mxu0 0
    %644 = vmatpush1.bf16.msra.mxu0 0
    %645 = vmatprep.subr.bf16.mxu0 0
    %646 = vmatpush1.bf16.msra.mxu0 0
    %647 = vmatprep.subr.bf16.mxu0 0
    %648 = vmatpush1.bf16.msra.mxu0 0
    %649 = vmatprep.subr.bf16.mxu0 0
    %650 = vmatpush1.bf16.msra.mxu0 0
    %651 = vmatprep.subr.bf16.mxu0 0
    %652 = vmatpush1.bf16.msra.mxu0 0
    %653 = vmatprep.subr.bf16.mxu0 0
    %654 = vmatpush1.bf16.msra.mxu0 0
    %655 = vmatprep.subr.bf16.mxu0 0
    %656 = vmatpush1.bf16.msra.mxu0 0
    %657 = vmatprep.mubr.bf16.mxu0 0
    %658 = vmatmul.mubr.bf16.gmra.mrb[0].mxu0 %v328
    %v659 = vpop.f32.mrb[0].mxu0
    %v660 = vadd.f32 %v225, %v659
    %v661 = vpop.f32.mrb[0].mxu0
    %v662 = vadd.f32 %v229, %v661
    %v663 = vpop.f32.mrb[0].mxu0
    %v664 = vpop.f32.mrb[0].mxu0
    %665 = vdwg.mxu0
    %666 = vmatprep.subr.bf16.mxu0 %v377
    %667 = vmatpush1.bf16.msra.mxu0 %v374
    %668 = vmatprep.subr.bf16.mxu0 0
    %669 = vmatpush1.bf16.msra.mxu0 0
    %670 = vmatprep.subr.bf16.mxu0 0
    %671 = vmatpush1.bf16.msra.mxu0 0
    %672 = vmatprep.subr.bf16.mxu0 0
    %673 = vmatpush1.bf16.msra.mxu0 0
    %674 = vmatprep.subr.bf16.mxu0 0
    %675 = vmatpush1.bf16.msra.mxu0 0
    %676 = vmatprep.subr.bf16.mxu0 0
    %677 = vmatpush1.bf16.msra.mxu0 0
    %678 = vmatprep.subr.bf16.mxu0 0
    %679 = vmatpush1.bf16.msra.mxu0 0
    %680 = vmatprep.subr.bf16.mxu0 0
    %681 = vmatpush1.bf16.msra.mxu0 0
    %682 = vmatprep.subr.bf16.mxu0 0
    %683 = vmatpush1.bf16.msra.mxu0 0
    %684 = vmatprep.subr.bf16.mxu0 0
    %685 = vmatpush1.bf16.msra.mxu0 0
    %686 = vmatprep.subr.bf16.mxu0 0
    %687 = vmatpush1.bf16.msra.mxu0 0
    %688 = vmatprep.subr.bf16.mxu0 0
    %689 = vmatpush1.bf16.msra.mxu0 0
    %690 = vmatprep.subr.bf16.mxu0 0
    %691 = vmatpush1.bf16.msra.mxu0 0
    %692 = vmatprep.subr.bf16.mxu0 0
    %693 = vmatpush1.bf16.msra.mxu0 0
    %694 = vmatprep.subr.bf16.mxu0 0
    %695 = vmatpush1.bf16.msra.mxu0 0
    %696 = vmatprep.subr.bf16.mxu0 0
    %697 = vmatpush1.bf16.msra.mxu0 0
    %698 = vmatprep.mubr.bf16.mxu0 0
    %699 = vmatmul.mubr.bf16.gmra.mrb[0].mxu0 %v328
    %v700 = vpop.f32.mrb[0].mxu0
    %v701 = vadd.f32 %v233, %v700
    %v702 = vpop.f32.mrb[0].mxu0
    %v703 = vadd.f32 %v237, %v702
    %v704 = vpop.f32.mrb[0].mxu0
    %v705 = vpop.f32.mrb[0].mxu0
    %706 = vdwg.mxu0
    %v707 = vpack.c.bf16 %v414, %v414
    %v708 = vpack.c.bf16 %v416, %v416
    %v709 = vpack.c.bf16 %v455, %v455
    %v710 = vpack.c.bf16 %v457, %v457
    %v711 = vpack.c.bf16 %v496, %v496
    %v712 = vpack.c.bf16 %v498, %v498
    %v713 = vpack.c.bf16 %v537, %v537
    %v714 = vpack.c.bf16 %v539, %v539
    %v715 = vpack.c.bf16 %v578, %v578
    %v716 = vpack.c.bf16 %v580, %v580
    %v717 = vpack.c.bf16 %v619, %v619
    %v718 = vpack.c.bf16 %v621, %v621
    %v719 = vpack.c.bf16 %v660, %v660
    %v720 = vpack.c.bf16 %v662, %v662
    %v721 = vpack.c.bf16 %v701, %v701
    %v722 = vpack.c.bf16 %v703, %v703
    %v723 = vld [vmem:[#allocation7] sm:$0xff]
    %v724 = vld [vmem:[#allocation7 + $0x8] sm:$0xff]
    %v725 = vld [vmem:[#allocation7 + $0x10] sm:$0xff]
    %v726 = vld [vmem:[#allocation7 + $0x18] sm:$0xff]
    %v727 = vld [vmem:[#allocation7 + $0x20] sm:$0xff]
    %v728 = vld [vmem:[#allocation7 + $0x28] sm:$0xff]
    %v729 = vld [vmem:[#allocation7 + $0x30] sm:$0xff]
    %v730 = vld [vmem:[#allocation7 + $0x38] sm:$0xff]
    %v731 = vld [vmem:[#allocation7 + $0x40] sm:$0xff]
    %v732 = vld [vmem:[#allocation7 + $0x48] sm:$0xff]
    %v733 = vld [vmem:[#allocation7 + $0x50] sm:$0xff]
    %v734 = vld [vmem:[#allocation7 + $0x58] sm:$0xff]
    %v735 = vld [vmem:[#allocation7 + $0x60] sm:$0xff]
    %v736 = vld [vmem:[#allocation7 + $0x68] sm:$0xff]
    %v737 = vld [vmem:[#allocation7 + $0x70] sm:$0xff]
    %v738 = vld [vmem:[#allocation7 + $0x78] sm:$0xff]
    %v739 = vld [vmem:[#allocation7 + $0x80] sm:$0xff]
    %v740 = vld [vmem:[#allocation7 + $0x88] sm:$0xff]
    %v741 = vld [vmem:[#allocation7 + $0x90] sm:$0xff]
    %v742 = vld [vmem:[#allocation7 + $0x98] sm:$0xff]
    %v743 = vld [vmem:[#allocation7 + $0xa0] sm:$0xff]
    %v744 = vld [vmem:[#allocation7 + $0xa8] sm:$0xff]
    %v745 = vld [vmem:[#allocation7 + $0xb0] sm:$0xff]
    %v746 = vld [vmem:[#allocation7 + $0xb8] sm:$0xff]
    %v747 = vld [vmem:[#allocation7 + $0xc0] sm:$0xff]
    %v748 = vld [vmem:[#allocation7 + $0xc8] sm:$0xff]
    %v749 = vld [vmem:[#allocation7 + $0xd0] sm:$0xff]
    %v750 = vld [vmem:[#allocation7 + $0xd8] sm:$0xff]
    %v751 = vld [vmem:[#allocation7 + $0xe0] sm:$0xff]
    %v752 = vld [vmem:[#allocation7 + $0xe8] sm:$0xff]
    %v753 = vld [vmem:[#allocation7 + $0xf0] sm:$0xff]
    %v754 = vld [vmem:[#allocation7 + $0xf8] sm:$0xff]
    %v755 = vld [vmem:[#allocation7 + $0x100] sm:$0xff]
    %v756 = vld [vmem:[#allocation7 + $0x108] sm:$0xff]
    %v757 = vld [vmem:[#allocation7 + $0x110] sm:$0xff]
    %v758 = vld [vmem:[#allocation7 + $0x118] sm:$0xff]
    %v759 = vld [vmem:[#allocation7 + $0x120] sm:$0xff]
    %v760 = vld [vmem:[#allocation7 + $0x128] sm:$0xff]
    %v761 = vld [vmem:[#allocation7 + $0x130] sm:$0xff]
    %v762 = vld [vmem:[#allocation7 + $0x138] sm:$0xff]
    %v763 = vld [vmem:[#allocation7 + $0x140] sm:$0xff]
    %v764 = vld [vmem:[#allocation7 + $0x148] sm:$0xff]
    %v765 = vld [vmem:[#allocation7 + $0x150] sm:$0xff]
    %v766 = vld [vmem:[#allocation7 + $0x158] sm:$0xff]
    %v767 = vld [vmem:[#allocation7 + $0x160] sm:$0xff]
    %v768 = vld [vmem:[#allocation7 + $0x168] sm:$0xff]
    %v769 = vld [vmem:[#allocation7 + $0x170] sm:$0xff]
    %v770 = vld [vmem:[#allocation7 + $0x178] sm:$0xff]
    %v771 = vld [vmem:[#allocation7 + $0x180] sm:$0xff]
    %v772 = vld [vmem:[#allocation7 + $0x188] sm:$0xff]
    %v773 = vld [vmem:[#allocation7 + $0x190] sm:$0xff]
    %v774 = vld [vmem:[#allocation7 + $0x198] sm:$0xff]
    %v775 = vld [vmem:[#allocation7 + $0x1a0] sm:$0xff]
    %v776 = vld [vmem:[#allocation7 + $0x1a8] sm:$0xff]
    %v777 = vld [vmem:[#allocation7 + $0x1b0] sm:$0xff]
    %v778 = vld [vmem:[#allocation7 + $0x1b8] sm:$0xff]
    %v779 = vld [vmem:[#allocation7 + $0x1c0] sm:$0xff]
    %v780 = vld [vmem:[#allocation7 + $0x1c8] sm:$0xff]
    %v781 = vld [vmem:[#allocation7 + $0x1d0] sm:$0xff]
    %v782 = vld [vmem:[#allocation7 + $0x1d8] sm:$0xff]
    %v783 = vld [vmem:[#allocation7 + $0x1e0] sm:$0xff]
    %v784 = vld [vmem:[#allocation7 + $0x1e8] sm:$0xff]
    %v785 = vld [vmem:[#allocation7 + $0x1f0] sm:$0xff]
    %v786 = vld [vmem:[#allocation7 + $0x1f8] sm:$0xff]
    %v787 = vld [vmem:[#allocation7 + $0x200] sm:$0xff]
    %v788 = vld [vmem:[#allocation7 + $0x208] sm:$0xff]
    %v789 = vld [vmem:[#allocation7 + $0x210] sm:$0xff]
    %v790 = vld [vmem:[#allocation7 + $0x218] sm:$0xff]
    %v791 = vld [vmem:[#allocation7 + $0x220] sm:$0xff]
    %v792 = vld [vmem:[#allocation7 + $0x228] sm:$0xff]
    %v793 = vld [vmem:[#allocation7 + $0x230] sm:$0xff]
    %v794 = vld [vmem:[#allocation7 + $0x238] sm:$0xff]
    %v795 = vld [vmem:[#allocation7 + $0x240] sm:$0xff]
    %v796 = vld [vmem:[#allocation7 + $0x248] sm:$0xff]
    %v797 = vld [vmem:[#allocation7 + $0x250] sm:$0xff]
    %v798 = vld [vmem:[#allocation7 + $0x258] sm:$0xff]
    %v799 = vld [vmem:[#allocation7 + $0x260] sm:$0xff]
    %v800 = vld [vmem:[#allocation7 + $0x268] sm:$0xff]
    %v801 = vld [vmem:[#allocation7 + $0x270] sm:$0xff]
    %v802 = vld [vmem:[#allocation7 + $0x278] sm:$0xff]
    %v803 = vld [vmem:[#allocation7 + $0x280] sm:$0xff]
    %v804 = vld [vmem:[#allocation7 + $0x288] sm:$0xff]
    %v805 = vld [vmem:[#allocation7 + $0x290] sm:$0xff]
    %v806 = vld [vmem:[#allocation7 + $0x298] sm:$0xff]
    %v807 = vld [vmem:[#allocation7 + $0x2a0] sm:$0xff]
    %v808 = vld [vmem:[#allocation7 + $0x2a8] sm:$0xff]
    %v809 = vld [vmem:[#allocation7 + $0x2b0] sm:$0xff]
    %v810 = vld [vmem:[#allocation7 + $0x2b8] sm:$0xff]
    %v811 = vld [vmem:[#allocation7 + $0x2c0] sm:$0xff]
    %v812 = vld [vmem:[#allocation7 + $0x2c8] sm:$0xff]
    %v813 = vld [vmem:[#allocation7 + $0x2d0] sm:$0xff]
    %v814 = vld [vmem:[#allocation7 + $0x2d8] sm:$0xff]
    %v815 = vld [vmem:[#allocation7 + $0x2e0] sm:$0xff]
    %v816 = vld [vmem:[#allocation7 + $0x2e8] sm:$0xff]
    %v817 = vld [vmem:[#allocation7 + $0x2f0] sm:$0xff]
    %v818 = vld [vmem:[#allocation7 + $0x2f8] sm:$0xff]
    %v819 = vld [vmem:[#allocation7 + $0x300] sm:$0xff]
    %v820 = vld [vmem:[#allocation7 + $0x308] sm:$0xff]
    %v821 = vld [vmem:[#allocation7 + $0x310] sm:$0xff]
    %v822 = vld [vmem:[#allocation7 + $0x318] sm:$0xff]
    %v823 = vld [vmem:[#allocation7 + $0x320] sm:$0xff]
    %v824 = vld [vmem:[#allocation7 + $0x328] sm:$0xff]
    %v825 = vld [vmem:[#allocation7 + $0x330] sm:$0xff]
    %v826 = vld [vmem:[#allocation7 + $0x338] sm:$0xff]
    %v827 = vld [vmem:[#allocation7 + $0x340] sm:$0xff]
    %v828 = vld [vmem:[#allocation7 + $0x348] sm:$0xff]
    %v829 = vld [vmem:[#allocation7 + $0x350] sm:$0xff]
    %v830 = vld [vmem:[#allocation7 + $0x358] sm:$0xff]
    %v831 = vld [vmem:[#allocation7 + $0x360] sm:$0xff]
    %v832 = vld [vmem:[#allocation7 + $0x368] sm:$0xff]
    %v833 = vld [vmem:[#allocation7 + $0x370] sm:$0xff]
    %v834 = vld [vmem:[#allocation7 + $0x378] sm:$0xff]
    %v835 = vld [vmem:[#allocation7 + $0x380] sm:$0xff]
    %v836 = vld [vmem:[#allocation7 + $0x388] sm:$0xff]
    %v837 = vld [vmem:[#allocation7 + $0x390] sm:$0xff]
    %v838 = vld [vmem:[#allocation7 + $0x398] sm:$0xff]
    %v839 = vld [vmem:[#allocation7 + $0x3a0] sm:$0xff]
    %v840 = vld [vmem:[#allocation7 + $0x3a8] sm:$0xff]
    %v841 = vld [vmem:[#allocation7 + $0x3b0] sm:$0xff]
    %v842 = vld [vmem:[#allocation7 + $0x3b8] sm:$0xff]
    %v843 = vld [vmem:[#allocation7 + $0x3c0] sm:$0xff]
    %v844 = vld [vmem:[#allocation7 + $0x3c8] sm:$0xff]
    %v845 = vld [vmem:[#allocation7 + $0x3d0] sm:$0xff]
    %v846 = vld [vmem:[#allocation7 + $0x3d8] sm:$0xff]
    %v847 = vld [vmem:[#allocation7 + $0x3e0] sm:$0xff]
    %v848 = vld [vmem:[#allocation7 + $0x3e8] sm:$0xff]
    %v849 = vld [vmem:[#allocation7 + $0x3f0] sm:$0xff]
    %v850 = vld [vmem:[#allocation7 + $0x3f8] sm:$0xff]
    %v851 = vld [vmem:[#allocation7 + $0x400] sm:$0xff]
    %v852 = vld [vmem:[#allocation7 + $0x408] sm:$0xff]
    %v853 = vld [vmem:[#allocation7 + $0x410] sm:$0xff]
    %v854 = vld [vmem:[#allocation7 + $0x418] sm:$0xff]
    %v855 = vld [vmem:[#allocation7 + $0x420] sm:$0xff]
    %v856 = vld [vmem:[#allocation7 + $0x428] sm:$0xff]
    %v857 = vld [vmem:[#allocation7 + $0x430] sm:$0xff]
    %v858 = vld [vmem:[#allocation7 + $0x438] sm:$0xff]
    %v859 = vld [vmem:[#allocation7 + $0x440] sm:$0xff]
    %v860 = vld [vmem:[#allocation7 + $0x448] sm:$0xff]
    %v861 = vld [vmem:[#allocation7 + $0x450] sm:$0xff]
    %v862 = vld [vmem:[#allocation7 + $0x458] sm:$0xff]
    %v863 = vld [vmem:[#allocation7 + $0x460] sm:$0xff]
    %v864 = vld [vmem:[#allocation7 + $0x468] sm:$0xff]
    %v865 = vld [vmem:[#allocation7 + $0x470] sm:$0xff]
    %v866 = vld [vmem:[#allocation7 + $0x478] sm:$0xff]
    %v867 = vld [vmem:[#allocation7 + $0x480] sm:$0xff]
    %v868 = vld [vmem:[#allocation7 + $0x488] sm:$0xff]
    %v869 = vld [vmem:[#allocation7 + $0x490] sm:$0xff]
    %v870 = vld [vmem:[#allocation7 + $0x498] sm:$0xff]
    %v871 = vld [vmem:[#allocation7 + $0x4a0] sm:$0xff]
    %v872 = vld [vmem:[#allocation7 + $0x4a8] sm:$0xff]
    %v873 = vld [vmem:[#allocation7 + $0x4b0] sm:$0xff]
    %v874 = vld [vmem:[#allocation7 + $0x4b8] sm:$0xff]
    %v875 = vld [vmem:[#allocation7 + $0x4c0] sm:$0xff]
    %v876 = vld [vmem:[#allocation7 + $0x4c8] sm:$0xff]
    %v877 = vld [vmem:[#allocation7 + $0x4d0] sm:$0xff]
    %v878 = vld [vmem:[#allocation7 + $0x4d8] sm:$0xff]
    %v879 = vld [vmem:[#allocation7 + $0x4e0] sm:$0xff]
    %v880 = vld [vmem:[#allocation7 + $0x4e8] sm:$0xff]
    %v881 = vld [vmem:[#allocation7 + $0x4f0] sm:$0xff]
    %v882 = vld [vmem:[#allocation7 + $0x4f8] sm:$0xff]
    %v883 = vld [vmem:[#allocation7 + $0x500] sm:$0xff]
    %v884 = vld [vmem:[#allocation7 + $0x508] sm:$0xff]
    %v885 = vld [vmem:[#allocation7 + $0x510] sm:$0xff]
    %v886 = vld [vmem:[#allocation7 + $0x518] sm:$0xff]
    %v887 = vld [vmem:[#allocation7 + $0x520] sm:$0xff]
    %v888 = vld [vmem:[#allocation7 + $0x528] sm:$0xff]
    %v889 = vld [vmem:[#allocation7 + $0x530] sm:$0xff]
    %v890 = vld [vmem:[#allocation7 + $0x538] sm:$0xff]
    %v891 = vld [vmem:[#allocation7 + $0x540] sm:$0xff]
    %v892 = vld [vmem:[#allocation7 + $0x548] sm:$0xff]
    %v893 = vld [vmem:[#allocation7 + $0x550] sm:$0xff]
    %v894 = vld [vmem:[#allocation7 + $0x558] sm:$0xff]
    %v895 = vld [vmem:[#allocation7 + $0x560] sm:$0xff]
    %v896 = vld [vmem:[#allocation7 + $0x568] sm:$0xff]
    %v897 = vld [vmem:[#allocation7 + $0x570] sm:$0xff]
    %v898 = vld [vmem:[#allocation7 + $0x578] sm:$0xff]
    %v899 = vld [vmem:[#allocation7 + $0x580] sm:$0xff]
    %v900 = vld [vmem:[#allocation7 + $0x588] sm:$0xff]
    %v901 = vld [vmem:[#allocation7 + $0x590] sm:$0xff]
    %v902 = vld [vmem:[#allocation7 + $0x598] sm:$0xff]
    %v903 = vld [vmem:[#allocation7 + $0x5a0] sm:$0xff]
    %v904 = vld [vmem:[#allocation7 + $0x5a8] sm:$0xff]
    %v905 = vld [vmem:[#allocation7 + $0x5b0] sm:$0xff]
    %v906 = vld [vmem:[#allocation7 + $0x5b8] sm:$0xff]
    %v907 = vld [vmem:[#allocation7 + $0x5c0] sm:$0xff]
    %v908 = vld [vmem:[#allocation7 + $0x5c8] sm:$0xff]
    %v909 = vld [vmem:[#allocation7 + $0x5d0] sm:$0xff]
    %v910 = vld [vmem:[#allocation7 + $0x5d8] sm:$0xff]
    %v911 = vld [vmem:[#allocation7 + $0x5e0] sm:$0xff]
    %v912 = vld [vmem:[#allocation7 + $0x5e8] sm:$0xff]
    %v913 = vld [vmem:[#allocation7 + $0x5f0] sm:$0xff]
    %v914 = vld [vmem:[#allocation7 + $0x5f8] sm:$0xff]
    %v915 = vld [vmem:[#allocation7 + $0x600] sm:$0xff]
    %v916 = vld [vmem:[#allocation7 + $0x608] sm:$0xff]
    %v917 = vld [vmem:[#allocation7 + $0x610] sm:$0xff]
    %v918 = vld [vmem:[#allocation7 + $0x618] sm:$0xff]
    %v919 = vld [vmem:[#allocation7 + $0x620] sm:$0xff]
    %v920 = vld [vmem:[#allocation7 + $0x628] sm:$0xff]
    %v921 = vld [vmem:[#allocation7 + $0x630] sm:$0xff]
    %v922 = vld [vmem:[#allocation7 + $0x638] sm:$0xff]
    %v923 = vld [vmem:[#allocation7 + $0x640] sm:$0xff]
    %v924 = vld [vmem:[#allocation7 + $0x648] sm:$0xff]
    %v925 = vld [vmem:[#allocation7 + $0x650] sm:$0xff]
    %v926 = vld [vmem:[#allocation7 + $0x658] sm:$0xff]
    %v927 = vld [vmem:[#allocation7 + $0x660] sm:$0xff]
    %v928 = vld [vmem:[#allocation7 + $0x668] sm:$0xff]
    %v929 = vld [vmem:[#allocation7 + $0x670] sm:$0xff]
    %v930 = vld [vmem:[#allocation7 + $0x678] sm:$0xff]
    %v931 = vld [vmem:[#allocation7 + $0x680] sm:$0xff]
    %v932 = vld [vmem:[#allocation7 + $0x688] sm:$0xff]
    %v933 = vld [vmem:[#allocation7 + $0x690] sm:$0xff]
    %v934 = vld [vmem:[#allocation7 + $0x698] sm:$0xff]
    %v935 = vld [vmem:[#allocation7 + $0x6a0] sm:$0xff]
    %v936 = vld [vmem:[#allocation7 + $0x6a8] sm:$0xff]
    %v937 = vld [vmem:[#allocation7 + $0x6b0] sm:$0xff]
    %v938 = vld [vmem:[#allocation7 + $0x6b8] sm:$0xff]
    %v939 = vld [vmem:[#allocation7 + $0x6c0] sm:$0xff]
    %v940 = vld [vmem:[#allocation7 + $0x6c8] sm:$0xff]
    %v941 = vld [vmem:[#allocation7 + $0x6d0] sm:$0xff]
    %v942 = vld [vmem:[#allocation7 + $0x6d8] sm:$0xff]
    %v943 = vld [vmem:[#allocation7 + $0x6e0] sm:$0xff]
    %v944 = vld [vmem:[#allocation7 + $0x6e8] sm:$0xff]
    %v945 = vld [vmem:[#allocation7 + $0x6f0] sm:$0xff]
    %v946 = vld [vmem:[#allocation7 + $0x6f8] sm:$0xff]
    %v947 = vld [vmem:[#allocation7 + $0x700] sm:$0xff]
    %v948 = vld [vmem:[#allocation7 + $0x708] sm:$0xff]
    %v949 = vld [vmem:[#allocation7 + $0x710] sm:$0xff]
    %v950 = vld [vmem:[#allocation7 + $0x718] sm:$0xff]
    %v951 = vld [vmem:[#allocation7 + $0x720] sm:$0xff]
    %v952 = vld [vmem:[#allocation7 + $0x728] sm:$0xff]
    %v953 = vld [vmem:[#allocation7 + $0x730] sm:$0xff]
    %v954 = vld [vmem:[#allocation7 + $0x738] sm:$0xff]
    %v955 = vld [vmem:[#allocation7 + $0x740] sm:$0xff]
    %v956 = vld [vmem:[#allocation7 + $0x748] sm:$0xff]
    %v957 = vld [vmem:[#allocation7 + $0x750] sm:$0xff]
    %v958 = vld [vmem:[#allocation7 + $0x758] sm:$0xff]
    %v959 = vld [vmem:[#allocation7 + $0x760] sm:$0xff]
    %v960 = vld [vmem:[#allocation7 + $0x768] sm:$0xff]
    %v961 = vld [vmem:[#allocation7 + $0x770] sm:$0xff]
    %v962 = vld [vmem:[#allocation7 + $0x778] sm:$0xff]
    %v963 = vld [vmem:[#allocation7 + $0x780] sm:$0xff]
    %v964 = vld [vmem:[#allocation7 + $0x788] sm:$0xff]
    %v965 = vld [vmem:[#allocation7 + $0x790] sm:$0xff]
    %v966 = vld [vmem:[#allocation7 + $0x798] sm:$0xff]
    %v967 = vld [vmem:[#allocation7 + $0x7a0] sm:$0xff]
    %v968 = vld [vmem:[#allocation7 + $0x7a8] sm:$0xff]
    %v969 = vld [vmem:[#allocation7 + $0x7b0] sm:$0xff]
    %v970 = vld [vmem:[#allocation7 + $0x7b8] sm:$0xff]
    %v971 = vld [vmem:[#allocation7 + $0x7c0] sm:$0xff]
    %v972 = vld [vmem:[#allocation7 + $0x7c8] sm:$0xff]
    %v973 = vld [vmem:[#allocation7 + $0x7d0] sm:$0xff]
    %v974 = vld [vmem:[#allocation7 + $0x7d8] sm:$0xff]
    %v975 = vld [vmem:[#allocation7 + $0x7e0] sm:$0xff]
    %v976 = vld [vmem:[#allocation7 + $0x7e8] sm:$0xff]
    %v977 = vld [vmem:[#allocation7 + $0x7f0] sm:$0xff]
    %v978 = vld [vmem:[#allocation7 + $0x7f8] sm:$0xff]
    %v979 = vld [vmem:[#allocation7 + $0x800] sm:$0xff]
    %v980 = vld [vmem:[#allocation7 + $0x808] sm:$0xff]
    %v981 = vld [vmem:[#allocation7 + $0x810] sm:$0xff]
    %v982 = vld [vmem:[#allocation7 + $0x818] sm:$0xff]
    %v983 = vld [vmem:[#allocation7 + $0x820] sm:$0xff]
    %v984 = vld [vmem:[#allocation7 + $0x828] sm:$0xff]
    %v985 = vld [vmem:[#allocation7 + $0x830] sm:$0xff]
    %v986 = vld [vmem:[#allocation7 + $0x838] sm:$0xff]
    %v987 = vld [vmem:[#allocation7 + $0x840] sm:$0xff]
    %v988 = vld [vmem:[#allocation7 + $0x848] sm:$0xff]
    %v989 = vld [vmem:[#allocation7 + $0x850] sm:$0xff]
    %v990 = vld [vmem:[#allocation7 + $0x858] sm:$0xff]
    %v991 = vld [vmem:[#allocation7 + $0x860] sm:$0xff]
    %v992 = vld [vmem:[#allocation7 + $0x868] sm:$0xff]
    %v993 = vld [vmem:[#allocation7 + $0x870] sm:$0xff]
    %v994 = vld [vmem:[#allocation7 + $0x878] sm:$0xff]
    %v995 = vld [vmem:[#allocation7 + $0x880] sm:$0xff]
    %v996 = vld [vmem:[#allocation7 + $0x888] sm:$0xff]
    %v997 = vld [vmem:[#allocation7 + $0x890] sm:$0xff]
    %v998 = vld [vmem:[#allocation7 + $0x898] sm:$0xff]
    %v999 = vld [vmem:[#allocation7 + $0x8a0] sm:$0xff]
    %v1000 = vld [vmem:[#allocation7 + $0x8a8] sm:$0xff]
    %v1001 = vld [vmem:[#allocation7 + $0x8b0] sm:$0xff]
    %v1002 = vld [vmem:[#allocation7 + $0x8b8] sm:$0xff]
    %v1003 = vld [vmem:[#allocation7 + $0x8c0] sm:$0xff]
    %v1004 = vld [vmem:[#allocation7 + $0x8c8] sm:$0xff]
    %v1005 = vld [vmem:[#allocation7 + $0x8d0] sm:$0xff]
    %v1006 = vld [vmem:[#allocation7 + $0x8d8] sm:$0xff]
    %v1007 = vld [vmem:[#allocation7 + $0x8e0] sm:$0xff]
    %v1008 = vld [vmem:[#allocation7 + $0x8e8] sm:$0xff]
    %v1009 = vld [vmem:[#allocation7 + $0x8f0] sm:$0xff]
    %v1010 = vld [vmem:[#allocation7 + $0x8f8] sm:$0xff]
    %v1011 = vld [vmem:[#allocation7 + $0x900] sm:$0xff]
    %v1012 = vld [vmem:[#allocation7 + $0x908] sm:$0xff]
    %v1013 = vld [vmem:[#allocation7 + $0x910] sm:$0xff]
    %v1014 = vld [vmem:[#allocation7 + $0x918] sm:$0xff]
    %v1015 = vld [vmem:[#allocation7 + $0x920] sm:$0xff]
    %v1016 = vld [vmem:[#allocation7 + $0x928] sm:$0xff]
    %v1017 = vld [vmem:[#allocation7 + $0x930] sm:$0xff]
    %v1018 = vld [vmem:[#allocation7 + $0x938] sm:$0xff]
    %v1019 = vld [vmem:[#allocation7 + $0x940] sm:$0xff]
    %v1020 = vld [vmem:[#allocation7 + $0x948] sm:$0xff]
    %v1021 = vld [vmem:[#allocation7 + $0x950] sm:$0xff]
    %v1022 = vld [vmem:[#allocation7 + $0x958] sm:$0xff]
    %v1023 = vld [vmem:[#allocation7 + $0x960] sm:$0xff]
    %v1024 = vld [vmem:[#allocation7 + $0x968] sm:$0xff]
    %v1025 = vld [vmem:[#allocation7 + $0x970] sm:$0xff]
    %v1026 = vld [vmem:[#allocation7 + $0x978] sm:$0xff]
    %v1027 = vld [vmem:[#allocation7 + $0x980] sm:$0xff]
    %v1028 = vld [vmem:[#allocation7 + $0x988] sm:$0xff]
    %v1029 = vld [vmem:[#allocation7 + $0x990] sm:$0xff]
    %v1030 = vld [vmem:[#allocation7 + $0x998] sm:$0xff]
    %v1031 = vld [vmem:[#allocation7 + $0x9a0] sm:$0xff]
    %v1032 = vld [vmem:[#allocation7 + $0x9a8] sm:$0xff]
    %v1033 = vld [vmem:[#allocation7 + $0x9b0] sm:$0xff]
    %v1034 = vld [vmem:[#allocation7 + $0x9b8] sm:$0xff]
    %v1035 = vld [vmem:[#allocation7 + $0x9c0] sm:$0xff]
    %v1036 = vld [vmem:[#allocation7 + $0x9c8] sm:$0xff]
    %v1037 = vld [vmem:[#allocation7 + $0x9d0] sm:$0xff]
    %v1038 = vld [vmem:[#allocation7 + $0x9d8] sm:$0xff]
    %v1039 = vld [vmem:[#allocation7 + $0x9e0] sm:$0xff]
    %v1040 = vld [vmem:[#allocation7 + $0x9e8] sm:$0xff]
    %v1041 = vld [vmem:[#allocation7 + $0x9f0] sm:$0xff]
    %v1042 = vld [vmem:[#allocation7 + $0x9f8] sm:$0xff]
    %v1043 = vld [vmem:[#allocation7 + $0xa00] sm:$0xff]
    %v1044 = vld [vmem:[#allocation7 + $0xa08] sm:$0xff]
    %v1045 = vld [vmem:[#allocation7 + $0xa10] sm:$0xff]
    %v1046 = vld [vmem:[#allocation7 + $0xa18] sm:$0xff]
    %v1047 = vld [vmem:[#allocation7 + $0xa20] sm:$0xff]
    %v1048 = vld [vmem:[#allocation7 + $0xa28] sm:$0xff]
    %v1049 = vld [vmem:[#allocation7 + $0xa30] sm:$0xff]
    %v1050 = vld [vmem:[#allocation7 + $0xa38] sm:$0xff]
    %v1051 = vld [vmem:[#allocation7 + $0xa40] sm:$0xff]
    %v1052 = vld [vmem:[#allocation7 + $0xa48] sm:$0xff]
    %v1053 = vld [vmem:[#allocation7 + $0xa50] sm:$0xff]
    %v1054 = vld [vmem:[#allocation7 + $0xa58] sm:$0xff]
    %v1055 = vld [vmem:[#allocation7 + $0xa60] sm:$0xff]
    %v1056 = vld [vmem:[#allocation7 + $0xa68] sm:$0xff]
    %v1057 = vld [vmem:[#allocation7 + $0xa70] sm:$0xff]
    %v1058 = vld [vmem:[#allocation7 + $0xa78] sm:$0xff]
    %v1059 = vld [vmem:[#allocation7 + $0xa80] sm:$0xff]
    %v1060 = vld [vmem:[#allocation7 + $0xa88] sm:$0xff]
    %v1061 = vld [vmem:[#allocation7 + $0xa90] sm:$0xff]
    %v1062 = vld [vmem:[#allocation7 + $0xa98] sm:$0xff]
    %v1063 = vld [vmem:[#allocation7 + $0xaa0] sm:$0xff]
    %v1064 = vld [vmem:[#allocation7 + $0xaa8] sm:$0xff]
    %v1065 = vld [vmem:[#allocation7 + $0xab0] sm:$0xff]
    %v1066 = vld [vmem:[#allocation7 + $0xab8] sm:$0xff]
    %v1067 = vld [vmem:[#allocation7 + $0xac0] sm:$0xff]
    %v1068 = vld [vmem:[#allocation7 + $0xac8] sm:$0xff]
    %v1069 = vld [vmem:[#allocation7 + $0xad0] sm:$0xff]
    %v1070 = vld [vmem:[#allocation7 + $0xad8] sm:$0xff]
    %v1071 = vld [vmem:[#allocation7 + $0xae0] sm:$0xff]
    %v1072 = vld [vmem:[#allocation7 + $0xae8] sm:$0xff]
    %v1073 = vld [vmem:[#allocation7 + $0xaf0] sm:$0xff]
    %v1074 = vld [vmem:[#allocation7 + $0xaf8] sm:$0xff]
    %v1075 = vld [vmem:[#allocation7 + $0xb00] sm:$0xff]
    %v1076 = vld [vmem:[#allocation7 + $0xb08] sm:$0xff]
    %v1077 = vld [vmem:[#allocation7 + $0xb10] sm:$0xff]
    %v1078 = vld [vmem:[#allocation7 + $0xb18] sm:$0xff]
    %v1079 = vld [vmem:[#allocation7 + $0xb20] sm:$0xff]
    %v1080 = vld [vmem:[#allocation7 + $0xb28] sm:$0xff]
    %v1081 = vld [vmem:[#allocation7 + $0xb30] sm:$0xff]
    %v1082 = vld [vmem:[#allocation7 + $0xb38] sm:$0xff]
    %v1083 = vld [vmem:[#allocation7 + $0xb40] sm:$0xff]
    %v1084 = vld [vmem:[#allocation7 + $0xb48] sm:$0xff]
    %v1085 = vld [vmem:[#allocation7 + $0xb50] sm:$0xff]
    %v1086 = vld [vmem:[#allocation7 + $0xb58] sm:$0xff]
    %v1087 = vld [vmem:[#allocation7 + $0xb60] sm:$0xff]
    %v1088 = vld [vmem:[#allocation7 + $0xb68] sm:$0xff]
    %v1089 = vld [vmem:[#allocation7 + $0xb70] sm:$0xff]
    %v1090 = vld [vmem:[#allocation7 + $0xb78] sm:$0xff]
    %v1091 = vld [vmem:[#allocation7 + $0xb80] sm:$0xff]
    %v1092 = vld [vmem:[#allocation7 + $0xb88] sm:$0xff]
    %v1093 = vld [vmem:[#allocation7 + $0xb90] sm:$0xff]
    %v1094 = vld [vmem:[#allocation7 + $0xb98] sm:$0xff]
    %v1095 = vld [vmem:[#allocation7 + $0xba0] sm:$0xff]
    %v1096 = vld [vmem:[#allocation7 + $0xba8] sm:$0xff]
    %v1097 = vld [vmem:[#allocation7 + $0xbb0] sm:$0xff]
    %v1098 = vld [vmem:[#allocation7 + $0xbb8] sm:$0xff]
    %v1099 = vld [vmem:[#allocation7 + $0xbc0] sm:$0xff]
    %v1100 = vld [vmem:[#allocation7 + $0xbc8] sm:$0xff]
    %v1101 = vld [vmem:[#allocation7 + $0xbd0] sm:$0xff]
    %v1102 = vld [vmem:[#allocation7 + $0xbd8] sm:$0xff]
    %v1103 = vld [vmem:[#allocation7 + $0xbe0] sm:$0xff]
    %v1104 = vld [vmem:[#allocation7 + $0xbe8] sm:$0xff]
    %v1105 = vld [vmem:[#allocation7 + $0xbf0] sm:$0xff]
    %v1106 = vld [vmem:[#allocation7 + $0xbf8] sm:$0xff]
    %v1107 = vld [vmem:[#allocation7 + $0xc00] sm:$0xff]
    %v1108 = vld [vmem:[#allocation7 + $0xc08] sm:$0xff]
    %v1109 = vld [vmem:[#allocation7 + $0xc10] sm:$0xff]
    %v1110 = vld [vmem:[#allocation7 + $0xc18] sm:$0xff]
    %v1111 = vld [vmem:[#allocation7 + $0xc20] sm:$0xff]
    %v1112 = vld [vmem:[#allocation7 + $0xc28] sm:$0xff]
    %v1113 = vld [vmem:[#allocation7 + $0xc30] sm:$0xff]
    %v1114 = vld [vmem:[#allocation7 + $0xc38] sm:$0xff]
    %v1115 = vld [vmem:[#allocation7 + $0xc40] sm:$0xff]
    %v1116 = vld [vmem:[#allocation7 + $0xc48] sm:$0xff]
    %v1117 = vld [vmem:[#allocation7 + $0xc50] sm:$0xff]
    %v1118 = vld [vmem:[#allocation7 + $0xc58] sm:$0xff]
    %v1119 = vld [vmem:[#allocation7 + $0xc60] sm:$0xff]
    %v1120 = vld [vmem:[#allocation7 + $0xc68] sm:$0xff]
    %v1121 = vld [vmem:[#allocation7 + $0xc70] sm:$0xff]
    %v1122 = vld [vmem:[#allocation7 + $0xc78] sm:$0xff]
    %v1123 = vld [vmem:[#allocation7 + $0xc80] sm:$0xff]
    %v1124 = vld [vmem:[#allocation7 + $0xc88] sm:$0xff]
    %v1125 = vld [vmem:[#allocation7 + $0xc90] sm:$0xff]
    %v1126 = vld [vmem:[#allocation7 + $0xc98] sm:$0xff]
    %v1127 = vld [vmem:[#allocation7 + $0xca0] sm:$0xff]
    %v1128 = vld [vmem:[#allocation7 + $0xca8] sm:$0xff]
    %v1129 = vld [vmem:[#allocation7 + $0xcb0] sm:$0xff]
    %v1130 = vld [vmem:[#allocation7 + $0xcb8] sm:$0xff]
    %v1131 = vld [vmem:[#allocation7 + $0xcc0] sm:$0xff]
    %v1132 = vld [vmem:[#allocation7 + $0xcc8] sm:$0xff]
    %v1133 = vld [vmem:[#allocation7 + $0xcd0] sm:$0xff]
    %v1134 = vld [vmem:[#allocation7 + $0xcd8] sm:$0xff]
    %v1135 = vld [vmem:[#allocation7 + $0xce0] sm:$0xff]
    %v1136 = vld [vmem:[#allocation7 + $0xce8] sm:$0xff]
    %v1137 = vld [vmem:[#allocation7 + $0xcf0] sm:$0xff]
    %v1138 = vld [vmem:[#allocation7 + $0xcf8] sm:$0xff]
    %v1139 = vld [vmem:[#allocation7 + $0xd00] sm:$0xff]
    %v1140 = vld [vmem:[#allocation7 + $0xd08] sm:$0xff]
    %v1141 = vld [vmem:[#allocation7 + $0xd10] sm:$0xff]
    %v1142 = vld [vmem:[#allocation7 + $0xd18] sm:$0xff]
    %v1143 = vld [vmem:[#allocation7 + $0xd20] sm:$0xff]
    %v1144 = vld [vmem:[#allocation7 + $0xd28] sm:$0xff]
    %v1145 = vld [vmem:[#allocation7 + $0xd30] sm:$0xff]
    %v1146 = vld [vmem:[#allocation7 + $0xd38] sm:$0xff]
    %v1147 = vld [vmem:[#allocation7 + $0xd40] sm:$0xff]
    %v1148 = vld [vmem:[#allocation7 + $0xd48] sm:$0xff]
    %v1149 = vld [vmem:[#allocation7 + $0xd50] sm:$0xff]
    %v1150 = vld [vmem:[#allocation7 + $0xd58] sm:$0xff]
    %v1151 = vld [vmem:[#allocation7 + $0xd60] sm:$0xff]
    %v1152 = vld [vmem:[#allocation7 + $0xd68] sm:$0xff]
    %v1153 = vld [vmem:[#allocation7 + $0xd70] sm:$0xff]
    %v1154 = vld [vmem:[#allocation7 + $0xd78] sm:$0xff]
    %v1155 = vld [vmem:[#allocation7 + $0xd80] sm:$0xff]
    %v1156 = vld [vmem:[#allocation7 + $0xd88] sm:$0xff]
    %v1157 = vld [vmem:[#allocation7 + $0xd90] sm:$0xff]
    %v1158 = vld [vmem:[#allocation7 + $0xd98] sm:$0xff]
    %v1159 = vld [vmem:[#allocation7 + $0xda0] sm:$0xff]
    %v1160 = vld [vmem:[#allocation7 + $0xda8] sm:$0xff]
    %v1161 = vld [vmem:[#allocation7 + $0xdb0] sm:$0xff]
    %v1162 = vld [vmem:[#allocation7 + $0xdb8] sm:$0xff]
    %v1163 = vld [vmem:[#allocation7 + $0xdc0] sm:$0xff]
    %v1164 = vld [vmem:[#allocation7 + $0xdc8] sm:$0xff]
    %v1165 = vld [vmem:[#allocation7 + $0xdd0] sm:$0xff]
    %v1166 = vld [vmem:[#allocation7 + $0xdd8] sm:$0xff]
    %v1167 = vld [vmem:[#allocation7 + $0xde0] sm:$0xff]
    %v1168 = vld [vmem:[#allocation7 + $0xde8] sm:$0xff]
    %v1169 = vld [vmem:[#allocation7 + $0xdf0] sm:$0xff]
    %v1170 = vld [vmem:[#allocation7 + $0xdf8] sm:$0xff]
    %v1171 = vld [vmem:[#allocation7 + $0xe00] sm:$0xff]
    %v1172 = vld [vmem:[#allocation7 + $0xe08] sm:$0xff]
    %v1173 = vld [vmem:[#allocation7 + $0xe10] sm:$0xff]
    %v1174 = vld [vmem:[#allocation7 + $0xe18] sm:$0xff]
    %v1175 = vld [vmem:[#allocation7 + $0xe20] sm:$0xff]
    %v1176 = vld [vmem:[#allocation7 + $0xe28] sm:$0xff]
    %v1177 = vld [vmem:[#allocation7 + $0xe30] sm:$0xff]
    %v1178 = vld [vmem:[#allocation7 + $0xe38] sm:$0xff]
    %v1179 = vld [vmem:[#allocation7 + $0xe40] sm:$0xff]
    %v1180 = vld [vmem:[#allocation7 + $0xe48] sm:$0xff]
    %v1181 = vld [vmem:[#allocation7 + $0xe50] sm:$0xff]
    %v1182 = vld [vmem:[#allocation7 + $0xe58] sm:$0xff]
    %v1183 = vld [vmem:[#allocation7 + $0xe60] sm:$0xff]
    %v1184 = vld [vmem:[#allocation7 + $0xe68] sm:$0xff]
    %v1185 = vld [vmem:[#allocation7 + $0xe70] sm:$0xff]
    %v1186 = vld [vmem:[#allocation7 + $0xe78] sm:$0xff]
    %v1187 = vld [vmem:[#allocation7 + $0xe80] sm:$0xff]
    %v1188 = vld [vmem:[#allocation7 + $0xe88] sm:$0xff]
    %v1189 = vld [vmem:[#allocation7 + $0xe90] sm:$0xff]
    %v1190 = vld [vmem:[#allocation7 + $0xe98] sm:$0xff]
    %v1191 = vld [vmem:[#allocation7 + $0xea0] sm:$0xff]
    %v1192 = vld [vmem:[#allocation7 + $0xea8] sm:$0xff]
    %v1193 = vld [vmem:[#allocation7 + $0xeb0] sm:$0xff]
    %v1194 = vld [vmem:[#allocation7 + $0xeb8] sm:$0xff]
    %v1195 = vld [vmem:[#allocation7 + $0xec0] sm:$0xff]
    %v1196 = vld [vmem:[#allocation7 + $0xec8] sm:$0xff]
    %v1197 = vld [vmem:[#allocation7 + $0xed0] sm:$0xff]
    %v1198 = vld [vmem:[#allocation7 + $0xed8] sm:$0xff]
    %v1199 = vld [vmem:[#allocation7 + $0xee0] sm:$0xff]
    %v1200 = vld [vmem:[#allocation7 + $0xee8] sm:$0xff]
    %v1201 = vld [vmem:[#allocation7 + $0xef0] sm:$0xff]
    %v1202 = vld [vmem:[#allocation7 + $0xef8] sm:$0xff]
    %v1203 = vld [vmem:[#allocation7 + $0xf00] sm:$0xff]
    %v1204 = vld [vmem:[#allocation7 + $0xf08] sm:$0xff]
    %v1205 = vld [vmem:[#allocation7 + $0xf10] sm:$0xff]
    %v1206 = vld [vmem:[#allocation7 + $0xf18] sm:$0xff]
    %v1207 = vld [vmem:[#allocation7 + $0xf20] sm:$0xff]
    %v1208 = vld [vmem:[#allocation7 + $0xf28] sm:$0xff]
    %v1209 = vld [vmem:[#allocation7 + $0xf30] sm:$0xff]
    %v1210 = vld [vmem:[#allocation7 + $0xf38] sm:$0xff]
    %v1211 = vld [vmem:[#allocation7 + $0xf40] sm:$0xff]
    %v1212 = vld [vmem:[#allocation7 + $0xf48] sm:$0xff]
    %v1213 = vld [vmem:[#allocation7 + $0xf50] sm:$0xff]
    %v1214 = vld [vmem:[#allocation7 + $0xf58] sm:$0xff]
    %v1215 = vld [vmem:[#allocation7 + $0xf60] sm:$0xff]
    %v1216 = vld [vmem:[#allocation7 + $0xf68] sm:$0xff]
    %v1217 = vld [vmem:[#allocation7 + $0xf70] sm:$0xff]
    %v1218 = vld [vmem:[#allocation7 + $0xf78] sm:$0xff]
    %v1219 = vld [vmem:[#allocation7 + $0xf80] sm:$0xff]
    %v1220 = vld [vmem:[#allocation7 + $0xf88] sm:$0xff]
    %v1221 = vld [vmem:[#allocation7 + $0xf90] sm:$0xff]
    %v1222 = vld [vmem:[#allocation7 + $0xf98] sm:$0xff]
    %v1223 = vld [vmem:[#allocation7 + $0xfa0] sm:$0xff]
    %v1224 = vld [vmem:[#allocation7 + $0xfa8] sm:$0xff]
    %v1225 = vld [vmem:[#allocation7 + $0xfb0] sm:$0xff]
    %v1226 = vld [vmem:[#allocation7 + $0xfb8] sm:$0xff]
    %v1227 = vld [vmem:[#allocation7 + $0xfc0] sm:$0xff]
    %v1228 = vld [vmem:[#allocation7 + $0xfc8] sm:$0xff]
    %v1229 = vld [vmem:[#allocation7 + $0xfd0] sm:$0xff]
    %v1230 = vld [vmem:[#allocation7 + $0xfd8] sm:$0xff]
    %v1231 = vld [vmem:[#allocation7 + $0xfe0] sm:$0xff]
    %v1232 = vld [vmem:[#allocation7 + $0xfe8] sm:$0xff]
    %v1233 = vld [vmem:[#allocation7 + $0xff0] sm:$0xff]
    %v1234 = vld [vmem:[#allocation7 + $0xff8] sm:$0xff]
    %v1235 = vld [vmem:[#allocation8] sm:$0xf]
    %v1237 = vlaneseq
    %v1238 = vshrl.u32 %v1237, 7
    %v1239 = vsub.s32 0, %v1238
    %v1240 = vrot.slane %v1235, %v1239
    %v1241 = vlaneseq
    %v1242 = vshrl.u32 %v1241, 7
    %v1243 = vsub.s32 1, %v1242
    %v1244 = vrot.slane %v1235, %v1243
    %v1245 = vlaneseq
    %v1246 = vshrl.u32 %v1245, 7
    %v1247 = vsub.s32 2, %v1246
    %v1248 = vrot.slane %v1235, %v1247
    %v1249 = vlaneseq
    %v1250 = vshrl.u32 %v1249, 7
    %v1251 = vsub.s32 3, %v1250
    %v1252 = vrot.slane %v1235, %v1251
    %v1769 = vunpack.c.l.b16 %v723
    %v1770 = vunpack.c.h.b16 %v723
    %v1771 = vunpack.c.l.b16 %v724
    %v1772 = vunpack.c.h.b16 %v724
    %v1773 = vunpack.c.l.b16 %v725
    %v1774 = vunpack.c.h.b16 %v725
    %v1775 = vunpack.c.l.b16 %v726
    %v1776 = vunpack.c.h.b16 %v726
    %v1777 = vunpack.c.l.b16 %v727
    %v1778 = vunpack.c.h.b16 %v727
    %v1779 = vunpack.c.l.b16 %v728
    %v1780 = vunpack.c.h.b16 %v728
    %v1781 = vunpack.c.l.b16 %v729
    %v1782 = vunpack.c.h.b16 %v729
    %v1783 = vunpack.c.l.b16 %v730
    %v1784 = vunpack.c.h.b16 %v730
    %v1785 = vunpack.c.l.b16 %v731
    %v1786 = vunpack.c.h.b16 %v731
    %v1787 = vunpack.c.l.b16 %v732
    %v1788 = vunpack.c.h.b16 %v732
    %v1789 = vunpack.c.l.b16 %v733
    %v1790 = vunpack.c.h.b16 %v733
    %v1791 = vunpack.c.l.b16 %v734
    %v1792 = vunpack.c.h.b16 %v734
    %v1793 = vunpack.c.l.b16 %v735
    %v1794 = vunpack.c.h.b16 %v735
    %v1795 = vunpack.c.l.b16 %v736
    %v1796 = vunpack.c.h.b16 %v736
    %v1797 = vunpack.c.l.b16 %v737
    %v1798 = vunpack.c.h.b16 %v737
    %v1799 = vunpack.c.l.b16 %v738
    %v1800 = vunpack.c.h.b16 %v738
    %v1801 = vunpack.c.l.b16 %v739
    %v1802 = vunpack.c.h.b16 %v739
    %v1803 = vunpack.c.l.b16 %v740
    %v1804 = vunpack.c.h.b16 %v740
    %v1805 = vunpack.c.l.b16 %v741
    %v1806 = vunpack.c.h.b16 %v741
    %v1807 = vunpack.c.l.b16 %v742
    %v1808 = vunpack.c.h.b16 %v742
    %v1809 = vunpack.c.l.b16 %v743
    %v1810 = vunpack.c.h.b16 %v743
    %v1811 = vunpack.c.l.b16 %v744
    %v1812 = vunpack.c.h.b16 %v744
    %v1813 = vunpack.c.l.b16 %v745
    %v1814 = vunpack.c.h.b16 %v745
    %v1815 = vunpack.c.l.b16 %v746
    %v1816 = vunpack.c.h.b16 %v746
    %v1817 = vunpack.c.l.b16 %v747
    %v1818 = vunpack.c.h.b16 %v747
    %v1819 = vunpack.c.l.b16 %v748
    %v1820 = vunpack.c.h.b16 %v748
    %v1821 = vunpack.c.l.b16 %v749
    %v1822 = vunpack.c.h.b16 %v749
    %v1823 = vunpack.c.l.b16 %v750
    %v1824 = vunpack.c.h.b16 %v750
    %v1825 = vunpack.c.l.b16 %v751
    %v1826 = vunpack.c.h.b16 %v751
    %v1827 = vunpack.c.l.b16 %v752
    %v1828 = vunpack.c.h.b16 %v752
    %v1829 = vunpack.c.l.b16 %v753
    %v1830 = vunpack.c.h.b16 %v753
    %v1831 = vunpack.c.l.b16 %v754
    %v1832 = vunpack.c.h.b16 %v754
    %v1833 = vunpack.c.l.b16 %v755
    %v1834 = vunpack.c.h.b16 %v755
    %v1835 = vunpack.c.l.b16 %v756
    %v1836 = vunpack.c.h.b16 %v756
    %v1837 = vunpack.c.l.b16 %v757
    %v1838 = vunpack.c.h.b16 %v757
    %v1839 = vunpack.c.l.b16 %v758
    %v1840 = vunpack.c.h.b16 %v758
    %v1841 = vunpack.c.l.b16 %v759
    %v1842 = vunpack.c.h.b16 %v759
    %v1843 = vunpack.c.l.b16 %v760
    %v1844 = vunpack.c.h.b16 %v760
    %v1845 = vunpack.c.l.b16 %v761
    %v1846 = vunpack.c.h.b16 %v761
    %v1847 = vunpack.c.l.b16 %v762
    %v1848 = vunpack.c.h.b16 %v762
    %v1849 = vunpack.c.l.b16 %v763
    %v1850 = vunpack.c.h.b16 %v763
    %v1851 = vunpack.c.l.b16 %v764
    %v1852 = vunpack.c.h.b16 %v764
    %v1853 = vunpack.c.l.b16 %v765
    %v1854 = vunpack.c.h.b16 %v765
    %v1855 = vunpack.c.l.b16 %v766
    %v1856 = vunpack.c.h.b16 %v766
    %v1857 = vunpack.c.l.b16 %v767
    %v1858 = vunpack.c.h.b16 %v767
    %v1859 = vunpack.c.l.b16 %v768
    %v1860 = vunpack.c.h.b16 %v768
    %v1861 = vunpack.c.l.b16 %v769
    %v1862 = vunpack.c.h.b16 %v769
    %v1863 = vunpack.c.l.b16 %v770
    %v1864 = vunpack.c.h.b16 %v770
    %v1865 = vunpack.c.l.b16 %v771
    %v1866 = vunpack.c.h.b16 %v771
    %v1867 = vunpack.c.l.b16 %v772
    %v1868 = vunpack.c.h.b16 %v772
    %v1869 = vunpack.c.l.b16 %v773
    %v1870 = vunpack.c.h.b16 %v773
    %v1871 = vunpack.c.l.b16 %v774
    %v1872 = vunpack.c.h.b16 %v774
    %v1873 = vunpack.c.l.b16 %v775
    %v1874 = vunpack.c.h.b16 %v775
    %v1875 = vunpack.c.l.b16 %v776
    %v1876 = vunpack.c.h.b16 %v776
    %v1877 = vunpack.c.l.b16 %v777
    %v1878 = vunpack.c.h.b16 %v777
    %v1879 = vunpack.c.l.b16 %v778
    %v1880 = vunpack.c.h.b16 %v778
    %v1881 = vunpack.c.l.b16 %v779
    %v1882 = vunpack.c.h.b16 %v779
    %v1883 = vunpack.c.l.b16 %v780
    %v1884 = vunpack.c.h.b16 %v780
    %v1885 = vunpack.c.l.b16 %v781
    %v1886 = vunpack.c.h.b16 %v781
    %v1887 = vunpack.c.l.b16 %v782
    %v1888 = vunpack.c.h.b16 %v782
    %v1889 = vunpack.c.l.b16 %v783
    %v1890 = vunpack.c.h.b16 %v783
    %v1891 = vunpack.c.l.b16 %v784
    %v1892 = vunpack.c.h.b16 %v784
    %v1893 = vunpack.c.l.b16 %v785
    %v1894 = vunpack.c.h.b16 %v785
    %v1895 = vunpack.c.l.b16 %v786
    %v1896 = vunpack.c.h.b16 %v786
    %v1897 = vunpack.c.l.b16 %v787
    %v1898 = vunpack.c.h.b16 %v787
    %v1899 = vunpack.c.l.b16 %v788
    %v1900 = vunpack.c.h.b16 %v788
    %v1901 = vunpack.c.l.b16 %v789
    %v1902 = vunpack.c.h.b16 %v789
    %v1903 = vunpack.c.l.b16 %v790
    %v1904 = vunpack.c.h.b16 %v790
    %v1905 = vunpack.c.l.b16 %v791
    %v1906 = vunpack.c.h.b16 %v791
    %v1907 = vunpack.c.l.b16 %v792
    %v1908 = vunpack.c.h.b16 %v792
    %v1909 = vunpack.c.l.b16 %v793
    %v1910 = vunpack.c.h.b16 %v793
    %v1911 = vunpack.c.l.b16 %v794
    %v1912 = vunpack.c.h.b16 %v794
    %v1913 = vunpack.c.l.b16 %v795
    %v1914 = vunpack.c.h.b16 %v795
    %v1915 = vunpack.c.l.b16 %v796
    %v1916 = vunpack.c.h.b16 %v796
    %v1917 = vunpack.c.l.b16 %v797
    %v1918 = vunpack.c.h.b16 %v797
    %v1919 = vunpack.c.l.b16 %v798
    %v1920 = vunpack.c.h.b16 %v798
    %v1921 = vunpack.c.l.b16 %v799
    %v1922 = vunpack.c.h.b16 %v799
    %v1923 = vunpack.c.l.b16 %v800
    %v1924 = vunpack.c.h.b16 %v800
    %v1925 = vunpack.c.l.b16 %v801
    %v1926 = vunpack.c.h.b16 %v801
    %v1927 = vunpack.c.l.b16 %v802
    %v1928 = vunpack.c.h.b16 %v802
    %v1929 = vunpack.c.l.b16 %v803
    %v1930 = vunpack.c.h.b16 %v803
    %v1931 = vunpack.c.l.b16 %v804
    %v1932 = vunpack.c.h.b16 %v804
    %v1933 = vunpack.c.l.b16 %v805
    %v1934 = vunpack.c.h.b16 %v805
    %v1935 = vunpack.c.l.b16 %v806
    %v1936 = vunpack.c.h.b16 %v806
    %v1937 = vunpack.c.l.b16 %v807
    %v1938 = vunpack.c.h.b16 %v807
    %v1939 = vunpack.c.l.b16 %v808
    %v1940 = vunpack.c.h.b16 %v808
    %v1941 = vunpack.c.l.b16 %v809
    %v1942 = vunpack.c.h.b16 %v809
    %v1943 = vunpack.c.l.b16 %v810
    %v1944 = vunpack.c.h.b16 %v810
    %v1945 = vunpack.c.l.b16 %v811
    %v1946 = vunpack.c.h.b16 %v811
    %v1947 = vunpack.c.l.b16 %v812
    %v1948 = vunpack.c.h.b16 %v812
    %v1949 = vunpack.c.l.b16 %v813
    %v1950 = vunpack.c.h.b16 %v813
    %v1951 = vunpack.c.l.b16 %v814
    %v1952 = vunpack.c.h.b16 %v814
    %v1953 = vunpack.c.l.b16 %v815
    %v1954 = vunpack.c.h.b16 %v815
    %v1955 = vunpack.c.l.b16 %v816
    %v1956 = vunpack.c.h.b16 %v816
    %v1957 = vunpack.c.l.b16 %v817
    %v1958 = vunpack.c.h.b16 %v817
    %v1959 = vunpack.c.l.b16 %v818
    %v1960 = vunpack.c.h.b16 %v818
    %v1961 = vunpack.c.l.b16 %v819
    %v1962 = vunpack.c.h.b16 %v819
    %v1963 = vunpack.c.l.b16 %v820
    %v1964 = vunpack.c.h.b16 %v820
    %v1965 = vunpack.c.l.b16 %v821
    %v1966 = vunpack.c.h.b16 %v821
    %v1967 = vunpack.c.l.b16 %v822
    %v1968 = vunpack.c.h.b16 %v822
    %v1969 = vunpack.c.l.b16 %v823
    %v1970 = vunpack.c.h.b16 %v823
    %v1971 = vunpack.c.l.b16 %v824
    %v1972 = vunpack.c.h.b16 %v824
    %v1973 = vunpack.c.l.b16 %v825
    %v1974 = vunpack.c.h.b16 %v825
    %v1975 = vunpack.c.l.b16 %v826
    %v1976 = vunpack.c.h.b16 %v826
    %v1977 = vunpack.c.l.b16 %v827
    %v1978 = vunpack.c.h.b16 %v827
    %v1979 = vunpack.c.l.b16 %v828
    %v1980 = vunpack.c.h.b16 %v828
    %v1981 = vunpack.c.l.b16 %v829
    %v1982 = vunpack.c.h.b16 %v829
    %v1983 = vunpack.c.l.b16 %v830
    %v1984 = vunpack.c.h.b16 %v830
    %v1985 = vunpack.c.l.b16 %v831
    %v1986 = vunpack.c.h.b16 %v831
    %v1987 = vunpack.c.l.b16 %v832
    %v1988 = vunpack.c.h.b16 %v832
    %v1989 = vunpack.c.l.b16 %v833
    %v1990 = vunpack.c.h.b16 %v833
    %v1991 = vunpack.c.l.b16 %v834
    %v1992 = vunpack.c.h.b16 %v834
    %v1993 = vunpack.c.l.b16 %v835
    %v1994 = vunpack.c.h.b16 %v835
    %v1995 = vunpack.c.l.b16 %v836
    %v1996 = vunpack.c.h.b16 %v836
    %v1997 = vunpack.c.l.b16 %v837
    %v1998 = vunpack.c.h.b16 %v837
    %v1999 = vunpack.c.l.b16 %v838
    %v2000 = vunpack.c.h.b16 %v838
    %v2001 = vunpack.c.l.b16 %v839
    %v2002 = vunpack.c.h.b16 %v839
    %v2003 = vunpack.c.l.b16 %v840
    %v2004 = vunpack.c.h.b16 %v840
    %v2005 = vunpack.c.l.b16 %v841
    %v2006 = vunpack.c.h.b16 %v841
    %v2007 = vunpack.c.l.b16 %v842
    %v2008 = vunpack.c.h.b16 %v842
    %v2009 = vunpack.c.l.b16 %v843
    %v2010 = vunpack.c.h.b16 %v843
    %v2011 = vunpack.c.l.b16 %v844
    %v2012 = vunpack.c.h.b16 %v844
    %v2013 = vunpack.c.l.b16 %v845
    %v2014 = vunpack.c.h.b16 %v845
    %v2015 = vunpack.c.l.b16 %v846
    %v2016 = vunpack.c.h.b16 %v846
    %v2017 = vunpack.c.l.b16 %v847
    %v2018 = vunpack.c.h.b16 %v847
    %v2019 = vunpack.c.l.b16 %v848
    %v2020 = vunpack.c.h.b16 %v848
    %v2021 = vunpack.c.l.b16 %v849
    %v2022 = vunpack.c.h.b16 %v849
    %v2023 = vunpack.c.l.b16 %v850
    %v2024 = vunpack.c.h.b16 %v850
    %v2025 = vunpack.c.l.b16 %v851
    %v2026 = vunpack.c.h.b16 %v851
    %v2027 = vunpack.c.l.b16 %v852
    %v2028 = vunpack.c.h.b16 %v852
    %v2029 = vunpack.c.l.b16 %v853
    %v2030 = vunpack.c.h.b16 %v853
    %v2031 = vunpack.c.l.b16 %v854
    %v2032 = vunpack.c.h.b16 %v854
    %v2033 = vunpack.c.l.b16 %v855
    %v2034 = vunpack.c.h.b16 %v855
    %v2035 = vunpack.c.l.b16 %v856
    %v2036 = vunpack.c.h.b16 %v856
    %v2037 = vunpack.c.l.b16 %v857
    %v2038 = vunpack.c.h.b16 %v857
    %v2039 = vunpack.c.l.b16 %v858
    %v2040 = vunpack.c.h.b16 %v858
    %v2041 = vunpack.c.l.b16 %v859
    %v2042 = vunpack.c.h.b16 %v859
    %v2043 = vunpack.c.l.b16 %v860
    %v2044 = vunpack.c.h.b16 %v860
    %v2045 = vunpack.c.l.b16 %v861
    %v2046 = vunpack.c.h.b16 %v861
    %v2047 = vunpack.c.l.b16 %v862
    %v2048 = vunpack.c.h.b16 %v862
    %v2049 = vunpack.c.l.b16 %v863
    %v2050 = vunpack.c.h.b16 %v863
    %v2051 = vunpack.c.l.b16 %v864
    %v2052 = vunpack.c.h.b16 %v864
    %v2053 = vunpack.c.l.b16 %v865
    %v2054 = vunpack.c.h.b16 %v865
    %v2055 = vunpack.c.l.b16 %v866
    %v2056 = vunpack.c.h.b16 %v866
    %v2057 = vunpack.c.l.b16 %v867
    %v2058 = vunpack.c.h.b16 %v867
    %v2059 = vunpack.c.l.b16 %v868
    %v2060 = vunpack.c.h.b16 %v868
    %v2061 = vunpack.c.l.b16 %v869
    %v2062 = vunpack.c.h.b16 %v869
    %v2063 = vunpack.c.l.b16 %v870
    %v2064 = vunpack.c.h.b16 %v870
    %v2065 = vunpack.c.l.b16 %v871
    %v2066 = vunpack.c.h.b16 %v871
    %v2067 = vunpack.c.l.b16 %v872
    %v2068 = vunpack.c.h.b16 %v872
    %v2069 = vunpack.c.l.b16 %v873
    %v2070 = vunpack.c.h.b16 %v873
    %v2071 = vunpack.c.l.b16 %v874
    %v2072 = vunpack.c.h.b16 %v874
    %v2073 = vunpack.c.l.b16 %v875
    %v2074 = vunpack.c.h.b16 %v875
    %v2075 = vunpack.c.l.b16 %v876
    %v2076 = vunpack.c.h.b16 %v876
    %v2077 = vunpack.c.l.b16 %v877
    %v2078 = vunpack.c.h.b16 %v877
    %v2079 = vunpack.c.l.b16 %v878
    %v2080 = vunpack.c.h.b16 %v878
    %v2081 = vunpack.c.l.b16 %v879
    %v2082 = vunpack.c.h.b16 %v879
    %v2083 = vunpack.c.l.b16 %v880
    %v2084 = vunpack.c.h.b16 %v880
    %v2085 = vunpack.c.l.b16 %v881
    %v2086 = vunpack.c.h.b16 %v881
    %v2087 = vunpack.c.l.b16 %v882
    %v2088 = vunpack.c.h.b16 %v882
    %v2089 = vunpack.c.l.b16 %v883
    %v2090 = vunpack.c.h.b16 %v883
    %v2091 = vunpack.c.l.b16 %v884
    %v2092 = vunpack.c.h.b16 %v884
    %v2093 = vunpack.c.l.b16 %v885
    %v2094 = vunpack.c.h.b16 %v885
    %v2095 = vunpack.c.l.b16 %v886
    %v2096 = vunpack.c.h.b16 %v886
    %v2097 = vunpack.c.l.b16 %v887
    %v2098 = vunpack.c.h.b16 %v887
    %v2099 = vunpack.c.l.b16 %v888
    %v2100 = vunpack.c.h.b16 %v888
    %v2101 = vunpack.c.l.b16 %v889
    %v2102 = vunpack.c.h.b16 %v889
    %v2103 = vunpack.c.l.b16 %v890
    %v2104 = vunpack.c.h.b16 %v890
    %v2105 = vunpack.c.l.b16 %v891
    %v2106 = vunpack.c.h.b16 %v891
    %v2107 = vunpack.c.l.b16 %v892
    %v2108 = vunpack.c.h.b16 %v892
    %v2109 = vunpack.c.l.b16 %v893
    %v2110 = vunpack.c.h.b16 %v893
    %v2111 = vunpack.c.l.b16 %v894
    %v2112 = vunpack.c.h.b16 %v894
    %v2113 = vunpack.c.l.b16 %v895
    %v2114 = vunpack.c.h.b16 %v895
    %v2115 = vunpack.c.l.b16 %v896
    %v2116 = vunpack.c.h.b16 %v896
    %v2117 = vunpack.c.l.b16 %v897
    %v2118 = vunpack.c.h.b16 %v897
    %v2119 = vunpack.c.l.b16 %v898
    %v2120 = vunpack.c.h.b16 %v898
    %v2121 = vunpack.c.l.b16 %v899
    %v2122 = vunpack.c.h.b16 %v899
    %v2123 = vunpack.c.l.b16 %v900
    %v2124 = vunpack.c.h.b16 %v900
    %v2125 = vunpack.c.l.b16 %v901
    %v2126 = vunpack.c.h.b16 %v901
    %v2127 = vunpack.c.l.b16 %v902
    %v2128 = vunpack.c.h.b16 %v902
    %v2129 = vunpack.c.l.b16 %v903
    %v2130 = vunpack.c.h.b16 %v903
    %v2131 = vunpack.c.l.b16 %v904
    %v2132 = vunpack.c.h.b16 %v904
    %v2133 = vunpack.c.l.b16 %v905
    %v2134 = vunpack.c.h.b16 %v905
    %v2135 = vunpack.c.l.b16 %v906
    %v2136 = vunpack.c.h.b16 %v906
    %v2137 = vunpack.c.l.b16 %v907
    %v2138 = vunpack.c.h.b16 %v907
    %v2139 = vunpack.c.l.b16 %v908
    %v2140 = vunpack.c.h.b16 %v908
    %v2141 = vunpack.c.l.b16 %v909
    %v2142 = vunpack.c.h.b16 %v909
    %v2143 = vunpack.c.l.b16 %v910
    %v2144 = vunpack.c.h.b16 %v910
    %v2145 = vunpack.c.l.b16 %v911
    %v2146 = vunpack.c.h.b16 %v911
    %v2147 = vunpack.c.l.b16 %v912
    %v2148 = vunpack.c.h.b16 %v912
    %v2149 = vunpack.c.l.b16 %v913
    %v2150 = vunpack.c.h.b16 %v913
    %v2151 = vunpack.c.l.b16 %v914
    %v2152 = vunpack.c.h.b16 %v914
    %v2153 = vunpack.c.l.b16 %v915
    %v2154 = vunpack.c.h.b16 %v915
    %v2155 = vunpack.c.l.b16 %v916
    %v2156 = vunpack.c.h.b16 %v916
    %v2157 = vunpack.c.l.b16 %v917
    %v2158 = vunpack.c.h.b16 %v917
    %v2159 = vunpack.c.l.b16 %v918
    %v2160 = vunpack.c.h.b16 %v918
    %v2161 = vunpack.c.l.b16 %v919
    %v2162 = vunpack.c.h.b16 %v919
    %v2163 = vunpack.c.l.b16 %v920
    %v2164 = vunpack.c.h.b16 %v920
    %v2165 = vunpack.c.l.b16 %v921
    %v2166 = vunpack.c.h.b16 %v921
    %v2167 = vunpack.c.l.b16 %v922
    %v2168 = vunpack.c.h.b16 %v922
    %v2169 = vunpack.c.l.b16 %v923
    %v2170 = vunpack.c.h.b16 %v923
    %v2171 = vunpack.c.l.b16 %v924
    %v2172 = vunpack.c.h.b16 %v924
    %v2173 = vunpack.c.l.b16 %v925
    %v2174 = vunpack.c.h.b16 %v925
    %v2175 = vunpack.c.l.b16 %v926
    %v2176 = vunpack.c.h.b16 %v926
    %v2177 = vunpack.c.l.b16 %v927
    %v2178 = vunpack.c.h.b16 %v927
    %v2179 = vunpack.c.l.b16 %v928
    %v2180 = vunpack.c.h.b16 %v928
    %v2181 = vunpack.c.l.b16 %v929
    %v2182 = vunpack.c.h.b16 %v929
    %v2183 = vunpack.c.l.b16 %v930
    %v2184 = vunpack.c.h.b16 %v930
    %v2185 = vunpack.c.l.b16 %v931
    %v2186 = vunpack.c.h.b16 %v931
    %v2187 = vunpack.c.l.b16 %v932
    %v2188 = vunpack.c.h.b16 %v932
    %v2189 = vunpack.c.l.b16 %v933
    %v2190 = vunpack.c.h.b16 %v933
    %v2191 = vunpack.c.l.b16 %v934
    %v2192 = vunpack.c.h.b16 %v934
    %v2193 = vunpack.c.l.b16 %v935
    %v2194 = vunpack.c.h.b16 %v935
    %v2195 = vunpack.c.l.b16 %v936
    %v2196 = vunpack.c.h.b16 %v936
    %v2197 = vunpack.c.l.b16 %v937
    %v2198 = vunpack.c.h.b16 %v937
    %v2199 = vunpack.c.l.b16 %v938
    %v2200 = vunpack.c.h.b16 %v938
    %v2201 = vunpack.c.l.b16 %v939
    %v2202 = vunpack.c.h.b16 %v939
    %v2203 = vunpack.c.l.b16 %v940
    %v2204 = vunpack.c.h.b16 %v940
    %v2205 = vunpack.c.l.b16 %v941
    %v2206 = vunpack.c.h.b16 %v941
    %v2207 = vunpack.c.l.b16 %v942
    %v2208 = vunpack.c.h.b16 %v942
    %v2209 = vunpack.c.l.b16 %v943
    %v2210 = vunpack.c.h.b16 %v943
    %v2211 = vunpack.c.l.b16 %v944
    %v2212 = vunpack.c.h.b16 %v944
    %v2213 = vunpack.c.l.b16 %v945
    %v2214 = vunpack.c.h.b16 %v945
    %v2215 = vunpack.c.l.b16 %v946
    %v2216 = vunpack.c.h.b16 %v946
    %v2217 = vunpack.c.l.b16 %v947
    %v2218 = vunpack.c.h.b16 %v947
    %v2219 = vunpack.c.l.b16 %v948
    %v2220 = vunpack.c.h.b16 %v948
    %v2221 = vunpack.c.l.b16 %v949
    %v2222 = vunpack.c.h.b16 %v949
    %v2223 = vunpack.c.l.b16 %v950
    %v2224 = vunpack.c.h.b16 %v950
    %v2225 = vunpack.c.l.b16 %v951
    %v2226 = vunpack.c.h.b16 %v951
    %v2227 = vunpack.c.l.b16 %v952
    %v2228 = vunpack.c.h.b16 %v952
    %v2229 = vunpack.c.l.b16 %v953
    %v2230 = vunpack.c.h.b16 %v953
    %v2231 = vunpack.c.l.b16 %v954
    %v2232 = vunpack.c.h.b16 %v954
    %v2233 = vunpack.c.l.b16 %v955
    %v2234 = vunpack.c.h.b16 %v955
    %v2235 = vunpack.c.l.b16 %v956
    %v2236 = vunpack.c.h.b16 %v956
    %v2237 = vunpack.c.l.b16 %v957
    %v2238 = vunpack.c.h.b16 %v957
    %v2239 = vunpack.c.l.b16 %v958
    %v2240 = vunpack.c.h.b16 %v958
    %v2241 = vunpack.c.l.b16 %v959
    %v2242 = vunpack.c.h.b16 %v959
    %v2243 = vunpack.c.l.b16 %v960
    %v2244 = vunpack.c.h.b16 %v960
    %v2245 = vunpack.c.l.b16 %v961
    %v2246 = vunpack.c.h.b16 %v961
    %v2247 = vunpack.c.l.b16 %v962
    %v2248 = vunpack.c.h.b16 %v962
    %v2249 = vunpack.c.l.b16 %v963
    %v2250 = vunpack.c.h.b16 %v963
    %v2251 = vunpack.c.l.b16 %v964
    %v2252 = vunpack.c.h.b16 %v964
    %v2253 = vunpack.c.l.b16 %v965
    %v2254 = vunpack.c.h.b16 %v965
    %v2255 = vunpack.c.l.b16 %v966
    %v2256 = vunpack.c.h.b16 %v966
    %v2257 = vunpack.c.l.b16 %v967
    %v2258 = vunpack.c.h.b16 %v967
    %v2259 = vunpack.c.l.b16 %v968
    %v2260 = vunpack.c.h.b16 %v968
    %v2261 = vunpack.c.l.b16 %v969
    %v2262 = vunpack.c.h.b16 %v969
    %v2263 = vunpack.c.l.b16 %v970
    %v2264 = vunpack.c.h.b16 %v970
    %v2265 = vunpack.c.l.b16 %v971
    %v2266 = vunpack.c.h.b16 %v971
    %v2267 = vunpack.c.l.b16 %v972
    %v2268 = vunpack.c.h.b16 %v972
    %v2269 = vunpack.c.l.b16 %v973
    %v2270 = vunpack.c.h.b16 %v973
    %v2271 = vunpack.c.l.b16 %v974
    %v2272 = vunpack.c.h.b16 %v974
    %v2273 = vunpack.c.l.b16 %v975
    %v2274 = vunpack.c.h.b16 %v975
    %v2275 = vunpack.c.l.b16 %v976
    %v2276 = vunpack.c.h.b16 %v976
    %v2277 = vunpack.c.l.b16 %v977
    %v2278 = vunpack.c.h.b16 %v977
    %v2279 = vunpack.c.l.b16 %v978
    %v2280 = vunpack.c.h.b16 %v978
    %v2281 = vunpack.c.l.b16 %v979
    %v2282 = vunpack.c.h.b16 %v979
    %v2283 = vunpack.c.l.b16 %v980
    %v2284 = vunpack.c.h.b16 %v980
    %v2285 = vunpack.c.l.b16 %v981
    %v2286 = vunpack.c.h.b16 %v981
    %v2287 = vunpack.c.l.b16 %v982
    %v2288 = vunpack.c.h.b16 %v982
    %v2289 = vunpack.c.l.b16 %v983
    %v2290 = vunpack.c.h.b16 %v983
    %v2291 = vunpack.c.l.b16 %v984
    %v2292 = vunpack.c.h.b16 %v984
    %v2293 = vunpack.c.l.b16 %v985
    %v2294 = vunpack.c.h.b16 %v985
    %v2295 = vunpack.c.l.b16 %v986
    %v2296 = vunpack.c.h.b16 %v986
    %v2297 = vunpack.c.l.b16 %v987
    %v2298 = vunpack.c.h.b16 %v987
    %v2299 = vunpack.c.l.b16 %v988
    %v2300 = vunpack.c.h.b16 %v988
    %v2301 = vunpack.c.l.b16 %v989
    %v2302 = vunpack.c.h.b16 %v989
    %v2303 = vunpack.c.l.b16 %v990
    %v2304 = vunpack.c.h.b16 %v990
    %v2305 = vunpack.c.l.b16 %v991
    %v2306 = vunpack.c.h.b16 %v991
    %v2307 = vunpack.c.l.b16 %v992
    %v2308 = vunpack.c.h.b16 %v992
    %v2309 = vunpack.c.l.b16 %v993
    %v2310 = vunpack.c.h.b16 %v993
    %v2311 = vunpack.c.l.b16 %v994
    %v2312 = vunpack.c.h.b16 %v994
    %v2313 = vunpack.c.l.b16 %v995
    %v2314 = vunpack.c.h.b16 %v995
    %v2315 = vunpack.c.l.b16 %v996
    %v2316 = vunpack.c.h.b16 %v996
    %v2317 = vunpack.c.l.b16 %v997
    %v2318 = vunpack.c.h.b16 %v997
    %v2319 = vunpack.c.l.b16 %v998
    %v2320 = vunpack.c.h.b16 %v998
    %v2321 = vunpack.c.l.b16 %v999
    %v2322 = vunpack.c.h.b16 %v999
    %v2323 = vunpack.c.l.b16 %v1000
    %v2324 = vunpack.c.h.b16 %v1000
    %v2325 = vunpack.c.l.b16 %v1001
    %v2326 = vunpack.c.h.b16 %v1001
    %v2327 = vunpack.c.l.b16 %v1002
    %v2328 = vunpack.c.h.b16 %v1002
    %v2329 = vunpack.c.l.b16 %v1003
    %v2330 = vunpack.c.h.b16 %v1003
    %v2331 = vunpack.c.l.b16 %v1004
    %v2332 = vunpack.c.h.b16 %v1004
    %v2333 = vunpack.c.l.b16 %v1005
    %v2334 = vunpack.c.h.b16 %v1005
    %v2335 = vunpack.c.l.b16 %v1006
    %v2336 = vunpack.c.h.b16 %v1006
    %v2337 = vunpack.c.l.b16 %v1007
    %v2338 = vunpack.c.h.b16 %v1007
    %v2339 = vunpack.c.l.b16 %v1008
    %v2340 = vunpack.c.h.b16 %v1008
    %v2341 = vunpack.c.l.b16 %v1009
    %v2342 = vunpack.c.h.b16 %v1009
    %v2343 = vunpack.c.l.b16 %v1010
    %v2344 = vunpack.c.h.b16 %v1010
    %v2345 = vunpack.c.l.b16 %v1011
    %v2346 = vunpack.c.h.b16 %v1011
    %v2347 = vunpack.c.l.b16 %v1012
    %v2348 = vunpack.c.h.b16 %v1012
    %v2349 = vunpack.c.l.b16 %v1013
    %v2350 = vunpack.c.h.b16 %v1013
    %v2351 = vunpack.c.l.b16 %v1014
    %v2352 = vunpack.c.h.b16 %v1014
    %v2353 = vunpack.c.l.b16 %v1015
    %v2354 = vunpack.c.h.b16 %v1015
    %v2355 = vunpack.c.l.b16 %v1016
    %v2356 = vunpack.c.h.b16 %v1016
    %v2357 = vunpack.c.l.b16 %v1017
    %v2358 = vunpack.c.h.b16 %v1017
    %v2359 = vunpack.c.l.b16 %v1018
    %v2360 = vunpack.c.h.b16 %v1018
    %v2361 = vunpack.c.l.b16 %v1019
    %v2362 = vunpack.c.h.b16 %v1019
    %v2363 = vunpack.c.l.b16 %v1020
    %v2364 = vunpack.c.h.b16 %v1020
    %v2365 = vunpack.c.l.b16 %v1021
    %v2366 = vunpack.c.h.b16 %v1021
    %v2367 = vunpack.c.l.b16 %v1022
    %v2368 = vunpack.c.h.b16 %v1022
    %v2369 = vunpack.c.l.b16 %v1023
    %v2370 = vunpack.c.h.b16 %v1023
    %v2371 = vunpack.c.l.b16 %v1024
    %v2372 = vunpack.c.h.b16 %v1024
    %v2373 = vunpack.c.l.b16 %v1025
    %v2374 = vunpack.c.h.b16 %v1025
    %v2375 = vunpack.c.l.b16 %v1026
    %v2376 = vunpack.c.h.b16 %v1026
    %v2377 = vunpack.c.l.b16 %v1027
    %v2378 = vunpack.c.h.b16 %v1027
    %v2379 = vunpack.c.l.b16 %v1028
    %v2380 = vunpack.c.h.b16 %v1028
    %v2381 = vunpack.c.l.b16 %v1029
    %v2382 = vunpack.c.h.b16 %v1029
    %v2383 = vunpack.c.l.b16 %v1030
    %v2384 = vunpack.c.h.b16 %v1030
    %v2385 = vunpack.c.l.b16 %v1031
    %v2386 = vunpack.c.h.b16 %v1031
    %v2387 = vunpack.c.l.b16 %v1032
    %v2388 = vunpack.c.h.b16 %v1032
    %v2389 = vunpack.c.l.b16 %v1033
    %v2390 = vunpack.c.h.b16 %v1033
    %v2391 = vunpack.c.l.b16 %v1034
    %v2392 = vunpack.c.h.b16 %v1034
    %v2393 = vunpack.c.l.b16 %v1035
    %v2394 = vunpack.c.h.b16 %v1035
    %v2395 = vunpack.c.l.b16 %v1036
    %v2396 = vunpack.c.h.b16 %v1036
    %v2397 = vunpack.c.l.b16 %v1037
    %v2398 = vunpack.c.h.b16 %v1037
    %v2399 = vunpack.c.l.b16 %v1038
    %v2400 = vunpack.c.h.b16 %v1038
    %v2401 = vunpack.c.l.b16 %v1039
    %v2402 = vunpack.c.h.b16 %v1039
    %v2403 = vunpack.c.l.b16 %v1040
    %v2404 = vunpack.c.h.b16 %v1040
    %v2405 = vunpack.c.l.b16 %v1041
    %v2406 = vunpack.c.h.b16 %v1041
    %v2407 = vunpack.c.l.b16 %v1042
    %v2408 = vunpack.c.h.b16 %v1042
    %v2409 = vunpack.c.l.b16 %v1043
    %v2410 = vunpack.c.h.b16 %v1043
    %v2411 = vunpack.c.l.b16 %v1044
    %v2412 = vunpack.c.h.b16 %v1044
    %v2413 = vunpack.c.l.b16 %v1045
    %v2414 = vunpack.c.h.b16 %v1045
    %v2415 = vunpack.c.l.b16 %v1046
    %v2416 = vunpack.c.h.b16 %v1046
    %v2417 = vunpack.c.l.b16 %v1047
    %v2418 = vunpack.c.h.b16 %v1047
    %v2419 = vunpack.c.l.b16 %v1048
    %v2420 = vunpack.c.h.b16 %v1048
    %v2421 = vunpack.c.l.b16 %v1049
    %v2422 = vunpack.c.h.b16 %v1049
    %v2423 = vunpack.c.l.b16 %v1050
    %v2424 = vunpack.c.h.b16 %v1050
    %v2425 = vunpack.c.l.b16 %v1051
    %v2426 = vunpack.c.h.b16 %v1051
    %v2427 = vunpack.c.l.b16 %v1052
    %v2428 = vunpack.c.h.b16 %v1052
    %v2429 = vunpack.c.l.b16 %v1053
    %v2430 = vunpack.c.h.b16 %v1053
    %v2431 = vunpack.c.l.b16 %v1054
    %v2432 = vunpack.c.h.b16 %v1054
    %v2433 = vunpack.c.l.b16 %v1055
    %v2434 = vunpack.c.h.b16 %v1055
    %v2435 = vunpack.c.l.b16 %v1056
    %v2436 = vunpack.c.h.b16 %v1056
    %v2437 = vunpack.c.l.b16 %v1057
    %v2438 = vunpack.c.h.b16 %v1057
    %v2439 = vunpack.c.l.b16 %v1058
    %v2440 = vunpack.c.h.b16 %v1058
    %v2441 = vunpack.c.l.b16 %v1059
    %v2442 = vunpack.c.h.b16 %v1059
    %v2443 = vunpack.c.l.b16 %v1060
    %v2444 = vunpack.c.h.b16 %v1060
    %v2445 = vunpack.c.l.b16 %v1061
    %v2446 = vunpack.c.h.b16 %v1061
    %v2447 = vunpack.c.l.b16 %v1062
    %v2448 = vunpack.c.h.b16 %v1062
    %v2449 = vunpack.c.l.b16 %v1063
    %v2450 = vunpack.c.h.b16 %v1063
    %v2451 = vunpack.c.l.b16 %v1064
    %v2452 = vunpack.c.h.b16 %v1064
    %v2453 = vunpack.c.l.b16 %v1065
    %v2454 = vunpack.c.h.b16 %v1065
    %v2455 = vunpack.c.l.b16 %v1066
    %v2456 = vunpack.c.h.b16 %v1066
    %v2457 = vunpack.c.l.b16 %v1067
    %v2458 = vunpack.c.h.b16 %v1067
    %v2459 = vunpack.c.l.b16 %v1068
    %v2460 = vunpack.c.h.b16 %v1068
    %v2461 = vunpack.c.l.b16 %v1069
    %v2462 = vunpack.c.h.b16 %v1069
    %v2463 = vunpack.c.l.b16 %v1070
    %v2464 = vunpack.c.h.b16 %v1070
    %v2465 = vunpack.c.l.b16 %v1071
    %v2466 = vunpack.c.h.b16 %v1071
    %v2467 = vunpack.c.l.b16 %v1072
    %v2468 = vunpack.c.h.b16 %v1072
    %v2469 = vunpack.c.l.b16 %v1073
    %v2470 = vunpack.c.h.b16 %v1073
    %v2471 = vunpack.c.l.b16 %v1074
    %v2472 = vunpack.c.h.b16 %v1074
    %v2473 = vunpack.c.l.b16 %v1075
    %v2474 = vunpack.c.h.b16 %v1075
    %v2475 = vunpack.c.l.b16 %v1076
    %v2476 = vunpack.c.h.b16 %v1076
    %v2477 = vunpack.c.l.b16 %v1077
    %v2478 = vunpack.c.h.b16 %v1077
    %v2479 = vunpack.c.l.b16 %v1078
    %v2480 = vunpack.c.h.b16 %v1078
    %v2481 = vunpack.c.l.b16 %v1079
    %v2482 = vunpack.c.h.b16 %v1079
    %v2483 = vunpack.c.l.b16 %v1080
    %v2484 = vunpack.c.h.b16 %v1080
    %v2485 = vunpack.c.l.b16 %v1081
    %v2486 = vunpack.c.h.b16 %v1081
    %v2487 = vunpack.c.l.b16 %v1082
    %v2488 = vunpack.c.h.b16 %v1082
    %v2489 = vunpack.c.l.b16 %v1083
    %v2490 = vunpack.c.h.b16 %v1083
    %v2491 = vunpack.c.l.b16 %v1084
    %v2492 = vunpack.c.h.b16 %v1084
    %v2493 = vunpack.c.l.b16 %v1085
    %v2494 = vunpack.c.h.b16 %v1085
    %v2495 = vunpack.c.l.b16 %v1086
    %v2496 = vunpack.c.h.b16 %v1086
    %v2497 = vunpack.c.l.b16 %v1087
    %v2498 = vunpack.c.h.b16 %v1087
    %v2499 = vunpack.c.l.b16 %v1088
    %v2500 = vunpack.c.h.b16 %v1088
    %v2501 = vunpack.c.l.b16 %v1089
    %v2502 = vunpack.c.h.b16 %v1089
    %v2503 = vunpack.c.l.b16 %v1090
    %v2504 = vunpack.c.h.b16 %v1090
    %v2505 = vunpack.c.l.b16 %v1091
    %v2506 = vunpack.c.h.b16 %v1091
    %v2507 = vunpack.c.l.b16 %v1092
    %v2508 = vunpack.c.h.b16 %v1092
    %v2509 = vunpack.c.l.b16 %v1093
    %v2510 = vunpack.c.h.b16 %v1093
    %v2511 = vunpack.c.l.b16 %v1094
    %v2512 = vunpack.c.h.b16 %v1094
    %v2513 = vunpack.c.l.b16 %v1095
    %v2514 = vunpack.c.h.b16 %v1095
    %v2515 = vunpack.c.l.b16 %v1096
    %v2516 = vunpack.c.h.b16 %v1096
    %v2517 = vunpack.c.l.b16 %v1097
    %v2518 = vunpack.c.h.b16 %v1097
    %v2519 = vunpack.c.l.b16 %v1098
    %v2520 = vunpack.c.h.b16 %v1098
    %v2521 = vunpack.c.l.b16 %v1099
    %v2522 = vunpack.c.h.b16 %v1099
    %v2523 = vunpack.c.l.b16 %v1100
    %v2524 = vunpack.c.h.b16 %v1100
    %v2525 = vunpack.c.l.b16 %v1101
    %v2526 = vunpack.c.h.b16 %v1101
    %v2527 = vunpack.c.l.b16 %v1102
    %v2528 = vunpack.c.h.b16 %v1102
    %v2529 = vunpack.c.l.b16 %v1103
    %v2530 = vunpack.c.h.b16 %v1103
    %v2531 = vunpack.c.l.b16 %v1104
    %v2532 = vunpack.c.h.b16 %v1104
    %v2533 = vunpack.c.l.b16 %v1105
    %v2534 = vunpack.c.h.b16 %v1105
    %v2535 = vunpack.c.l.b16 %v1106
    %v2536 = vunpack.c.h.b16 %v1106
    %v2537 = vunpack.c.l.b16 %v1107
    %v2538 = vunpack.c.h.b16 %v1107
    %v2539 = vunpack.c.l.b16 %v1108
    %v2540 = vunpack.c.h.b16 %v1108
    %v2541 = vunpack.c.l.b16 %v1109
    %v2542 = vunpack.c.h.b16 %v1109
    %v2543 = vunpack.c.l.b16 %v1110
    %v2544 = vunpack.c.h.b16 %v1110
    %v2545 = vunpack.c.l.b16 %v1111
    %v2546 = vunpack.c.h.b16 %v1111
    %v2547 = vunpack.c.l.b16 %v1112
    %v2548 = vunpack.c.h.b16 %v1112
    %v2549 = vunpack.c.l.b16 %v1113
    %v2550 = vunpack.c.h.b16 %v1113
    %v2551 = vunpack.c.l.b16 %v1114
    %v2552 = vunpack.c.h.b16 %v1114
    %v2553 = vunpack.c.l.b16 %v1115
    %v2554 = vunpack.c.h.b16 %v1115
    %v2555 = vunpack.c.l.b16 %v1116
    %v2556 = vunpack.c.h.b16 %v1116
    %v2557 = vunpack.c.l.b16 %v1117
    %v2558 = vunpack.c.h.b16 %v1117
    %v2559 = vunpack.c.l.b16 %v1118
    %v2560 = vunpack.c.h.b16 %v1118
    %v2561 = vunpack.c.l.b16 %v1119
    %v2562 = vunpack.c.h.b16 %v1119
    %v2563 = vunpack.c.l.b16 %v1120
    %v2564 = vunpack.c.h.b16 %v1120
    %v2565 = vunpack.c.l.b16 %v1121
    %v2566 = vunpack.c.h.b16 %v1121
    %v2567 = vunpack.c.l.b16 %v1122
    %v2568 = vunpack.c.h.b16 %v1122
    %v2569 = vunpack.c.l.b16 %v1123
    %v2570 = vunpack.c.h.b16 %v1123
    %v2571 = vunpack.c.l.b16 %v1124
    %v2572 = vunpack.c.h.b16 %v1124
    %v2573 = vunpack.c.l.b16 %v1125
    %v2574 = vunpack.c.h.b16 %v1125
    %v2575 = vunpack.c.l.b16 %v1126
    %v2576 = vunpack.c.h.b16 %v1126
    %v2577 = vunpack.c.l.b16 %v1127
    %v2578 = vunpack.c.h.b16 %v1127
    %v2579 = vunpack.c.l.b16 %v1128
    %v2580 = vunpack.c.h.b16 %v1128
    %v2581 = vunpack.c.l.b16 %v1129
    %v2582 = vunpack.c.h.b16 %v1129
    %v2583 = vunpack.c.l.b16 %v1130
    %v2584 = vunpack.c.h.b16 %v1130
    %v2585 = vunpack.c.l.b16 %v1131
    %v2586 = vunpack.c.h.b16 %v1131
    %v2587 = vunpack.c.l.b16 %v1132
    %v2588 = vunpack.c.h.b16 %v1132
    %v2589 = vunpack.c.l.b16 %v1133
    %v2590 = vunpack.c.h.b16 %v1133
    %v2591 = vunpack.c.l.b16 %v1134
    %v2592 = vunpack.c.h.b16 %v1134
    %v2593 = vunpack.c.l.b16 %v1135
    %v2594 = vunpack.c.h.b16 %v1135
    %v2595 = vunpack.c.l.b16 %v1136
    %v2596 = vunpack.c.h.b16 %v1136
    %v2597 = vunpack.c.l.b16 %v1137
    %v2598 = vunpack.c.h.b16 %v1137
    %v2599 = vunpack.c.l.b16 %v1138
    %v2600 = vunpack.c.h.b16 %v1138
    %v2601 = vunpack.c.l.b16 %v1139
    %v2602 = vunpack.c.h.b16 %v1139
    %v2603 = vunpack.c.l.b16 %v1140
    %v2604 = vunpack.c.h.b16 %v1140
    %v2605 = vunpack.c.l.b16 %v1141
    %v2606 = vunpack.c.h.b16 %v1141
    %v2607 = vunpack.c.l.b16 %v1142
    %v2608 = vunpack.c.h.b16 %v1142
    %v2609 = vunpack.c.l.b16 %v1143
    %v2610 = vunpack.c.h.b16 %v1143
    %v2611 = vunpack.c.l.b16 %v1144
    %v2612 = vunpack.c.h.b16 %v1144
    %v2613 = vunpack.c.l.b16 %v1145
    %v2614 = vunpack.c.h.b16 %v1145
    %v2615 = vunpack.c.l.b16 %v1146
    %v2616 = vunpack.c.h.b16 %v1146
    %v2617 = vunpack.c.l.b16 %v1147
    %v2618 = vunpack.c.h.b16 %v1147
    %v2619 = vunpack.c.l.b16 %v1148
    %v2620 = vunpack.c.h.b16 %v1148
    %v2621 = vunpack.c.l.b16 %v1149
    %v2622 = vunpack.c.h.b16 %v1149
    %v2623 = vunpack.c.l.b16 %v1150
    %v2624 = vunpack.c.h.b16 %v1150
    %v2625 = vunpack.c.l.b16 %v1151
    %v2626 = vunpack.c.h.b16 %v1151
    %v2627 = vunpack.c.l.b16 %v1152
    %v2628 = vunpack.c.h.b16 %v1152
    %v2629 = vunpack.c.l.b16 %v1153
    %v2630 = vunpack.c.h.b16 %v1153
    %v2631 = vunpack.c.l.b16 %v1154
    %v2632 = vunpack.c.h.b16 %v1154
    %v2633 = vunpack.c.l.b16 %v1155
    %v2634 = vunpack.c.h.b16 %v1155
    %v2635 = vunpack.c.l.b16 %v1156
    %v2636 = vunpack.c.h.b16 %v1156
    %v2637 = vunpack.c.l.b16 %v1157
    %v2638 = vunpack.c.h.b16 %v1157
    %v2639 = vunpack.c.l.b16 %v1158
    %v2640 = vunpack.c.h.b16 %v1158
    %v2641 = vunpack.c.l.b16 %v1159
    %v2642 = vunpack.c.h.b16 %v1159
    %v2643 = vunpack.c.l.b16 %v1160
    %v2644 = vunpack.c.h.b16 %v1160
    %v2645 = vunpack.c.l.b16 %v1161
    %v2646 = vunpack.c.h.b16 %v1161
    %v2647 = vunpack.c.l.b16 %v1162
    %v2648 = vunpack.c.h.b16 %v1162
    %v2649 = vunpack.c.l.b16 %v1163
    %v2650 = vunpack.c.h.b16 %v1163
    %v2651 = vunpack.c.l.b16 %v1164
    %v2652 = vunpack.c.h.b16 %v1164
    %v2653 = vunpack.c.l.b16 %v1165
    %v2654 = vunpack.c.h.b16 %v1165
    %v2655 = vunpack.c.l.b16 %v1166
    %v2656 = vunpack.c.h.b16 %v1166
    %v2657 = vunpack.c.l.b16 %v1167
    %v2658 = vunpack.c.h.b16 %v1167
    %v2659 = vunpack.c.l.b16 %v1168
    %v2660 = vunpack.c.h.b16 %v1168
    %v2661 = vunpack.c.l.b16 %v1169
    %v2662 = vunpack.c.h.b16 %v1169
    %v2663 = vunpack.c.l.b16 %v1170
    %v2664 = vunpack.c.h.b16 %v1170
    %v2665 = vunpack.c.l.b16 %v1171
    %v2666 = vunpack.c.h.b16 %v1171
    %v2667 = vunpack.c.l.b16 %v1172
    %v2668 = vunpack.c.h.b16 %v1172
    %v2669 = vunpack.c.l.b16 %v1173
    %v2670 = vunpack.c.h.b16 %v1173
    %v2671 = vunpack.c.l.b16 %v1174
    %v2672 = vunpack.c.h.b16 %v1174
    %v2673 = vunpack.c.l.b16 %v1175
    %v2674 = vunpack.c.h.b16 %v1175
    %v2675 = vunpack.c.l.b16 %v1176
    %v2676 = vunpack.c.h.b16 %v1176
    %v2677 = vunpack.c.l.b16 %v1177
    %v2678 = vunpack.c.h.b16 %v1177
    %v2679 = vunpack.c.l.b16 %v1178
    %v2680 = vunpack.c.h.b16 %v1178
    %v2681 = vunpack.c.l.b16 %v1179
    %v2682 = vunpack.c.h.b16 %v1179
    %v2683 = vunpack.c.l.b16 %v1180
    %v2684 = vunpack.c.h.b16 %v1180
    %v2685 = vunpack.c.l.b16 %v1181
    %v2686 = vunpack.c.h.b16 %v1181
    %v2687 = vunpack.c.l.b16 %v1182
    %v2688 = vunpack.c.h.b16 %v1182
    %v2689 = vunpack.c.l.b16 %v1183
    %v2690 = vunpack.c.h.b16 %v1183
    %v2691 = vunpack.c.l.b16 %v1184
    %v2692 = vunpack.c.h.b16 %v1184
    %v2693 = vunpack.c.l.b16 %v1185
    %v2694 = vunpack.c.h.b16 %v1185
    %v2695 = vunpack.c.l.b16 %v1186
    %v2696 = vunpack.c.h.b16 %v1186
    %v2697 = vunpack.c.l.b16 %v1187
    %v2698 = vunpack.c.h.b16 %v1187
    %v2699 = vunpack.c.l.b16 %v1188
    %v2700 = vunpack.c.h.b16 %v1188
    %v2701 = vunpack.c.l.b16 %v1189
    %v2702 = vunpack.c.h.b16 %v1189
    %v2703 = vunpack.c.l.b16 %v1190
    %v2704 = vunpack.c.h.b16 %v1190
    %v2705 = vunpack.c.l.b16 %v1191
    %v2706 = vunpack.c.h.b16 %v1191
    %v2707 = vunpack.c.l.b16 %v1192
    %v2708 = vunpack.c.h.b16 %v1192
    %v2709 = vunpack.c.l.b16 %v1193
    %v2710 = vunpack.c.h.b16 %v1193
    %v2711 = vunpack.c.l.b16 %v1194
    %v2712 = vunpack.c.h.b16 %v1194
    %v2713 = vunpack.c.l.b16 %v1195
    %v2714 = vunpack.c.h.b16 %v1195
    %v2715 = vunpack.c.l.b16 %v1196
    %v2716 = vunpack.c.h.b16 %v1196
    %v2717 = vunpack.c.l.b16 %v1197
    %v2718 = vunpack.c.h.b16 %v1197
    %v2719 = vunpack.c.l.b16 %v1198
    %v2720 = vunpack.c.h.b16 %v1198
    %v2721 = vunpack.c.l.b16 %v1199
    %v2722 = vunpack.c.h.b16 %v1199
    %v2723 = vunpack.c.l.b16 %v1200
    %v2724 = vunpack.c.h.b16 %v1200
    %v2725 = vunpack.c.l.b16 %v1201
    %v2726 = vunpack.c.h.b16 %v1201
    %v2727 = vunpack.c.l.b16 %v1202
    %v2728 = vunpack.c.h.b16 %v1202
    %v2729 = vunpack.c.l.b16 %v1203
    %v2730 = vunpack.c.h.b16 %v1203
    %v2731 = vunpack.c.l.b16 %v1204
    %v2732 = vunpack.c.h.b16 %v1204
    %v2733 = vunpack.c.l.b16 %v1205
    %v2734 = vunpack.c.h.b16 %v1205
    %v2735 = vunpack.c.l.b16 %v1206
    %v2736 = vunpack.c.h.b16 %v1206
    %v2737 = vunpack.c.l.b16 %v1207
    %v2738 = vunpack.c.h.b16 %v1207
    %v2739 = vunpack.c.l.b16 %v1208
    %v2740 = vunpack.c.h.b16 %v1208
    %v2741 = vunpack.c.l.b16 %v1209
    %v2742 = vunpack.c.h.b16 %v1209
    %v2743 = vunpack.c.l.b16 %v1210
    %v2744 = vunpack.c.h.b16 %v1210
    %v2745 = vunpack.c.l.b16 %v1211
    %v2746 = vunpack.c.h.b16 %v1211
    %v2747 = vunpack.c.l.b16 %v1212
    %v2748 = vunpack.c.h.b16 %v1212
    %v2749 = vunpack.c.l.b16 %v1213
    %v2750 = vunpack.c.h.b16 %v1213
    %v2751 = vunpack.c.l.b16 %v1214
    %v2752 = vunpack.c.h.b16 %v1214
    %v2753 = vunpack.c.l.b16 %v1215
    %v2754 = vunpack.c.h.b16 %v1215
    %v2755 = vunpack.c.l.b16 %v1216
    %v2756 = vunpack.c.h.b16 %v1216
    %v2757 = vunpack.c.l.b16 %v1217
    %v2758 = vunpack.c.h.b16 %v1217
    %v2759 = vunpack.c.l.b16 %v1218
    %v2760 = vunpack.c.h.b16 %v1218
    %v2761 = vunpack.c.l.b16 %v1219
    %v2762 = vunpack.c.h.b16 %v1219
    %v2763 = vunpack.c.l.b16 %v1220
    %v2764 = vunpack.c.h.b16 %v1220
    %v2765 = vunpack.c.l.b16 %v1221
    %v2766 = vunpack.c.h.b16 %v1221
    %v2767 = vunpack.c.l.b16 %v1222
    %v2768 = vunpack.c.h.b16 %v1222
    %v2769 = vunpack.c.l.b16 %v1223
    %v2770 = vunpack.c.h.b16 %v1223
    %v2771 = vunpack.c.l.b16 %v1224
    %v2772 = vunpack.c.h.b16 %v1224
    %v2773 = vunpack.c.l.b16 %v1225
    %v2774 = vunpack.c.h.b16 %v1225
    %v2775 = vunpack.c.l.b16 %v1226
    %v2776 = vunpack.c.h.b16 %v1226
    %v2777 = vunpack.c.l.b16 %v1227
    %v2778 = vunpack.c.h.b16 %v1227
    %v2779 = vunpack.c.l.b16 %v1228
    %v2780 = vunpack.c.h.b16 %v1228
    %v2781 = vunpack.c.l.b16 %v1229
    %v2782 = vunpack.c.h.b16 %v1229
    %v2783 = vunpack.c.l.b16 %v1230
    %v2784 = vunpack.c.h.b16 %v1230
    %v2785 = vunpack.c.l.b16 %v1231
    %v2786 = vunpack.c.h.b16 %v1231
    %v2787 = vunpack.c.l.b16 %v1232
    %v2788 = vunpack.c.h.b16 %v1232
    %v2789 = vunpack.c.l.b16 %v1233
    %v2790 = vunpack.c.h.b16 %v1233
    %v2791 = vunpack.c.l.b16 %v1234
    %v2792 = vunpack.c.h.b16 %v1234
    %v2793 = vpack.c.b16 %v1773, %v1769
    %v2794 = vpack.c.b16 %v1774, %v1770
    %v2795 = vpack.c.b16 %v1775, %v1771
    %v2796 = vpack.c.b16 %v1776, %v1772
    %v2797 = vpack.c.b16 %v1781, %v1777
    %v2798 = vpack.c.b16 %v1782, %v1778
    %v2799 = vpack.c.b16 %v1783, %v1779
    %v2800 = vpack.c.b16 %v1784, %v1780
    %v2801 = vpack.c.b16 %v1789, %v1785
    %v2802 = vpack.c.b16 %v1790, %v1786
    %v2803 = vpack.c.b16 %v1791, %v1787
    %v2804 = vpack.c.b16 %v1792, %v1788
    %v2805 = vpack.c.b16 %v1797, %v1793
    %v2806 = vpack.c.b16 %v1798, %v1794
    %v2807 = vpack.c.b16 %v1799, %v1795
    %v2808 = vpack.c.b16 %v1800, %v1796
    %v2809 = vpack.c.b16 %v1805, %v1801
    %v2810 = vpack.c.b16 %v1806, %v1802
    %v2811 = vpack.c.b16 %v1807, %v1803
    %v2812 = vpack.c.b16 %v1808, %v1804
    %v2813 = vpack.c.b16 %v1813, %v1809
    %v2814 = vpack.c.b16 %v1814, %v1810
    %v2815 = vpack.c.b16 %v1815, %v1811
    %v2816 = vpack.c.b16 %v1816, %v1812
    %v2817 = vpack.c.b16 %v1821, %v1817
    %v2818 = vpack.c.b16 %v1822, %v1818
    %v2819 = vpack.c.b16 %v1823, %v1819
    %v2820 = vpack.c.b16 %v1824, %v1820
    %v2821 = vpack.c.b16 %v1829, %v1825
    %v2822 = vpack.c.b16 %v1830, %v1826
    %v2823 = vpack.c.b16 %v1831, %v1827
    %v2824 = vpack.c.b16 %v1832, %v1828
    %v2825 = vpack.c.b16 %v1837, %v1833
    %v2826 = vpack.c.b16 %v1838, %v1834
    %v2827 = vpack.c.b16 %v1839, %v1835
    %v2828 = vpack.c.b16 %v1840, %v1836
    %v2829 = vpack.c.b16 %v1845, %v1841
    %v2830 = vpack.c.b16 %v1846, %v1842
    %v2831 = vpack.c.b16 %v1847, %v1843
    %v2832 = vpack.c.b16 %v1848, %v1844
    %v2833 = vpack.c.b16 %v1853, %v1849
    %v2834 = vpack.c.b16 %v1854, %v1850
    %v2835 = vpack.c.b16 %v1855, %v1851
    %v2836 = vpack.c.b16 %v1856, %v1852
    %v2837 = vpack.c.b16 %v1861, %v1857
    %v2838 = vpack.c.b16 %v1862, %v1858
    %v2839 = vpack.c.b16 %v1863, %v1859
    %v2840 = vpack.c.b16 %v1864, %v1860
    %v2841 = vpack.c.b16 %v1869, %v1865
    %v2842 = vpack.c.b16 %v1870, %v1866
    %v2843 = vpack.c.b16 %v1871, %v1867
    %v2844 = vpack.c.b16 %v1872, %v1868
    %v2845 = vpack.c.b16 %v1877, %v1873
    %v2846 = vpack.c.b16 %v1878, %v1874
    %v2847 = vpack.c.b16 %v1879, %v1875
    %v2848 = vpack.c.b16 %v1880, %v1876
    %v2849 = vpack.c.b16 %v1885, %v1881
    %v2850 = vpack.c.b16 %v1886, %v1882
    %v2851 = vpack.c.b16 %v1887, %v1883
    %v2852 = vpack.c.b16 %v1888, %v1884
    %v2853 = vpack.c.b16 %v1893, %v1889
    %v2854 = vpack.c.b16 %v1894, %v1890
    %v2855 = vpack.c.b16 %v1895, %v1891
    %v2856 = vpack.c.b16 %v1896, %v1892
    %v2857 = vpack.c.b16 %v1901, %v1897
    %v2858 = vpack.c.b16 %v1902, %v1898
    %v2859 = vpack.c.b16 %v1903, %v1899
    %v2860 = vpack.c.b16 %v1904, %v1900
    %v2861 = vpack.c.b16 %v1909, %v1905
    %v2862 = vpack.c.b16 %v1910, %v1906
    %v2863 = vpack.c.b16 %v1911, %v1907
    %v2864 = vpack.c.b16 %v1912, %v1908
    %v2865 = vpack.c.b16 %v1917, %v1913
    %v2866 = vpack.c.b16 %v1918, %v1914
    %v2867 = vpack.c.b16 %v1919, %v1915
    %v2868 = vpack.c.b16 %v1920, %v1916
    %v2869 = vpack.c.b16 %v1925, %v1921
    %v2870 = vpack.c.b16 %v1926, %v1922
    %v2871 = vpack.c.b16 %v1927, %v1923
    %v2872 = vpack.c.b16 %v1928, %v1924
    %v2873 = vpack.c.b16 %v1933, %v1929
    %v2874 = vpack.c.b16 %v1934, %v1930
    %v2875 = vpack.c.b16 %v1935, %v1931
    %v2876 = vpack.c.b16 %v1936, %v1932
    %v2877 = vpack.c.b16 %v1941, %v1937
    %v2878 = vpack.c.b16 %v1942, %v1938
    %v2879 = vpack.c.b16 %v1943, %v1939
    %v2880 = vpack.c.b16 %v1944, %v1940
    %v2881 = vpack.c.b16 %v1949, %v1945
    %v2882 = vpack.c.b16 %v1950, %v1946
    %v2883 = vpack.c.b16 %v1951, %v1947
    %v2884 = vpack.c.b16 %v1952, %v1948
    %v2885 = vpack.c.b16 %v1957, %v1953
    %v2886 = vpack.c.b16 %v1958, %v1954
    %v2887 = vpack.c.b16 %v1959, %v1955
    %v2888 = vpack.c.b16 %v1960, %v1956
    %v2889 = vpack.c.b16 %v1965, %v1961
    %v2890 = vpack.c.b16 %v1966, %v1962
    %v2891 = vpack.c.b16 %v1967, %v1963
    %v2892 = vpack.c.b16 %v1968, %v1964
    %v2893 = vpack.c.b16 %v1973, %v1969
    %v2894 = vpack.c.b16 %v1974, %v1970
    %v2895 = vpack.c.b16 %v1975, %v1971
    %v2896 = vpack.c.b16 %v1976, %v1972
    %v2897 = vpack.c.b16 %v1981, %v1977
    %v2898 = vpack.c.b16 %v1982, %v1978
    %v2899 = vpack.c.b16 %v1983, %v1979
    %v2900 = vpack.c.b16 %v1984, %v1980
    %v2901 = vpack.c.b16 %v1989, %v1985
    %v2902 = vpack.c.b16 %v1990, %v1986
    %v2903 = vpack.c.b16 %v1991, %v1987
    %v2904 = vpack.c.b16 %v1992, %v1988
    %v2905 = vpack.c.b16 %v1997, %v1993
    %v2906 = vpack.c.b16 %v1998, %v1994
    %v2907 = vpack.c.b16 %v1999, %v1995
    %v2908 = vpack.c.b16 %v2000, %v1996
    %v2909 = vpack.c.b16 %v2005, %v2001
    %v2910 = vpack.c.b16 %v2006, %v2002
    %v2911 = vpack.c.b16 %v2007, %v2003
    %v2912 = vpack.c.b16 %v2008, %v2004
    %v2913 = vpack.c.b16 %v2013, %v2009
    %v2914 = vpack.c.b16 %v2014, %v2010
    %v2915 = vpack.c.b16 %v2015, %v2011
    %v2916 = vpack.c.b16 %v2016, %v2012
    %v2917 = vpack.c.b16 %v2021, %v2017
    %v2918 = vpack.c.b16 %v2022, %v2018
    %v2919 = vpack.c.b16 %v2023, %v2019
    %v2920 = vpack.c.b16 %v2024, %v2020
    %v2921 = vpack.c.b16 %v2029, %v2025
    %v2922 = vpack.c.b16 %v2030, %v2026
    %v2923 = vpack.c.b16 %v2031, %v2027
    %v2924 = vpack.c.b16 %v2032, %v2028
    %v2925 = vpack.c.b16 %v2037, %v2033
    %v2926 = vpack.c.b16 %v2038, %v2034
    %v2927 = vpack.c.b16 %v2039, %v2035
    %v2928 = vpack.c.b16 %v2040, %v2036
    %v2929 = vpack.c.b16 %v2045, %v2041
    %v2930 = vpack.c.b16 %v2046, %v2042
    %v2931 = vpack.c.b16 %v2047, %v2043
    %v2932 = vpack.c.b16 %v2048, %v2044
    %v2933 = vpack.c.b16 %v2053, %v2049
    %v2934 = vpack.c.b16 %v2054, %v2050
    %v2935 = vpack.c.b16 %v2055, %v2051
    %v2936 = vpack.c.b16 %v2056, %v2052
    %v2937 = vpack.c.b16 %v2061, %v2057
    %v2938 = vpack.c.b16 %v2062, %v2058
    %v2939 = vpack.c.b16 %v2063, %v2059
    %v2940 = vpack.c.b16 %v2064, %v2060
    %v2941 = vpack.c.b16 %v2069, %v2065
    %v2942 = vpack.c.b16 %v2070, %v2066
    %v2943 = vpack.c.b16 %v2071, %v2067
    %v2944 = vpack.c.b16 %v2072, %v2068
    %v2945 = vpack.c.b16 %v2077, %v2073
    %v2946 = vpack.c.b16 %v2078, %v2074
    %v2947 = vpack.c.b16 %v2079, %v2075
    %v2948 = vpack.c.b16 %v2080, %v2076
    %v2949 = vpack.c.b16 %v2085, %v2081
    %v2950 = vpack.c.b16 %v2086, %v2082
    %v2951 = vpack.c.b16 %v2087, %v2083
    %v2952 = vpack.c.b16 %v2088, %v2084
    %v2953 = vpack.c.b16 %v2093, %v2089
    %v2954 = vpack.c.b16 %v2094, %v2090
    %v2955 = vpack.c.b16 %v2095, %v2091
    %v2956 = vpack.c.b16 %v2096, %v2092
    %v2957 = vpack.c.b16 %v2101, %v2097
    %v2958 = vpack.c.b16 %v2102, %v2098
    %v2959 = vpack.c.b16 %v2103, %v2099
    %v2960 = vpack.c.b16 %v2104, %v2100
    %v2961 = vpack.c.b16 %v2109, %v2105
    %v2962 = vpack.c.b16 %v2110, %v2106
    %v2963 = vpack.c.b16 %v2111, %v2107
    %v2964 = vpack.c.b16 %v2112, %v2108
    %v2965 = vpack.c.b16 %v2117, %v2113
    %v2966 = vpack.c.b16 %v2118, %v2114
    %v2967 = vpack.c.b16 %v2119, %v2115
    %v2968 = vpack.c.b16 %v2120, %v2116
    %v2969 = vpack.c.b16 %v2125, %v2121
    %v2970 = vpack.c.b16 %v2126, %v2122
    %v2971 = vpack.c.b16 %v2127, %v2123
    %v2972 = vpack.c.b16 %v2128, %v2124
    %v2973 = vpack.c.b16 %v2133, %v2129
    %v2974 = vpack.c.b16 %v2134, %v2130
    %v2975 = vpack.c.b16 %v2135, %v2131
    %v2976 = vpack.c.b16 %v2136, %v2132
    %v2977 = vpack.c.b16 %v2141, %v2137
    %v2978 = vpack.c.b16 %v2142, %v2138
    %v2979 = vpack.c.b16 %v2143, %v2139
    %v2980 = vpack.c.b16 %v2144, %v2140
    %v2981 = vpack.c.b16 %v2149, %v2145
    %v2982 = vpack.c.b16 %v2150, %v2146
    %v2983 = vpack.c.b16 %v2151, %v2147
    %v2984 = vpack.c.b16 %v2152, %v2148
    %v2985 = vpack.c.b16 %v2157, %v2153
    %v2986 = vpack.c.b16 %v2158, %v2154
    %v2987 = vpack.c.b16 %v2159, %v2155
    %v2988 = vpack.c.b16 %v2160, %v2156
    %v2989 = vpack.c.b16 %v2165, %v2161
    %v2990 = vpack.c.b16 %v2166, %v2162
    %v2991 = vpack.c.b16 %v2167, %v2163
    %v2992 = vpack.c.b16 %v2168, %v2164
    %v2993 = vpack.c.b16 %v2173, %v2169
    %v2994 = vpack.c.b16 %v2174, %v2170
    %v2995 = vpack.c.b16 %v2175, %v2171
    %v2996 = vpack.c.b16 %v2176, %v2172
    %v2997 = vpack.c.b16 %v2181, %v2177
    %v2998 = vpack.c.b16 %v2182, %v2178
    %v2999 = vpack.c.b16 %v2183, %v2179
    %v3000 = vpack.c.b16 %v2184, %v2180
    %v3001 = vpack.c.b16 %v2189, %v2185
    %v3002 = vpack.c.b16 %v2190, %v2186
    %v3003 = vpack.c.b16 %v2191, %v2187
    %v3004 = vpack.c.b16 %v2192, %v2188
    %v3005 = vpack.c.b16 %v2197, %v2193
    %v3006 = vpack.c.b16 %v2198, %v2194
    %v3007 = vpack.c.b16 %v2199, %v2195
    %v3008 = vpack.c.b16 %v2200, %v2196
    %v3009 = vpack.c.b16 %v2205, %v2201
    %v3010 = vpack.c.b16 %v2206, %v2202
    %v3011 = vpack.c.b16 %v2207, %v2203
    %v3012 = vpack.c.b16 %v2208, %v2204
    %v3013 = vpack.c.b16 %v2213, %v2209
    %v3014 = vpack.c.b16 %v2214, %v2210
    %v3015 = vpack.c.b16 %v2215, %v2211
    %v3016 = vpack.c.b16 %v2216, %v2212
    %v3017 = vpack.c.b16 %v2221, %v2217
    %v3018 = vpack.c.b16 %v2222, %v2218
    %v3019 = vpack.c.b16 %v2223, %v2219
    %v3020 = vpack.c.b16 %v2224, %v2220
    %v3021 = vpack.c.b16 %v2229, %v2225
    %v3022 = vpack.c.b16 %v2230, %v2226
    %v3023 = vpack.c.b16 %v2231, %v2227
    %v3024 = vpack.c.b16 %v2232, %v2228
    %v3025 = vpack.c.b16 %v2237, %v2233
    %v3026 = vpack.c.b16 %v2238, %v2234
    %v3027 = vpack.c.b16 %v2239, %v2235
    %v3028 = vpack.c.b16 %v2240, %v2236
    %v3029 = vpack.c.b16 %v2245, %v2241
    %v3030 = vpack.c.b16 %v2246, %v2242
    %v3031 = vpack.c.b16 %v2247, %v2243
    %v3032 = vpack.c.b16 %v2248, %v2244
    %v3033 = vpack.c.b16 %v2253, %v2249
    %v3034 = vpack.c.b16 %v2254, %v2250
    %v3035 = vpack.c.b16 %v2255, %v2251
    %v3036 = vpack.c.b16 %v2256, %v2252
    %v3037 = vpack.c.b16 %v2261, %v2257
    %v3038 = vpack.c.b16 %v2262, %v2258
    %v3039 = vpack.c.b16 %v2263, %v2259
    %v3040 = vpack.c.b16 %v2264, %v2260
    %v3041 = vpack.c.b16 %v2269, %v2265
    %v3042 = vpack.c.b16 %v2270, %v2266
    %v3043 = vpack.c.b16 %v2271, %v2267
    %v3044 = vpack.c.b16 %v2272, %v2268
    %v3045 = vpack.c.b16 %v2277, %v2273
    %v3046 = vpack.c.b16 %v2278, %v2274
    %v3047 = vpack.c.b16 %v2279, %v2275
    %v3048 = vpack.c.b16 %v2280, %v2276
    %v3049 = vpack.c.b16 %v2285, %v2281
    %v3050 = vpack.c.b16 %v2286, %v2282
    %v3051 = vpack.c.b16 %v2287, %v2283
    %v3052 = vpack.c.b16 %v2288, %v2284
    %v3053 = vpack.c.b16 %v2293, %v2289
    %v3054 = vpack.c.b16 %v2294, %v2290
    %v3055 = vpack.c.b16 %v2295, %v2291
    %v3056 = vpack.c.b16 %v2296, %v2292
    %v3057 = vpack.c.b16 %v2301, %v2297
    %v3058 = vpack.c.b16 %v2302, %v2298
    %v3059 = vpack.c.b16 %v2303, %v2299
    %v3060 = vpack.c.b16 %v2304, %v2300
    %v3061 = vpack.c.b16 %v2309, %v2305
    %v3062 = vpack.c.b16 %v2310, %v2306
    %v3063 = vpack.c.b16 %v2311, %v2307
    %v3064 = vpack.c.b16 %v2312, %v2308
    %v3065 = vpack.c.b16 %v2317, %v2313
    %v3066 = vpack.c.b16 %v2318, %v2314
    %v3067 = vpack.c.b16 %v2319, %v2315
    %v3068 = vpack.c.b16 %v2320, %v2316
    %v3069 = vpack.c.b16 %v2325, %v2321
    %v3070 = vpack.c.b16 %v2326, %v2322
    %v3071 = vpack.c.b16 %v2327, %v2323
    %v3072 = vpack.c.b16 %v2328, %v2324
    %v3073 = vpack.c.b16 %v2333, %v2329
    %v3074 = vpack.c.b16 %v2334, %v2330
    %v3075 = vpack.c.b16 %v2335, %v2331
    %v3076 = vpack.c.b16 %v2336, %v2332
    %v3077 = vpack.c.b16 %v2341, %v2337
    %v3078 = vpack.c.b16 %v2342, %v2338
    %v3079 = vpack.c.b16 %v2343, %v2339
    %v3080 = vpack.c.b16 %v2344, %v2340
    %v3081 = vpack.c.b16 %v2349, %v2345
    %v3082 = vpack.c.b16 %v2350, %v2346
    %v3083 = vpack.c.b16 %v2351, %v2347
    %v3084 = vpack.c.b16 %v2352, %v2348
    %v3085 = vpack.c.b16 %v2357, %v2353
    %v3086 = vpack.c.b16 %v2358, %v2354
    %v3087 = vpack.c.b16 %v2359, %v2355
    %v3088 = vpack.c.b16 %v2360, %v2356
    %v3089 = vpack.c.b16 %v2365, %v2361
    %v3090 = vpack.c.b16 %v2366, %v2362
    %v3091 = vpack.c.b16 %v2367, %v2363
    %v3092 = vpack.c.b16 %v2368, %v2364
    %v3093 = vpack.c.b16 %v2373, %v2369
    %v3094 = vpack.c.b16 %v2374, %v2370
    %v3095 = vpack.c.b16 %v2375, %v2371
    %v3096 = vpack.c.b16 %v2376, %v2372
    %v3097 = vpack.c.b16 %v2381, %v2377
    %v3098 = vpack.c.b16 %v2382, %v2378
    %v3099 = vpack.c.b16 %v2383, %v2379
    %v3100 = vpack.c.b16 %v2384, %v2380
    %v3101 = vpack.c.b16 %v2389, %v2385
    %v3102 = vpack.c.b16 %v2390, %v2386
    %v3103 = vpack.c.b16 %v2391, %v2387
    %v3104 = vpack.c.b16 %v2392, %v2388
    %v3105 = vpack.c.b16 %v2397, %v2393
    %v3106 = vpack.c.b16 %v2398, %v2394
    %v3107 = vpack.c.b16 %v2399, %v2395
    %v3108 = vpack.c.b16 %v2400, %v2396
    %v3109 = vpack.c.b16 %v2405, %v2401
    %v3110 = vpack.c.b16 %v2406, %v2402
    %v3111 = vpack.c.b16 %v2407, %v2403
    %v3112 = vpack.c.b16 %v2408, %v2404
    %v3113 = vpack.c.b16 %v2413, %v2409
    %v3114 = vpack.c.b16 %v2414, %v2410
    %v3115 = vpack.c.b16 %v2415, %v2411
    %v3116 = vpack.c.b16 %v2416, %v2412
    %v3117 = vpack.c.b16 %v2421, %v2417
    %v3118 = vpack.c.b16 %v2422, %v2418
    %v3119 = vpack.c.b16 %v2423, %v2419
    %v3120 = vpack.c.b16 %v2424, %v2420
    %v3121 = vpack.c.b16 %v2429, %v2425
    %v3122 = vpack.c.b16 %v2430, %v2426
    %v3123 = vpack.c.b16 %v2431, %v2427
    %v3124 = vpack.c.b16 %v2432, %v2428
    %v3125 = vpack.c.b16 %v2437, %v2433
    %v3126 = vpack.c.b16 %v2438, %v2434
    %v3127 = vpack.c.b16 %v2439, %v2435
    %v3128 = vpack.c.b16 %v2440, %v2436
    %v3129 = vpack.c.b16 %v2445, %v2441
    %v3130 = vpack.c.b16 %v2446, %v2442
    %v3131 = vpack.c.b16 %v2447, %v2443
    %v3132 = vpack.c.b16 %v2448, %v2444
    %v3133 = vpack.c.b16 %v2453, %v2449
    %v3134 = vpack.c.b16 %v2454, %v2450
    %v3135 = vpack.c.b16 %v2455, %v2451
    %v3136 = vpack.c.b16 %v2456, %v2452
    %v3137 = vpack.c.b16 %v2461, %v2457
    %v3138 = vpack.c.b16 %v2462, %v2458
    %v3139 = vpack.c.b16 %v2463, %v2459
    %v3140 = vpack.c.b16 %v2464, %v2460
    %v3141 = vpack.c.b16 %v2469, %v2465
    %v3142 = vpack.c.b16 %v2470, %v2466
    %v3143 = vpack.c.b16 %v2471, %v2467
    %v3144 = vpack.c.b16 %v2472, %v2468
    %v3145 = vpack.c.b16 %v2477, %v2473
    %v3146 = vpack.c.b16 %v2478, %v2474
    %v3147 = vpack.c.b16 %v2479, %v2475
    %v3148 = vpack.c.b16 %v2480, %v2476
    %v3149 = vpack.c.b16 %v2485, %v2481
    %v3150 = vpack.c.b16 %v2486, %v2482
    %v3151 = vpack.c.b16 %v2487, %v2483
    %v3152 = vpack.c.b16 %v2488, %v2484
    %v3153 = vpack.c.b16 %v2493, %v2489
    %v3154 = vpack.c.b16 %v2494, %v2490
    %v3155 = vpack.c.b16 %v2495, %v2491
    %v3156 = vpack.c.b16 %v2496, %v2492
    %v3157 = vpack.c.b16 %v2501, %v2497
    %v3158 = vpack.c.b16 %v2502, %v2498
    %v3159 = vpack.c.b16 %v2503, %v2499
    %v3160 = vpack.c.b16 %v2504, %v2500
    %v3161 = vpack.c.b16 %v2509, %v2505
    %v3162 = vpack.c.b16 %v2510, %v2506
    %v3163 = vpack.c.b16 %v2511, %v2507
    %v3164 = vpack.c.b16 %v2512, %v2508
    %v3165 = vpack.c.b16 %v2517, %v2513
    %v3166 = vpack.c.b16 %v2518, %v2514
    %v3167 = vpack.c.b16 %v2519, %v2515
    %v3168 = vpack.c.b16 %v2520, %v2516
    %v3169 = vpack.c.b16 %v2525, %v2521
    %v3170 = vpack.c.b16 %v2526, %v2522
    %v3171 = vpack.c.b16 %v2527, %v2523
    %v3172 = vpack.c.b16 %v2528, %v2524
    %v3173 = vpack.c.b16 %v2533, %v2529
    %v3174 = vpack.c.b16 %v2534, %v2530
    %v3175 = vpack.c.b16 %v2535, %v2531
    %v3176 = vpack.c.b16 %v2536, %v2532
    %v3177 = vpack.c.b16 %v2541, %v2537
    %v3178 = vpack.c.b16 %v2542, %v2538
    %v3179 = vpack.c.b16 %v2543, %v2539
    %v3180 = vpack.c.b16 %v2544, %v2540
    %v3181 = vpack.c.b16 %v2549, %v2545
    %v3182 = vpack.c.b16 %v2550, %v2546
    %v3183 = vpack.c.b16 %v2551, %v2547
    %v3184 = vpack.c.b16 %v2552, %v2548
    %v3185 = vpack.c.b16 %v2557, %v2553
    %v3186 = vpack.c.b16 %v2558, %v2554
    %v3187 = vpack.c.b16 %v2559, %v2555
    %v3188 = vpack.c.b16 %v2560, %v2556
    %v3189 = vpack.c.b16 %v2565, %v2561
    %v3190 = vpack.c.b16 %v2566, %v2562
    %v3191 = vpack.c.b16 %v2567, %v2563
    %v3192 = vpack.c.b16 %v2568, %v2564
    %v3193 = vpack.c.b16 %v2573, %v2569
    %v3194 = vpack.c.b16 %v2574, %v2570
    %v3195 = vpack.c.b16 %v2575, %v2571
    %v3196 = vpack.c.b16 %v2576, %v2572
    %v3197 = vpack.c.b16 %v2581, %v2577
    %v3198 = vpack.c.b16 %v2582, %v2578
    %v3199 = vpack.c.b16 %v2583, %v2579
    %v3200 = vpack.c.b16 %v2584, %v2580
    %v3201 = vpack.c.b16 %v2589, %v2585
    %v3202 = vpack.c.b16 %v2590, %v2586
    %v3203 = vpack.c.b16 %v2591, %v2587
    %v3204 = vpack.c.b16 %v2592, %v2588
    %v3205 = vpack.c.b16 %v2597, %v2593
    %v3206 = vpack.c.b16 %v2598, %v2594
    %v3207 = vpack.c.b16 %v2599, %v2595
    %v3208 = vpack.c.b16 %v2600, %v2596
    %v3209 = vpack.c.b16 %v2605, %v2601
    %v3210 = vpack.c.b16 %v2606, %v2602
    %v3211 = vpack.c.b16 %v2607, %v2603
    %v3212 = vpack.c.b16 %v2608, %v2604
    %v3213 = vpack.c.b16 %v2613, %v2609
    %v3214 = vpack.c.b16 %v2614, %v2610
    %v3215 = vpack.c.b16 %v2615, %v2611
    %v3216 = vpack.c.b16 %v2616, %v2612
    %v3217 = vpack.c.b16 %v2621, %v2617
    %v3218 = vpack.c.b16 %v2622, %v2618
    %v3219 = vpack.c.b16 %v2623, %v2619
    %v3220 = vpack.c.b16 %v2624, %v2620
    %v3221 = vpack.c.b16 %v2629, %v2625
    %v3222 = vpack.c.b16 %v2630, %v2626
    %v3223 = vpack.c.b16 %v2631, %v2627
    %v3224 = vpack.c.b16 %v2632, %v2628
    %v3225 = vpack.c.b16 %v2637, %v2633
    %v3226 = vpack.c.b16 %v2638, %v2634
    %v3227 = vpack.c.b16 %v2639, %v2635
    %v3228 = vpack.c.b16 %v2640, %v2636
    %v3229 = vpack.c.b16 %v2645, %v2641
    %v3230 = vpack.c.b16 %v2646, %v2642
    %v3231 = vpack.c.b16 %v2647, %v2643
    %v3232 = vpack.c.b16 %v2648, %v2644
    %v3233 = vpack.c.b16 %v2653, %v2649
    %v3234 = vpack.c.b16 %v2654, %v2650
    %v3235 = vpack.c.b16 %v2655, %v2651
    %v3236 = vpack.c.b16 %v2656, %v2652
    %v3237 = vpack.c.b16 %v2661, %v2657
    %v3238 = vpack.c.b16 %v2662, %v2658
    %v3239 = vpack.c.b16 %v2663, %v2659
    %v3240 = vpack.c.b16 %v2664, %v2660
    %v3241 = vpack.c.b16 %v2669, %v2665
    %v3242 = vpack.c.b16 %v2670, %v2666
    %v3243 = vpack.c.b16 %v2671, %v2667
    %v3244 = vpack.c.b16 %v2672, %v2668
    %v3245 = vpack.c.b16 %v2677, %v2673
    %v3246 = vpack.c.b16 %v2678, %v2674
    %v3247 = vpack.c.b16 %v2679, %v2675
    %v3248 = vpack.c.b16 %v2680, %v2676
    %v3249 = vpack.c.b16 %v2685, %v2681
    %v3250 = vpack.c.b16 %v2686, %v2682
    %v3251 = vpack.c.b16 %v2687, %v2683
    %v3252 = vpack.c.b16 %v2688, %v2684
    %v3253 = vpack.c.b16 %v2693, %v2689
    %v3254 = vpack.c.b16 %v2694, %v2690
    %v3255 = vpack.c.b16 %v2695, %v2691
    %v3256 = vpack.c.b16 %v2696, %v2692
    %v3257 = vpack.c.b16 %v2701, %v2697
    %v3258 = vpack.c.b16 %v2702, %v2698
    %v3259 = vpack.c.b16 %v2703, %v2699
    %v3260 = vpack.c.b16 %v2704, %v2700
    %v3261 = vpack.c.b16 %v2709, %v2705
    %v3262 = vpack.c.b16 %v2710, %v2706
    %v3263 = vpack.c.b16 %v2711, %v2707
    %v3264 = vpack.c.b16 %v2712, %v2708
    %v3265 = vpack.c.b16 %v2717, %v2713
    %v3266 = vpack.c.b16 %v2718, %v2714
    %v3267 = vpack.c.b16 %v2719, %v2715
    %v3268 = vpack.c.b16 %v2720, %v2716
    %v3269 = vpack.c.b16 %v2725, %v2721
    %v3270 = vpack.c.b16 %v2726, %v2722
    %v3271 = vpack.c.b16 %v2727, %v2723
    %v3272 = vpack.c.b16 %v2728, %v2724
    %v3273 = vpack.c.b16 %v2733, %v2729
    %v3274 = vpack.c.b16 %v2734, %v2730
    %v3275 = vpack.c.b16 %v2735, %v2731
    %v3276 = vpack.c.b16 %v2736, %v2732
    %v3277 = vpack.c.b16 %v2741, %v2737
    %v3278 = vpack.c.b16 %v2742, %v2738
    %v3279 = vpack.c.b16 %v2743, %v2739
    %v3280 = vpack.c.b16 %v2744, %v2740
    %v3281 = vpack.c.b16 %v2749, %v2745
    %v3282 = vpack.c.b16 %v2750, %v2746
    %v3283 = vpack.c.b16 %v2751, %v2747
    %v3284 = vpack.c.b16 %v2752, %v2748
    %v3285 = vpack.c.b16 %v2757, %v2753
    %v3286 = vpack.c.b16 %v2758, %v2754
    %v3287 = vpack.c.b16 %v2759, %v2755
    %v3288 = vpack.c.b16 %v2760, %v2756
    %v3289 = vpack.c.b16 %v2765, %v2761
    %v3290 = vpack.c.b16 %v2766, %v2762
    %v3291 = vpack.c.b16 %v2767, %v2763
    %v3292 = vpack.c.b16 %v2768, %v2764
    %v3293 = vpack.c.b16 %v2773, %v2769
    %v3294 = vpack.c.b16 %v2774, %v2770
    %v3295 = vpack.c.b16 %v2775, %v2771
    %v3296 = vpack.c.b16 %v2776, %v2772
    %v3297 = vpack.c.b16 %v2781, %v2777
    %v3298 = vpack.c.b16 %v2782, %v2778
    %v3299 = vpack.c.b16 %v2783, %v2779
    %v3300 = vpack.c.b16 %v2784, %v2780
    %v3301 = vpack.c.b16 %v2789, %v2785
    %v3302 = vpack.c.b16 %v2790, %v2786
    %v3303 = vpack.c.b16 %v2791, %v2787
    %v3304 = vpack.c.b16 %v2792, %v2788
    %3817 = vmatprep.subr.bf16.mxu0 %v2794
    %3818 = vmatpush1.bf16.msra.mxu0 %v2793
    %3819 = vmatprep.subr.bf16.mxu0 %v2798
    %3820 = vmatpush1.bf16.msra.mxu0 %v2797
    %3821 = vmatprep.subr.bf16.mxu0 %v2802
    %3822 = vmatpush1.bf16.msra.mxu0 %v2801
    %3823 = vmatprep.subr.bf16.mxu0 %v2806
    %3824 = vmatpush1.bf16.msra.mxu0 %v2805
    %3825 = vmatprep.subr.bf16.mxu0 %v2810
    %3826 = vmatpush1.bf16.msra.mxu0 %v2809
    %3827 = vmatprep.subr.bf16.mxu0 %v2814
    %3828 = vmatpush1.bf16.msra.mxu0 %v2813
    %3829 = vmatprep.subr.bf16.mxu0 %v2818
    %3830 = vmatpush1.bf16.msra.mxu0 %v2817
    %3831 = vmatprep.subr.bf16.mxu0 %v2822
    %3832 = vmatpush1.bf16.msra.mxu0 %v2821
    %3833 = vmatprep.subr.bf16.mxu0 %v2826
    %3834 = vmatpush1.bf16.msra.mxu0 %v2825
    %3835 = vmatprep.subr.bf16.mxu0 %v2830
    %3836 = vmatpush1.bf16.msra.mxu0 %v2829
    %3837 = vmatprep.subr.bf16.mxu0 %v2834
    %3838 = vmatpush1.bf16.msra.mxu0 %v2833
    %3839 = vmatprep.subr.bf16.mxu0 %v2838
    %3840 = vmatpush1.bf16.msra.mxu0 %v2837
    %3841 = vmatprep.subr.bf16.mxu0 %v2842
    %3842 = vmatpush1.bf16.msra.mxu0 %v2841
    %3843 = vmatprep.subr.bf16.mxu0 %v2846
    %3844 = vmatpush1.bf16.msra.mxu0 %v2845
    %3845 = vmatprep.subr.bf16.mxu0 %v2850
    %3846 = vmatpush1.bf16.msra.mxu0 %v2849
    %3847 = vmatprep.subr.bf16.mxu0 %v2854
    %3848 = vmatpush1.bf16.msra.mxu0 %v2853
    %3849 = vmatprep.mubr.bf16.mxu0 %v708
    %3850 = vmatmul.mubr.bf16.gmra.mrb[0].mxu0 %v707
    %v3851 = vpop.f32.mrb[0].mxu0
    %v3852 = vadd.f32 %v1240, %v3851
    %v3853 = vpop.f32.mrb[0].mxu0
    %v3854 = vadd.f32 %v1244, %v3853
    %v3855 = vpop.f32.mrb[0].mxu0
    %v3856 = vpop.f32.mrb[0].mxu0
    %3857 = vdwg.mxu0
    %3858 = vmatprep.subr.bf16.mxu0 %v2858
    %3859 = vmatpush1.bf16.msra.mxu0 %v2857
    %3860 = vmatprep.subr.bf16.mxu0 %v2862
    %3861 = vmatpush1.bf16.msra.mxu0 %v2861
    %3862 = vmatprep.subr.bf16.mxu0 %v2866
    %3863 = vmatpush1.bf16.msra.mxu0 %v2865
    %3864 = vmatprep.subr.bf16.mxu0 %v2870
    %3865 = vmatpush1.bf16.msra.mxu0 %v2869
    %3866 = vmatprep.subr.bf16.mxu0 %v2874
    %3867 = vmatpush1.bf16.msra.mxu0 %v2873
    %3868 = vmatprep.subr.bf16.mxu0 %v2878
    %3869 = vmatpush1.bf16.msra.mxu0 %v2877
    %3870 = vmatprep.subr.bf16.mxu0 %v2882
    %3871 = vmatpush1.bf16.msra.mxu0 %v2881
    %3872 = vmatprep.subr.bf16.mxu0 %v2886
    %3873 = vmatpush1.bf16.msra.mxu0 %v2885
    %3874 = vmatprep.subr.bf16.mxu0 %v2890
    %3875 = vmatpush1.bf16.msra.mxu0 %v2889
    %3876 = vmatprep.subr.bf16.mxu0 %v2894
    %3877 = vmatpush1.bf16.msra.mxu0 %v2893
    %3878 = vmatprep.subr.bf16.mxu0 %v2898
    %3879 = vmatpush1.bf16.msra.mxu0 %v2897
    %3880 = vmatprep.subr.bf16.mxu0 %v2902
    %3881 = vmatpush1.bf16.msra.mxu0 %v2901
    %3882 = vmatprep.subr.bf16.mxu0 %v2906
    %3883 = vmatpush1.bf16.msra.mxu0 %v2905
    %3884 = vmatprep.subr.bf16.mxu0 %v2910
    %3885 = vmatpush1.bf16.msra.mxu0 %v2909
    %3886 = vmatprep.subr.bf16.mxu0 %v2914
    %3887 = vmatpush1.bf16.msra.mxu0 %v2913
    %3888 = vmatprep.subr.bf16.mxu0 %v2918
    %3889 = vmatpush1.bf16.msra.mxu0 %v2917
    %3890 = vmatprep.mubr.bf16.mxu0 %v710
    %3891 = vmatmul.mubr.bf16.gmra.mrb[0].mxu0 %v709
    %v3892 = vpop.f32.mrb[0].mxu0
    %v3893 = vadd.f32 %v3852, %v3892
    %v3894 = vpop.f32.mrb[0].mxu0
    %v3895 = vadd.f32 %v3854, %v3894
    %v3896 = vpop.f32.mrb[0].mxu0
    %v3897 = vpop.f32.mrb[0].mxu0
    %3898 = vdwg.mxu0
    %3899 = vmatprep.subr.bf16.mxu0 %v2922
    %3900 = vmatpush1.bf16.msra.mxu0 %v2921
    %3901 = vmatprep.subr.bf16.mxu0 %v2926
    %3902 = vmatpush1.bf16.msra.mxu0 %v2925
    %3903 = vmatprep.subr.bf16.mxu0 %v2930
    %3904 = vmatpush1.bf16.msra.mxu0 %v2929
    %3905 = vmatprep.subr.bf16.mxu0 %v2934
    %3906 = vmatpush1.bf16.msra.mxu0 %v2933
    %3907 = vmatprep.subr.bf16.mxu0 %v2938
    %3908 = vmatpush1.bf16.msra.mxu0 %v2937
    %3909 = vmatprep.subr.bf16.mxu0 %v2942
    %3910 = vmatpush1.bf16.msra.mxu0 %v2941
    %3911 = vmatprep.subr.bf16.mxu0 %v2946
    %3912 = vmatpush1.bf16.msra.mxu0 %v2945
    %3913 = vmatprep.subr.bf16.mxu0 %v2950
    %3914 = vmatpush1.bf16.msra.mxu0 %v2949
    %3915 = vmatprep.subr.bf16.mxu0 %v2954
    %3916 = vmatpush1.bf16.msra.mxu0 %v2953
    %3917 = vmatprep.subr.bf16.mxu0 %v2958
    %3918 = vmatpush1.bf16.msra.mxu0 %v2957
    %3919 = vmatprep.subr.bf16.mxu0 %v2962
    %3920 = vmatpush1.bf16.msra.mxu0 %v2961
    %3921 = vmatprep.subr.bf16.mxu0 %v2966
    %3922 = vmatpush1.bf16.msra.mxu0 %v2965
    %3923 = vmatprep.subr.bf16.mxu0 %v2970
    %3924 = vmatpush1.bf16.msra.mxu0 %v2969
    %3925 = vmatprep.subr.bf16.mxu0 %v2974
    %3926 = vmatpush1.bf16.msra.mxu0 %v2973
    %3927 = vmatprep.subr.bf16.mxu0 %v2978
    %3928 = vmatpush1.bf16.msra.mxu0 %v2977
    %3929 = vmatprep.subr.bf16.mxu0 %v2982
    %3930 = vmatpush1.bf16.msra.mxu0 %v2981
    %3931 = vmatprep.mubr.bf16.mxu0 %v712
    %3932 = vmatmul.mubr.bf16.gmra.mrb[0].mxu0 %v711
    %v3933 = vpop.f32.mrb[0].mxu0
    %v3934 = vadd.f32 %v3893, %v3933
    %v3935 = vpop.f32.mrb[0].mxu0
    %v3936 = vadd.f32 %v3895, %v3935
    %v3937 = vpop.f32.mrb[0].mxu0
    %v3938 = vpop.f32.mrb[0].mxu0
    %3939 = vdwg.mxu0
    %3940 = vmatprep.subr.bf16.mxu0 %v2986
    %3941 = vmatpush1.bf16.msra.mxu0 %v2985
    %3942 = vmatprep.subr.bf16.mxu0 %v2990
    %3943 = vmatpush1.bf16.msra.mxu0 %v2989
    %3944 = vmatprep.subr.bf16.mxu0 %v2994
    %3945 = vmatpush1.bf16.msra.mxu0 %v2993
    %3946 = vmatprep.subr.bf16.mxu0 %v2998
    %3947 = vmatpush1.bf16.msra.mxu0 %v2997
    %3948 = vmatprep.subr.bf16.mxu0 %v3002
    %3949 = vmatpush1.bf16.msra.mxu0 %v3001
    %3950 = vmatprep.subr.bf16.mxu0 %v3006
    %3951 = vmatpush1.bf16.msra.mxu0 %v3005
    %3952 = vmatprep.subr.bf16.mxu0 %v3010
    %3953 = vmatpush1.bf16.msra.mxu0 %v3009
    %3954 = vmatprep.subr.bf16.mxu0 %v3014
    %3955 = vmatpush1.bf16.msra.mxu0 %v3013
    %3956 = vmatprep.subr.bf16.mxu0 %v3018
    %3957 = vmatpush1.bf16.msra.mxu0 %v3017
    %3958 = vmatprep.subr.bf16.mxu0 %v3022
    %3959 = vmatpush1.bf16.msra.mxu0 %v3021
    %3960 = vmatprep.subr.bf16.mxu0 %v3026
    %3961 = vmatpush1.bf16.msra.mxu0 %v3025
    %3962 = vmatprep.subr.bf16.mxu0 %v3030
    %3963 = vmatpush1.bf16.msra.mxu0 %v3029
    %3964 = vmatprep.subr.bf16.mxu0 %v3034
    %3965 = vmatpush1.bf16.msra.mxu0 %v3033
    %3966 = vmatprep.subr.bf16.mxu0 %v3038
    %3967 = vmatpush1.bf16.msra.mxu0 %v3037
    %3968 = vmatprep.subr.bf16.mxu0 %v3042
    %3969 = vmatpush1.bf16.msra.mxu0 %v3041
    %3970 = vmatprep.subr.bf16.mxu0 %v3046
    %3971 = vmatpush1.bf16.msra.mxu0 %v3045
    %3972 = vmatprep.mubr.bf16.mxu0 %v714
    %3973 = vmatmul.mubr.bf16.gmra.mrb[0].mxu0 %v713
    %v3974 = vpop.f32.mrb[0].mxu0
    %v3975 = vadd.f32 %v3934, %v3974
    %v3976 = vpop.f32.mrb[0].mxu0
    %v3977 = vadd.f32 %v3936, %v3976
    %v3978 = vpop.f32.mrb[0].mxu0
    %v3979 = vpop.f32.mrb[0].mxu0
    %3980 = vdwg.mxu0
    %3981 = vmatprep.subr.bf16.mxu0 %v3050
    %3982 = vmatpush1.bf16.msra.mxu0 %v3049
    %3983 = vmatprep.subr.bf16.mxu0 %v3054
    %3984 = vmatpush1.bf16.msra.mxu0 %v3053
    %3985 = vmatprep.subr.bf16.mxu0 %v3058
    %3986 = vmatpush1.bf16.msra.mxu0 %v3057
    %3987 = vmatprep.subr.bf16.mxu0 %v3062
    %3988 = vmatpush1.bf16.msra.mxu0 %v3061
    %3989 = vmatprep.subr.bf16.mxu0 %v3066
    %3990 = vmatpush1.bf16.msra.mxu0 %v3065
    %3991 = vmatprep.subr.bf16.mxu0 %v3070
    %3992 = vmatpush1.bf16.msra.mxu0 %v3069
    %3993 = vmatprep.subr.bf16.mxu0 %v3074
    %3994 = vmatpush1.bf16.msra.mxu0 %v3073
    %3995 = vmatprep.subr.bf16.mxu0 %v3078
    %3996 = vmatpush1.bf16.msra.mxu0 %v3077
    %3997 = vmatprep.subr.bf16.mxu0 %v3082
    %3998 = vmatpush1.bf16.msra.mxu0 %v3081
    %3999 = vmatprep.subr.bf16.mxu0 %v3086
    %4000 = vmatpush1.bf16.msra.mxu0 %v3085
    %4001 = vmatprep.subr.bf16.mxu0 %v3090
    %4002 = vmatpush1.bf16.msra.mxu0 %v3089
    %4003 = vmatprep.subr.bf16.mxu0 %v3094
    %4004 = vmatpush1.bf16.msra.mxu0 %v3093
    %4005 = vmatprep.subr.bf16.mxu0 %v3098
    %4006 = vmatpush1.bf16.msra.mxu0 %v3097
    %4007 = vmatprep.subr.bf16.mxu0 %v3102
    %4008 = vmatpush1.bf16.msra.mxu0 %v3101
    %4009 = vmatprep.subr.bf16.mxu0 %v3106
    %4010 = vmatpush1.bf16.msra.mxu0 %v3105
    %4011 = vmatprep.subr.bf16.mxu0 %v3110
    %4012 = vmatpush1.bf16.msra.mxu0 %v3109
    %4013 = vmatprep.mubr.bf16.mxu0 %v716
    %4014 = vmatmul.mubr.bf16.gmra.mrb[0].mxu0 %v715
    %v4015 = vpop.f32.mrb[0].mxu0
    %v4016 = vadd.f32 %v3975, %v4015
    %v4017 = vpop.f32.mrb[0].mxu0
    %v4018 = vadd.f32 %v3977, %v4017
    %v4019 = vpop.f32.mrb[0].mxu0
    %v4020 = vpop.f32.mrb[0].mxu0
    %4021 = vdwg.mxu0
    %4022 = vmatprep.subr.bf16.mxu0 %v3114
    %4023 = vmatpush1.bf16.msra.mxu0 %v3113
    %4024 = vmatprep.subr.bf16.mxu0 %v3118
    %4025 = vmatpush1.bf16.msra.mxu0 %v3117
    %4026 = vmatprep.subr.bf16.mxu0 %v3122
    %4027 = vmatpush1.bf16.msra.mxu0 %v3121
    %4028 = vmatprep.subr.bf16.mxu0 %v3126
    %4029 = vmatpush1.bf16.msra.mxu0 %v3125
    %4030 = vmatprep.subr.bf16.mxu0 %v3130
    %4031 = vmatpush1.bf16.msra.mxu0 %v3129
    %4032 = vmatprep.subr.bf16.mxu0 %v3134
    %4033 = vmatpush1.bf16.msra.mxu0 %v3133
    %4034 = vmatprep.subr.bf16.mxu0 %v3138
    %4035 = vmatpush1.bf16.msra.mxu0 %v3137
    %4036 = vmatprep.subr.bf16.mxu0 %v3142
    %4037 = vmatpush1.bf16.msra.mxu0 %v3141
    %4038 = vmatprep.subr.bf16.mxu0 %v3146
    %4039 = vmatpush1.bf16.msra.mxu0 %v3145
    %4040 = vmatprep.subr.bf16.mxu0 %v3150
    %4041 = vmatpush1.bf16.msra.mxu0 %v3149
    %4042 = vmatprep.subr.bf16.mxu0 %v3154
    %4043 = vmatpush1.bf16.msra.mxu0 %v3153
    %4044 = vmatprep.subr.bf16.mxu0 %v3158
    %4045 = vmatpush1.bf16.msra.mxu0 %v3157
    %4046 = vmatprep.subr.bf16.mxu0 %v3162
    %4047 = vmatpush1.bf16.msra.mxu0 %v3161
    %4048 = vmatprep.subr.bf16.mxu0 %v3166
    %4049 = vmatpush1.bf16.msra.mxu0 %v3165
    %4050 = vmatprep.subr.bf16.mxu0 %v3170
    %4051 = vmatpush1.bf16.msra.mxu0 %v3169
    %4052 = vmatprep.subr.bf16.mxu0 %v3174
    %4053 = vmatpush1.bf16.msra.mxu0 %v3173
    %4054 = vmatprep.mubr.bf16.mxu0 %v718
    %4055 = vmatmul.mubr.bf16.gmra.mrb[0].mxu0 %v717
    %v4056 = vpop.f32.mrb[0].mxu0
    %v4057 = vadd.f32 %v4016, %v4056
    %v4058 = vpop.f32.mrb[0].mxu0
    %v4059 = vadd.f32 %v4018, %v4058
    %v4060 = vpop.f32.mrb[0].mxu0
    %v4061 = vpop.f32.mrb[0].mxu0
    %4062 = vdwg.mxu0
    %4063 = vmatprep.subr.bf16.mxu0 %v3178
    %4064 = vmatpush1.bf16.msra.mxu0 %v3177
    %4065 = vmatprep.subr.bf16.mxu0 %v3182
    %4066 = vmatpush1.bf16.msra.mxu0 %v3181
    %4067 = vmatprep.subr.bf16.mxu0 %v3186
    %4068 = vmatpush1.bf16.msra.mxu0 %v3185
    %4069 = vmatprep.subr.bf16.mxu0 %v3190
    %4070 = vmatpush1.bf16.msra.mxu0 %v3189
    %4071 = vmatprep.subr.bf16.mxu0 %v3194
    %4072 = vmatpush1.bf16.msra.mxu0 %v3193
    %4073 = vmatprep.subr.bf16.mxu0 %v3198
    %4074 = vmatpush1.bf16.msra.mxu0 %v3197
    %4075 = vmatprep.subr.bf16.mxu0 %v3202
    %4076 = vmatpush1.bf16.msra.mxu0 %v3201
    %4077 = vmatprep.subr.bf16.mxu0 %v3206
    %4078 = vmatpush1.bf16.msra.mxu0 %v3205
    %4079 = vmatprep.subr.bf16.mxu0 %v3210
    %4080 = vmatpush1.bf16.msra.mxu0 %v3209
    %4081 = vmatprep.subr.bf16.mxu0 %v3214
    %4082 = vmatpush1.bf16.msra.mxu0 %v3213
    %4083 = vmatprep.subr.bf16.mxu0 %v3218
    %4084 = vmatpush1.bf16.msra.mxu0 %v3217
    %4085 = vmatprep.subr.bf16.mxu0 %v3222
    %4086 = vmatpush1.bf16.msra.mxu0 %v3221
    %4087 = vmatprep.subr.bf16.mxu0 %v3226
    %4088 = vmatpush1.bf16.msra.mxu0 %v3225
    %4089 = vmatprep.subr.bf16.mxu0 %v3230
    %4090 = vmatpush1.bf16.msra.mxu0 %v3229
    %4091 = vmatprep.subr.bf16.mxu0 %v3234
    %4092 = vmatpush1.bf16.msra.mxu0 %v3233
    %4093 = vmatprep.subr.bf16.mxu0 %v3238
    %4094 = vmatpush1.bf16.msra.mxu0 %v3237
    %4095 = vmatprep.mubr.bf16.mxu0 %v720
    %4096 = vmatmul.mubr.bf16.gmra.mrb[0].mxu0 %v719
    %v4097 = vpop.f32.mrb[0].mxu0
    %v4098 = vadd.f32 %v4057, %v4097
    %v4099 = vpop.f32.mrb[0].mxu0
    %v4100 = vadd.f32 %v4059, %v4099
    %v4101 = vpop.f32.mrb[0].mxu0
    %v4102 = vpop.f32.mrb[0].mxu0
    %4103 = vdwg.mxu0
    %4104 = vmatprep.subr.bf16.mxu0 %v3242
    %4105 = vmatpush1.bf16.msra.mxu0 %v3241
    %4106 = vmatprep.subr.bf16.mxu0 %v3246
    %4107 = vmatpush1.bf16.msra.mxu0 %v3245
    %4108 = vmatprep.subr.bf16.mxu0 %v3250
    %4109 = vmatpush1.bf16.msra.mxu0 %v3249
    %4110 = vmatprep.subr.bf16.mxu0 %v3254
    %4111 = vmatpush1.bf16.msra.mxu0 %v3253
    %4112 = vmatprep.subr.bf16.mxu0 %v3258
    %4113 = vmatpush1.bf16.msra.mxu0 %v3257
    %4114 = vmatprep.subr.bf16.mxu0 %v3262
    %4115 = vmatpush1.bf16.msra.mxu0 %v3261
    %4116 = vmatprep.subr.bf16.mxu0 %v3266
    %4117 = vmatpush1.bf16.msra.mxu0 %v3265
    %4118 = vmatprep.subr.bf16.mxu0 %v3270
    %4119 = vmatpush1.bf16.msra.mxu0 %v3269
    %4120 = vmatprep.subr.bf16.mxu0 %v3274
    %4121 = vmatpush1.bf16.msra.mxu0 %v3273
    %4122 = vmatprep.subr.bf16.mxu0 %v3278
    %4123 = vmatpush1.bf16.msra.mxu0 %v3277
    %4124 = vmatprep.subr.bf16.mxu0 %v3282
    %4125 = vmatpush1.bf16.msra.mxu0 %v3281
    %4126 = vmatprep.subr.bf16.mxu0 %v3286
    %4127 = vmatpush1.bf16.msra.mxu0 %v3285
    %4128 = vmatprep.subr.bf16.mxu0 %v3290
    %4129 = vmatpush1.bf16.msra.mxu0 %v3289
    %4130 = vmatprep.subr.bf16.mxu0 %v3294
    %4131 = vmatpush1.bf16.msra.mxu0 %v3293
    %4132 = vmatprep.subr.bf16.mxu0 %v3298
    %4133 = vmatpush1.bf16.msra.mxu0 %v3297
    %4134 = vmatprep.subr.bf16.mxu0 %v3302
    %4135 = vmatpush1.bf16.msra.mxu0 %v3301
    %4136 = vmatprep.mubr.bf16.mxu0 %v722
    %4137 = vmatmul.mubr.bf16.gmra.mrb[0].mxu0 %v721
    %v4138 = vpop.f32.mrb[0].mxu0
    %v4139 = vadd.f32 %v4098, %v4138
    %v4140 = vpop.f32.mrb[0].mxu0
    %v4141 = vadd.f32 %v4100, %v4140
    %v4142 = vpop.f32.mrb[0].mxu0
    %v4143 = vpop.f32.mrb[0].mxu0
    %4144 = vdwg.mxu0
    %4145 = vmatprep.subr.bf16.mxu0 %v2796
    %4146 = vmatpush1.bf16.msra.mxu0 %v2795
    %4147 = vmatprep.subr.bf16.mxu0 %v2800
    %4148 = vmatpush1.bf16.msra.mxu0 %v2799
    %4149 = vmatprep.subr.bf16.mxu0 %v2804
    %4150 = vmatpush1.bf16.msra.mxu0 %v2803
    %4151 = vmatprep.subr.bf16.mxu0 %v2808
    %4152 = vmatpush1.bf16.msra.mxu0 %v2807
    %4153 = vmatprep.subr.bf16.mxu0 %v2812
    %4154 = vmatpush1.bf16.msra.mxu0 %v2811
    %4155 = vmatprep.subr.bf16.mxu0 %v2816
    %4156 = vmatpush1.bf16.msra.mxu0 %v2815
    %4157 = vmatprep.subr.bf16.mxu0 %v2820
    %4158 = vmatpush1.bf16.msra.mxu0 %v2819
    %4159 = vmatprep.subr.bf16.mxu0 %v2824
    %4160 = vmatpush1.bf16.msra.mxu0 %v2823
    %4161 = vmatprep.subr.bf16.mxu0 %v2828
    %4162 = vmatpush1.bf16.msra.mxu0 %v2827
    %4163 = vmatprep.subr.bf16.mxu0 %v2832
    %4164 = vmatpush1.bf16.msra.mxu0 %v2831
    %4165 = vmatprep.subr.bf16.mxu0 %v2836
    %4166 = vmatpush1.bf16.msra.mxu0 %v2835
    %4167 = vmatprep.subr.bf16.mxu0 %v2840
    %4168 = vmatpush1.bf16.msra.mxu0 %v2839
    %4169 = vmatprep.subr.bf16.mxu0 %v2844
    %4170 = vmatpush1.bf16.msra.mxu0 %v2843
    %4171 = vmatprep.subr.bf16.mxu0 %v2848
    %4172 = vmatpush1.bf16.msra.mxu0 %v2847
    %4173 = vmatprep.subr.bf16.mxu0 %v2852
    %4174 = vmatpush1.bf16.msra.mxu0 %v2851
    %4175 = vmatprep.subr.bf16.mxu0 %v2856
    %4176 = vmatpush1.bf16.msra.mxu0 %v2855
    %4177 = vmatprep.mubr.bf16.mxu0 %v708
    %4178 = vmatmul.mubr.bf16.gmra.mrb[0].mxu0 %v707
    %v4179 = vpop.f32.mrb[0].mxu0
    %v4180 = vadd.f32 %v1248, %v4179
    %v4181 = vpop.f32.mrb[0].mxu0
    %v4182 = vadd.f32 %v1252, %v4181
    %v4183 = vpop.f32.mrb[0].mxu0
    %v4184 = vpop.f32.mrb[0].mxu0
    %4185 = vdwg.mxu0
    %4186 = vmatprep.subr.bf16.mxu0 %v2860
    %4187 = vmatpush1.bf16.msra.mxu0 %v2859
    %4188 = vmatprep.subr.bf16.mxu0 %v2864
    %4189 = vmatpush1.bf16.msra.mxu0 %v2863
    %4190 = vmatprep.subr.bf16.mxu0 %v2868
    %4191 = vmatpush1.bf16.msra.mxu0 %v2867
    %4192 = vmatprep.subr.bf16.mxu0 %v2872
    %4193 = vmatpush1.bf16.msra.mxu0 %v2871
    %4194 = vmatprep.subr.bf16.mxu0 %v2876
    %4195 = vmatpush1.bf16.msra.mxu0 %v2875
    %4196 = vmatprep.subr.bf16.mxu0 %v2880
    %4197 = vmatpush1.bf16.msra.mxu0 %v2879
    %4198 = vmatprep.subr.bf16.mxu0 %v2884
    %4199 = vmatpush1.bf16.msra.mxu0 %v2883
    %4200 = vmatprep.subr.bf16.mxu0 %v2888
    %4201 = vmatpush1.bf16.msra.mxu0 %v2887
    %4202 = vmatprep.subr.bf16.mxu0 %v2892
    %4203 = vmatpush1.bf16.msra.mxu0 %v2891
    %4204 = vmatprep.subr.bf16.mxu0 %v2896
    %4205 = vmatpush1.bf16.msra.mxu0 %v2895
    %4206 = vmatprep.subr.bf16.mxu0 %v2900
    %4207 = vmatpush1.bf16.msra.mxu0 %v2899
    %4208 = vmatprep.subr.bf16.mxu0 %v2904
    %4209 = vmatpush1.bf16.msra.mxu0 %v2903
    %4210 = vmatprep.subr.bf16.mxu0 %v2908
    %4211 = vmatpush1.bf16.msra.mxu0 %v2907
    %4212 = vmatprep.subr.bf16.mxu0 %v2912
    %4213 = vmatpush1.bf16.msra.mxu0 %v2911
    %4214 = vmatprep.subr.bf16.mxu0 %v2916
    %4215 = vmatpush1.bf16.msra.mxu0 %v2915
    %4216 = vmatprep.subr.bf16.mxu0 %v2920
    %4217 = vmatpush1.bf16.msra.mxu0 %v2919
    %4218 = vmatprep.mubr.bf16.mxu0 %v710
    %4219 = vmatmul.mubr.bf16.gmra.mrb[0].mxu0 %v709
    %v4220 = vpop.f32.mrb[0].mxu0
    %v4221 = vadd.f32 %v4180, %v4220
    %v4222 = vpop.f32.mrb[0].mxu0
    %v4223 = vadd.f32 %v4182, %v4222
    %v4224 = vpop.f32.mrb[0].mxu0
    %v4225 = vpop.f32.mrb[0].mxu0
    %4226 = vdwg.mxu0
    %4227 = vmatprep.subr.bf16.mxu0 %v2924
    %4228 = vmatpush1.bf16.msra.mxu0 %v2923
    %4229 = vmatprep.subr.bf16.mxu0 %v2928
    %4230 = vmatpush1.bf16.msra.mxu0 %v2927
    %4231 = vmatprep.subr.bf16.mxu0 %v2932
    %4232 = vmatpush1.bf16.msra.mxu0 %v2931
    %4233 = vmatprep.subr.bf16.mxu0 %v2936
    %4234 = vmatpush1.bf16.msra.mxu0 %v2935
    %4235 = vmatprep.subr.bf16.mxu0 %v2940
    %4236 = vmatpush1.bf16.msra.mxu0 %v2939
    %4237 = vmatprep.subr.bf16.mxu0 %v2944
    %4238 = vmatpush1.bf16.msra.mxu0 %v2943
    %4239 = vmatprep.subr.bf16.mxu0 %v2948
    %4240 = vmatpush1.bf16.msra.mxu0 %v2947
    %4241 = vmatprep.subr.bf16.mxu0 %v2952
    %4242 = vmatpush1.bf16.msra.mxu0 %v2951
    %4243 = vmatprep.subr.bf16.mxu0 %v2956
    %4244 = vmatpush1.bf16.msra.mxu0 %v2955
    %4245 = vmatprep.subr.bf16.mxu0 %v2960
    %4246 = vmatpush1.bf16.msra.mxu0 %v2959
    %4247 = vmatprep.subr.bf16.mxu0 %v2964
    %4248 = vmatpush1.bf16.msra.mxu0 %v2963
    %4249 = vmatprep.subr.bf16.mxu0 %v2968
    %4250 = vmatpush1.bf16.msra.mxu0 %v2967
    %4251 = vmatprep.subr.bf16.mxu0 %v2972
    %4252 = vmatpush1.bf16.msra.mxu0 %v2971
    %4253 = vmatprep.subr.bf16.mxu0 %v2976
    %4254 = vmatpush1.bf16.msra.mxu0 %v2975
    %4255 = vmatprep.subr.bf16.mxu0 %v2980
    %4256 = vmatpush1.bf16.msra.mxu0 %v2979
    %4257 = vmatprep.subr.bf16.mxu0 %v2984
    %4258 = vmatpush1.bf16.msra.mxu0 %v2983
    %4259 = vmatprep.mubr.bf16.mxu0 %v712
    %4260 = vmatmul.mubr.bf16.gmra.mrb[0].mxu0 %v711
    %v4261 = vpop.f32.mrb[0].mxu0
    %v4262 = vadd.f32 %v4221, %v4261
    %v4263 = vpop.f32.mrb[0].mxu0
    %v4264 = vadd.f32 %v4223, %v4263
    %v4265 = vpop.f32.mrb[0].mxu0
    %v4266 = vpop.f32.mrb[0].mxu0
    %4267 = vdwg.mxu0
    %4268 = vmatprep.subr.bf16.mxu0 %v2988
    %4269 = vmatpush1.bf16.msra.mxu0 %v2987
    %4270 = vmatprep.subr.bf16.mxu0 %v2992
    %4271 = vmatpush1.bf16.msra.mxu0 %v2991
    %4272 = vmatprep.subr.bf16.mxu0 %v2996
    %4273 = vmatpush1.bf16.msra.mxu0 %v2995
    %4274 = vmatprep.subr.bf16.mxu0 %v3000
    %4275 = vmatpush1.bf16.msra.mxu0 %v2999
    %4276 = vmatprep.subr.bf16.mxu0 %v3004
    %4277 = vmatpush1.bf16.msra.mxu0 %v3003
    %4278 = vmatprep.subr.bf16.mxu0 %v3008
    %4279 = vmatpush1.bf16.msra.mxu0 %v3007
    %4280 = vmatprep.subr.bf16.mxu0 %v3012
    %4281 = vmatpush1.bf16.msra.mxu0 %v3011
    %4282 = vmatprep.subr.bf16.mxu0 %v3016
    %4283 = vmatpush1.bf16.msra.mxu0 %v3015
    %4284 = vmatprep.subr.bf16.mxu0 %v3020
    %4285 = vmatpush1.bf16.msra.mxu0 %v3019
    %4286 = vmatprep.subr.bf16.mxu0 %v3024
    %4287 = vmatpush1.bf16.msra.mxu0 %v3023
    %4288 = vmatprep.subr.bf16.mxu0 %v3028
    %4289 = vmatpush1.bf16.msra.mxu0 %v3027
    %4290 = vmatprep.subr.bf16.mxu0 %v3032
    %4291 = vmatpush1.bf16.msra.mxu0 %v3031
    %4292 = vmatprep.subr.bf16.mxu0 %v3036
    %4293 = vmatpush1.bf16.msra.mxu0 %v3035
    %4294 = vmatprep.subr.bf16.mxu0 %v3040
    %4295 = vmatpush1.bf16.msra.mxu0 %v3039
    %4296 = vmatprep.subr.bf16.mxu0 %v3044
    %4297 = vmatpush1.bf16.msra.mxu0 %v3043
    %4298 = vmatprep.subr.bf16.mxu0 %v3048
    %4299 = vmatpush1.bf16.msra.mxu0 %v3047
    %4300 = vmatprep.mubr.bf16.mxu0 %v714
    %4301 = vmatmul.mubr.bf16.gmra.mrb[0].mxu0 %v713
    %v4302 = vpop.f32.mrb[0].mxu0
    %v4303 = vadd.f32 %v4262, %v4302
    %v4304 = vpop.f32.mrb[0].mxu0
    %v4305 = vadd.f32 %v4264, %v4304
    %v4306 = vpop.f32.mrb[0].mxu0
    %v4307 = vpop.f32.mrb[0].mxu0
    %4308 = vdwg.mxu0
    %4309 = vmatprep.subr.bf16.mxu0 %v3052
    %4310 = vmatpush1.bf16.msra.mxu0 %v3051
    %4311 = vmatprep.subr.bf16.mxu0 %v3056
    %4312 = vmatpush1.bf16.msra.mxu0 %v3055
    %4313 = vmatprep.subr.bf16.mxu0 %v3060
    %4314 = vmatpush1.bf16.msra.mxu0 %v3059
    %4315 = vmatprep.subr.bf16.mxu0 %v3064
    %4316 = vmatpush1.bf16.msra.mxu0 %v3063
    %4317 = vmatprep.subr.bf16.mxu0 %v3068
    %4318 = vmatpush1.bf16.msra.mxu0 %v3067
    %4319 = vmatprep.subr.bf16.mxu0 %v3072
    %4320 = vmatpush1.bf16.msra.mxu0 %v3071
    %4321 = vmatprep.subr.bf16.mxu0 %v3076
    %4322 = vmatpush1.bf16.msra.mxu0 %v3075
    %4323 = vmatprep.subr.bf16.mxu0 %v3080
    %4324 = vmatpush1.bf16.msra.mxu0 %v3079
    %4325 = vmatprep.subr.bf16.mxu0 %v3084
    %4326 = vmatpush1.bf16.msra.mxu0 %v3083
    %4327 = vmatprep.subr.bf16.mxu0 %v3088
    %4328 = vmatpush1.bf16.msra.mxu0 %v3087
    %4329 = vmatprep.subr.bf16.mxu0 %v3092
    %4330 = vmatpush1.bf16.msra.mxu0 %v3091
    %4331 = vmatprep.subr.bf16.mxu0 %v3096
    %4332 = vmatpush1.bf16.msra.mxu0 %v3095
    %4333 = vmatprep.subr.bf16.mxu0 %v3100
    %4334 = vmatpush1.bf16.msra.mxu0 %v3099
    %4335 = vmatprep.subr.bf16.mxu0 %v3104
    %4336 = vmatpush1.bf16.msra.mxu0 %v3103
    %4337 = vmatprep.subr.bf16.mxu0 %v3108
    %4338 = vmatpush1.bf16.msra.mxu0 %v3107
    %4339 = vmatprep.subr.bf16.mxu0 %v3112
    %4340 = vmatpush1.bf16.msra.mxu0 %v3111
    %4341 = vmatprep.mubr.bf16.mxu0 %v716
    %4342 = vmatmul.mubr.bf16.gmra.mrb[0].mxu0 %v715
    %v4343 = vpop.f32.mrb[0].mxu0
    %v4344 = vadd.f32 %v4303, %v4343
    %v4345 = vpop.f32.mrb[0].mxu0
    %v4346 = vadd.f32 %v4305, %v4345
    %v4347 = vpop.f32.mrb[0].mxu0
    %v4348 = vpop.f32.mrb[0].mxu0
    %4349 = vdwg.mxu0
    %4350 = vmatprep.subr.bf16.mxu0 %v3116
    %4351 = vmatpush1.bf16.msra.mxu0 %v3115
    %4352 = vmatprep.subr.bf16.mxu0 %v3120
    %4353 = vmatpush1.bf16.msra.mxu0 %v3119
    %4354 = vmatprep.subr.bf16.mxu0 %v3124
    %4355 = vmatpush1.bf16.msra.mxu0 %v3123
    %4356 = vmatprep.subr.bf16.mxu0 %v3128
    %4357 = vmatpush1.bf16.msra.mxu0 %v3127
    %4358 = vmatprep.subr.bf16.mxu0 %v3132
    %4359 = vmatpush1.bf16.msra.mxu0 %v3131
    %4360 = vmatprep.subr.bf16.mxu0 %v3136
    %4361 = vmatpush1.bf16.msra.mxu0 %v3135
    %4362 = vmatprep.subr.bf16.mxu0 %v3140
    %4363 = vmatpush1.bf16.msra.mxu0 %v3139
    %4364 = vmatprep.subr.bf16.mxu0 %v3144
    %4365 = vmatpush1.bf16.msra.mxu0 %v3143
    %4366 = vmatprep.subr.bf16.mxu0 %v3148
    %4367 = vmatpush1.bf16.msra.mxu0 %v3147
    %4368 = vmatprep.subr.bf16.mxu0 %v3152
    %4369 = vmatpush1.bf16.msra.mxu0 %v3151
    %4370 = vmatprep.subr.bf16.mxu0 %v3156
    %4371 = vmatpush1.bf16.msra.mxu0 %v3155
    %4372 = vmatprep.subr.bf16.mxu0 %v3160
    %4373 = vmatpush1.bf16.msra.mxu0 %v3159
    %4374 = vmatprep.subr.bf16.mxu0 %v3164
    %4375 = vmatpush1.bf16.msra.mxu0 %v3163
    %4376 = vmatprep.subr.bf16.mxu0 %v3168
    %4377 = vmatpush1.bf16.msra.mxu0 %v3167
    %4378 = vmatprep.subr.bf16.mxu0 %v3172
    %4379 = vmatpush1.bf16.msra.mxu0 %v3171
    %4380 = vmatprep.subr.bf16.mxu0 %v3176
    %4381 = vmatpush1.bf16.msra.mxu0 %v3175
    %4382 = vmatprep.mubr.bf16.mxu0 %v718
    %4383 = vmatmul.mubr.bf16.gmra.mrb[0].mxu0 %v717
    %v4384 = vpop.f32.mrb[0].mxu0
    %v4385 = vadd.f32 %v4344, %v4384
    %v4386 = vpop.f32.mrb[0].mxu0
    %v4387 = vadd.f32 %v4346, %v4386
    %v4388 = vpop.f32.mrb[0].mxu0
    %v4389 = vpop.f32.mrb[0].mxu0
    %4390 = vdwg.mxu0
    %4391 = vmatprep.subr.bf16.mxu0 %v3180
    %4392 = vmatpush1.bf16.msra.mxu0 %v3179
    %4393 = vmatprep.subr.bf16.mxu0 %v3184
    %4394 = vmatpush1.bf16.msra.mxu0 %v3183
    %4395 = vmatprep.subr.bf16.mxu0 %v3188
    %4396 = vmatpush1.bf16.msra.mxu0 %v3187
    %4397 = vmatprep.subr.bf16.mxu0 %v3192
    %4398 = vmatpush1.bf16.msra.mxu0 %v3191
    %4399 = vmatprep.subr.bf16.mxu0 %v3196
    %4400 = vmatpush1.bf16.msra.mxu0 %v3195
    %4401 = vmatprep.subr.bf16.mxu0 %v3200
    %4402 = vmatpush1.bf16.msra.mxu0 %v3199
    %4403 = vmatprep.subr.bf16.mxu0 %v3204
    %4404 = vmatpush1.bf16.msra.mxu0 %v3203
    %4405 = vmatprep.subr.bf16.mxu0 %v3208
    %4406 = vmatpush1.bf16.msra.mxu0 %v3207
    %4407 = vmatprep.subr.bf16.mxu0 %v3212
    %4408 = vmatpush1.bf16.msra.mxu0 %v3211
    %4409 = vmatprep.subr.bf16.mxu0 %v3216
    %4410 = vmatpush1.bf16.msra.mxu0 %v3215
    %4411 = vmatprep.subr.bf16.mxu0 %v3220
    %4412 = vmatpush1.bf16.msra.mxu0 %v3219
    %4413 = vmatprep.subr.bf16.mxu0 %v3224
    %4414 = vmatpush1.bf16.msra.mxu0 %v3223
    %4415 = vmatprep.subr.bf16.mxu0 %v3228
    %4416 = vmatpush1.bf16.msra.mxu0 %v3227
    %4417 = vmatprep.subr.bf16.mxu0 %v3232
    %4418 = vmatpush1.bf16.msra.mxu0 %v3231
    %4419 = vmatprep.subr.bf16.mxu0 %v3236
    %4420 = vmatpush1.bf16.msra.mxu0 %v3235
    %4421 = vmatprep.subr.bf16.mxu0 %v3240
    %4422 = vmatpush1.bf16.msra.mxu0 %v3239
    %4423 = vmatprep.mubr.bf16.mxu0 %v720
    %4424 = vmatmul.mubr.bf16.gmra.mrb[0].mxu0 %v719
    %v4425 = vpop.f32.mrb[0].mxu0
    %v4426 = vadd.f32 %v4385, %v4425
    %v4427 = vpop.f32.mrb[0].mxu0
    %v4428 = vadd.f32 %v4387, %v4427
    %v4429 = vpop.f32.mrb[0].mxu0
    %v4430 = vpop.f32.mrb[0].mxu0
    %4431 = vdwg.mxu0
    %4432 = vmatprep.subr.bf16.mxu0 %v3244
    %4433 = vmatpush1.bf16.msra.mxu0 %v3243
    %4434 = vmatprep.subr.bf16.mxu0 %v3248
    %4435 = vmatpush1.bf16.msra.mxu0 %v3247
    %4436 = vmatprep.subr.bf16.mxu0 %v3252
    %4437 = vmatpush1.bf16.msra.mxu0 %v3251
    %4438 = vmatprep.subr.bf16.mxu0 %v3256
    %4439 = vmatpush1.bf16.msra.mxu0 %v3255
    %4440 = vmatprep.subr.bf16.mxu0 %v3260
    %4441 = vmatpush1.bf16.msra.mxu0 %v3259
    %4442 = vmatprep.subr.bf16.mxu0 %v3264
    %4443 = vmatpush1.bf16.msra.mxu0 %v3263
    %4444 = vmatprep.subr.bf16.mxu0 %v3268
    %4445 = vmatpush1.bf16.msra.mxu0 %v3267
    %4446 = vmatprep.subr.bf16.mxu0 %v3272
    %4447 = vmatpush1.bf16.msra.mxu0 %v3271
    %4448 = vmatprep.subr.bf16.mxu0 %v3276
    %4449 = vmatpush1.bf16.msra.mxu0 %v3275
    %4450 = vmatprep.subr.bf16.mxu0 %v3280
    %4451 = vmatpush1.bf16.msra.mxu0 %v3279
    %4452 = vmatprep.subr.bf16.mxu0 %v3284
    %4453 = vmatpush1.bf16.msra.mxu0 %v3283
    %4454 = vmatprep.subr.bf16.mxu0 %v3288
    %4455 = vmatpush1.bf16.msra.mxu0 %v3287
    %4456 = vmatprep.subr.bf16.mxu0 %v3292
    %4457 = vmatpush1.bf16.msra.mxu0 %v3291
    %4458 = vmatprep.subr.bf16.mxu0 %v3296
    %4459 = vmatpush1.bf16.msra.mxu0 %v3295
    %4460 = vmatprep.subr.bf16.mxu0 %v3300
    %4461 = vmatpush1.bf16.msra.mxu0 %v3299
    %4462 = vmatprep.subr.bf16.mxu0 %v3304
    %4463 = vmatpush1.bf16.msra.mxu0 %v3303
    %4464 = vmatprep.mubr.bf16.mxu0 %v722
    %4465 = vmatmul.mubr.bf16.gmra.mrb[0].mxu0 %v721
    %v4466 = vpop.f32.mrb[0].mxu0
    %v4467 = vadd.f32 %v4426, %v4466
    %v4468 = vpop.f32.mrb[0].mxu0
    %v4469 = vadd.f32 %v4428, %v4468
    %v4470 = vpop.f32.mrb[0].mxu0
    %v4471 = vpop.f32.mrb[0].mxu0
    %4472 = vdwg.mxu0
    %v4473 = vmax.f32 %v4139, 0.0
    %v4474 = vmax.f32 %v4141, 0.0
    %v4475 = vmax.f32 %v4467, 0.0
    %v4476 = vmax.f32 %v4469, 0.0
    %v4477 = vpack.c.bf16 %v4473, %v4473
    %v4478 = vpack.c.bf16 %v4474, %v4474
    %v4479 = vpack.c.bf16 %v4475, %v4475
    %v4480 = vpack.c.bf16 %v4476, %v4476
    %v4481 = vld [vmem:[#allocation10] sm:$0xff]
    %v4482 = vld [vmem:[#allocation10 + $0x8] sm:$0xff]
    %v4483 = vld [vmem:[#allocation10 + $0x10] sm:$0xff]
    %v4484 = vld [vmem:[#allocation10 + $0x18] sm:$0xff]
    %v4485 = vld [vmem:[#allocation10 + $0x20] sm:$0xff]
    %v4486 = vld [vmem:[#allocation10 + $0x28] sm:$0xff]
    %v4487 = vld [vmem:[#allocation10 + $0x30] sm:$0xff]
    %v4488 = vld [vmem:[#allocation10 + $0x38] sm:$0xff]
    %v4489 = vld [vmem:[#allocation10 + $0x40] sm:$0xff]
    %v4490 = vld [vmem:[#allocation10 + $0x48] sm:$0xff]
    %v4491 = vld [vmem:[#allocation10 + $0x50] sm:$0xff]
    %v4492 = vld [vmem:[#allocation10 + $0x58] sm:$0xff]
    %v4493 = vld [vmem:[#allocation10 + $0x60] sm:$0xff]
    %v4494 = vld [vmem:[#allocation10 + $0x68] sm:$0xff]
    %v4495 = vld [vmem:[#allocation10 + $0x70] sm:$0xff]
    %v4496 = vld [vmem:[#allocation10 + $0x78] sm:$0xff]
    %v4497 = vld [vmem:[#allocation10 + $0x80] sm:$0xff]
    %v4498 = vld [vmem:[#allocation10 + $0x88] sm:$0xff]
    %v4499 = vld [vmem:[#allocation10 + $0x90] sm:$0xff]
    %v4500 = vld [vmem:[#allocation10 + $0x98] sm:$0xff]
    %v4501 = vld [vmem:[#allocation10 + $0xa0] sm:$0xff]
    %v4502 = vld [vmem:[#allocation10 + $0xa8] sm:$0xff]
    %v4503 = vld [vmem:[#allocation10 + $0xb0] sm:$0xff]
    %v4504 = vld [vmem:[#allocation10 + $0xb8] sm:$0xff]
    %v4505 = vld [vmem:[#allocation10 + $0xc0] sm:$0xff]
    %v4506 = vld [vmem:[#allocation10 + $0xc8] sm:$0xff]
    %v4507 = vld [vmem:[#allocation10 + $0xd0] sm:$0xff]
    %v4508 = vld [vmem:[#allocation10 + $0xd8] sm:$0xff]
    %v4509 = vld [vmem:[#allocation10 + $0xe0] sm:$0xff]
    %v4510 = vld [vmem:[#allocation10 + $0xe8] sm:$0xff]
    %v4511 = vld [vmem:[#allocation10 + $0xf0] sm:$0xff]
    %v4512 = vld [vmem:[#allocation10 + $0xf8] sm:$0xff]
    %v4513 = vld [vmem:[#allocation10 + $0x100] sm:$0xff]
    %v4514 = vld [vmem:[#allocation10 + $0x108] sm:$0xff]
    %v4515 = vld [vmem:[#allocation10 + $0x110] sm:$0xff]
    %v4516 = vld [vmem:[#allocation10 + $0x118] sm:$0xff]
    %v4517 = vld [vmem:[#allocation10 + $0x120] sm:$0xff]
    %v4518 = vld [vmem:[#allocation10 + $0x128] sm:$0xff]
    %v4519 = vld [vmem:[#allocation10 + $0x130] sm:$0xff]
    %v4520 = vld [vmem:[#allocation10 + $0x138] sm:$0xff]
    %v4521 = vld [vmem:[#allocation10 + $0x140] sm:$0xff]
    %v4522 = vld [vmem:[#allocation10 + $0x148] sm:$0xff]
    %v4523 = vld [vmem:[#allocation10 + $0x150] sm:$0xff]
    %v4524 = vld [vmem:[#allocation10 + $0x158] sm:$0xff]
    %v4525 = vld [vmem:[#allocation10 + $0x160] sm:$0xff]
    %v4526 = vld [vmem:[#allocation10 + $0x168] sm:$0xff]
    %v4527 = vld [vmem:[#allocation10 + $0x170] sm:$0xff]
    %v4528 = vld [vmem:[#allocation10 + $0x178] sm:$0xff]
    %v4529 = vld [vmem:[#allocation10 + $0x180] sm:$0xff]
    %v4530 = vld [vmem:[#allocation10 + $0x188] sm:$0xff]
    %v4531 = vld [vmem:[#allocation10 + $0x190] sm:$0xff]
    %v4532 = vld [vmem:[#allocation10 + $0x198] sm:$0xff]
    %v4533 = vld [vmem:[#allocation10 + $0x1a0] sm:$0xff]
    %v4534 = vld [vmem:[#allocation10 + $0x1a8] sm:$0xff]
    %v4535 = vld [vmem:[#allocation10 + $0x1b0] sm:$0xff]
    %v4536 = vld [vmem:[#allocation10 + $0x1b8] sm:$0xff]
    %v4537 = vld [vmem:[#allocation10 + $0x1c0] sm:$0xff]
    %v4538 = vld [vmem:[#allocation10 + $0x1c8] sm:$0xff]
    %v4539 = vld [vmem:[#allocation10 + $0x1d0] sm:$0xff]
    %v4540 = vld [vmem:[#allocation10 + $0x1d8] sm:$0xff]
    %v4541 = vld [vmem:[#allocation10 + $0x1e0] sm:$0xff]
    %v4542 = vld [vmem:[#allocation10 + $0x1e8] sm:$0xff]
    %v4543 = vld [vmem:[#allocation10 + $0x1f0] sm:$0xff]
    %v4544 = vld [vmem:[#allocation10 + $0x1f8] sm:$0xff]
    %v4545 = vld [vmem:[#allocation11] sm:$0x3]
    %v4547 = vlaneseq
    %v4548 = vshrl.u32 %v4547, 7
    %v4549 = vsub.s32 0, %v4548
    %v4550 = vrot.slane %v4545, %v4549
    %v4551 = vlaneseq
    %v4552 = vshrl.u32 %v4551, 7
    %v4553 = vsub.s32 1, %v4552
    %v4554 = vrot.slane %v4545, %v4553
    %v4621 = vunpack.c.l.b16 %v4481
    %v4622 = vunpack.c.h.b16 %v4481
    %v4623 = vunpack.c.l.b16 %v4482
    %v4624 = vunpack.c.h.b16 %v4482
    %v4625 = vunpack.c.l.b16 %v4483
    %v4626 = vunpack.c.h.b16 %v4483
    %v4627 = vunpack.c.l.b16 %v4484
    %v4628 = vunpack.c.h.b16 %v4484
    %v4629 = vunpack.c.l.b16 %v4485
    %v4630 = vunpack.c.h.b16 %v4485
    %v4631 = vunpack.c.l.b16 %v4486
    %v4632 = vunpack.c.h.b16 %v4486
    %v4633 = vunpack.c.l.b16 %v4487
    %v4634 = vunpack.c.h.b16 %v4487
    %v4635 = vunpack.c.l.b16 %v4488
    %v4636 = vunpack.c.h.b16 %v4488
    %v4637 = vunpack.c.l.b16 %v4489
    %v4638 = vunpack.c.h.b16 %v4489
    %v4639 = vunpack.c.l.b16 %v4490
    %v4640 = vunpack.c.h.b16 %v4490
    %v4641 = vunpack.c.l.b16 %v4491
    %v4642 = vunpack.c.h.b16 %v4491
    %v4643 = vunpack.c.l.b16 %v4492
    %v4644 = vunpack.c.h.b16 %v4492
    %v4645 = vunpack.c.l.b16 %v4493
    %v4646 = vunpack.c.h.b16 %v4493
    %v4647 = vunpack.c.l.b16 %v4494
    %v4648 = vunpack.c.h.b16 %v4494
    %v4649 = vunpack.c.l.b16 %v4495
    %v4650 = vunpack.c.h.b16 %v4495
    %v4651 = vunpack.c.l.b16 %v4496
    %v4652 = vunpack.c.h.b16 %v4496
    %v4653 = vunpack.c.l.b16 %v4497
    %v4654 = vunpack.c.h.b16 %v4497
    %v4655 = vunpack.c.l.b16 %v4498
    %v4656 = vunpack.c.h.b16 %v4498
    %v4657 = vunpack.c.l.b16 %v4499
    %v4658 = vunpack.c.h.b16 %v4499
    %v4659 = vunpack.c.l.b16 %v4500
    %v4660 = vunpack.c.h.b16 %v4500
    %v4661 = vunpack.c.l.b16 %v4501
    %v4662 = vunpack.c.h.b16 %v4501
    %v4663 = vunpack.c.l.b16 %v4502
    %v4664 = vunpack.c.h.b16 %v4502
    %v4665 = vunpack.c.l.b16 %v4503
    %v4666 = vunpack.c.h.b16 %v4503
    %v4667 = vunpack.c.l.b16 %v4504
    %v4668 = vunpack.c.h.b16 %v4504
    %v4669 = vunpack.c.l.b16 %v4505
    %v4670 = vunpack.c.h.b16 %v4505
    %v4671 = vunpack.c.l.b16 %v4506
    %v4672 = vunpack.c.h.b16 %v4506
    %v4673 = vunpack.c.l.b16 %v4507
    %v4674 = vunpack.c.h.b16 %v4507
    %v4675 = vunpack.c.l.b16 %v4508
    %v4676 = vunpack.c.h.b16 %v4508
    %v4677 = vunpack.c.l.b16 %v4509
    %v4678 = vunpack.c.h.b16 %v4509
    %v4679 = vunpack.c.l.b16 %v4510
    %v4680 = vunpack.c.h.b16 %v4510
    %v4681 = vunpack.c.l.b16 %v4511
    %v4682 = vunpack.c.h.b16 %v4511
    %v4683 = vunpack.c.l.b16 %v4512
    %v4684 = vunpack.c.h.b16 %v4512
    %v4685 = vunpack.c.l.b16 %v4513
    %v4686 = vunpack.c.h.b16 %v4513
    %v4687 = vunpack.c.l.b16 %v4514
    %v4688 = vunpack.c.h.b16 %v4514
    %v4689 = vunpack.c.l.b16 %v4515
    %v4690 = vunpack.c.h.b16 %v4515
    %v4691 = vunpack.c.l.b16 %v4516
    %v4692 = vunpack.c.h.b16 %v4516
    %v4693 = vunpack.c.l.b16 %v4517
    %v4694 = vunpack.c.h.b16 %v4517
    %v4695 = vunpack.c.l.b16 %v4518
    %v4696 = vunpack.c.h.b16 %v4518
    %v4697 = vunpack.c.l.b16 %v4519
    %v4698 = vunpack.c.h.b16 %v4519
    %v4699 = vunpack.c.l.b16 %v4520
    %v4700 = vunpack.c.h.b16 %v4520
    %v4701 = vunpack.c.l.b16 %v4521
    %v4702 = vunpack.c.h.b16 %v4521
    %v4703 = vunpack.c.l.b16 %v4522
    %v4704 = vunpack.c.h.b16 %v4522
    %v4705 = vunpack.c.l.b16 %v4523
    %v4706 = vunpack.c.h.b16 %v4523
    %v4707 = vunpack.c.l.b16 %v4524
    %v4708 = vunpack.c.h.b16 %v4524
    %v4709 = vunpack.c.l.b16 %v4525
    %v4710 = vunpack.c.h.b16 %v4525
    %v4711 = vunpack.c.l.b16 %v4526
    %v4712 = vunpack.c.h.b16 %v4526
    %v4713 = vunpack.c.l.b16 %v4527
    %v4714 = vunpack.c.h.b16 %v4527
    %v4715 = vunpack.c.l.b16 %v4528
    %v4716 = vunpack.c.h.b16 %v4528
    %v4717 = vunpack.c.l.b16 %v4529
    %v4718 = vunpack.c.h.b16 %v4529
    %v4719 = vunpack.c.l.b16 %v4530
    %v4720 = vunpack.c.h.b16 %v4530
    %v4721 = vunpack.c.l.b16 %v4531
    %v4722 = vunpack.c.h.b16 %v4531
    %v4723 = vunpack.c.l.b16 %v4532
    %v4724 = vunpack.c.h.b16 %v4532
    %v4725 = vunpack.c.l.b16 %v4533
    %v4726 = vunpack.c.h.b16 %v4533
    %v4727 = vunpack.c.l.b16 %v4534
    %v4728 = vunpack.c.h.b16 %v4534
    %v4729 = vunpack.c.l.b16 %v4535
    %v4730 = vunpack.c.h.b16 %v4535
    %v4731 = vunpack.c.l.b16 %v4536
    %v4732 = vunpack.c.h.b16 %v4536
    %v4733 = vunpack.c.l.b16 %v4537
    %v4734 = vunpack.c.h.b16 %v4537
    %v4735 = vunpack.c.l.b16 %v4538
    %v4736 = vunpack.c.h.b16 %v4538
    %v4737 = vunpack.c.l.b16 %v4539
    %v4738 = vunpack.c.h.b16 %v4539
    %v4739 = vunpack.c.l.b16 %v4540
    %v4740 = vunpack.c.h.b16 %v4540
    %v4741 = vunpack.c.l.b16 %v4541
    %v4742 = vunpack.c.h.b16 %v4541
    %v4743 = vunpack.c.l.b16 %v4542
    %v4744 = vunpack.c.h.b16 %v4542
    %v4745 = vunpack.c.l.b16 %v4543
    %v4746 = vunpack.c.h.b16 %v4543
    %v4747 = vunpack.c.l.b16 %v4544
    %v4748 = vunpack.c.h.b16 %v4544
    %v4749 = vpack.c.b16 %v4623, %v4621
    %v4750 = vpack.c.b16 %v4624, %v4622
    %v4751 = vpack.c.b16 %v4627, %v4625
    %v4752 = vpack.c.b16 %v4628, %v4626
    %v4753 = vpack.c.b16 %v4631, %v4629
    %v4754 = vpack.c.b16 %v4632, %v4630
    %v4755 = vpack.c.b16 %v4635, %v4633
    %v4756 = vpack.c.b16 %v4636, %v4634
    %v4757 = vpack.c.b16 %v4639, %v4637
    %v4758 = vpack.c.b16 %v4640, %v4638
    %v4759 = vpack.c.b16 %v4643, %v4641
    %v4760 = vpack.c.b16 %v4644, %v4642
    %v4761 = vpack.c.b16 %v4647, %v4645
    %v4762 = vpack.c.b16 %v4648, %v4646
    %v4763 = vpack.c.b16 %v4651, %v4649
    %v4764 = vpack.c.b16 %v4652, %v4650
    %v4765 = vpack.c.b16 %v4655, %v4653
    %v4766 = vpack.c.b16 %v4656, %v4654
    %v4767 = vpack.c.b16 %v4659, %v4657
    %v4768 = vpack.c.b16 %v4660, %v4658
    %v4769 = vpack.c.b16 %v4663, %v4661
    %v4770 = vpack.c.b16 %v4664, %v4662
    %v4771 = vpack.c.b16 %v4667, %v4665
    %v4772 = vpack.c.b16 %v4668, %v4666
    %v4773 = vpack.c.b16 %v4671, %v4669
    %v4774 = vpack.c.b16 %v4672, %v4670
    %v4775 = vpack.c.b16 %v4675, %v4673
    %v4776 = vpack.c.b16 %v4676, %v4674
    %v4777 = vpack.c.b16 %v4679, %v4677
    %v4778 = vpack.c.b16 %v4680, %v4678
    %v4779 = vpack.c.b16 %v4683, %v4681
    %v4780 = vpack.c.b16 %v4684, %v4682
    %v4781 = vpack.c.b16 %v4687, %v4685
    %v4782 = vpack.c.b16 %v4688, %v4686
    %v4783 = vpack.c.b16 %v4691, %v4689
    %v4784 = vpack.c.b16 %v4692, %v4690
    %v4785 = vpack.c.b16 %v4695, %v4693
    %v4786 = vpack.c.b16 %v4696, %v4694
    %v4787 = vpack.c.b16 %v4699, %v4697
    %v4788 = vpack.c.b16 %v4700, %v4698
    %v4789 = vpack.c.b16 %v4703, %v4701
    %v4790 = vpack.c.b16 %v4704, %v4702
    %v4791 = vpack.c.b16 %v4707, %v4705
    %v4792 = vpack.c.b16 %v4708, %v4706
    %v4793 = vpack.c.b16 %v4711, %v4709
    %v4794 = vpack.c.b16 %v4712, %v4710
    %v4795 = vpack.c.b16 %v4715, %v4713
    %v4796 = vpack.c.b16 %v4716, %v4714
    %v4797 = vpack.c.b16 %v4719, %v4717
    %v4798 = vpack.c.b16 %v4720, %v4718
    %v4799 = vpack.c.b16 %v4723, %v4721
    %v4800 = vpack.c.b16 %v4724, %v4722
    %v4801 = vpack.c.b16 %v4727, %v4725
    %v4802 = vpack.c.b16 %v4728, %v4726
    %v4803 = vpack.c.b16 %v4731, %v4729
    %v4804 = vpack.c.b16 %v4732, %v4730
    %v4805 = vpack.c.b16 %v4735, %v4733
    %v4806 = vpack.c.b16 %v4736, %v4734
    %v4807 = vpack.c.b16 %v4739, %v4737
    %v4808 = vpack.c.b16 %v4740, %v4738
    %v4809 = vpack.c.b16 %v4743, %v4741
    %v4810 = vpack.c.b16 %v4744, %v4742
    %v4811 = vpack.c.b16 %v4747, %v4745
    %v4812 = vpack.c.b16 %v4748, %v4746
    %4877 = vmatprep.subr.bf16.mxu0 %v4750
    %4878 = vmatpush1.bf16.msra.mxu0 %v4749
    %4879 = vmatprep.subr.bf16.mxu0 %v4752
    %4880 = vmatpush1.bf16.msra.mxu0 %v4751
    %4881 = vmatprep.subr.bf16.mxu0 %v4754
    %4882 = vmatpush1.bf16.msra.mxu0 %v4753
    %4883 = vmatprep.subr.bf16.mxu0 %v4756
    %4884 = vmatpush1.bf16.msra.mxu0 %v4755
    %4885 = vmatprep.subr.bf16.mxu0 %v4758
    %4886 = vmatpush1.bf16.msra.mxu0 %v4757
    %4887 = vmatprep.subr.bf16.mxu0 %v4760
    %4888 = vmatpush1.bf16.msra.mxu0 %v4759
    %4889 = vmatprep.subr.bf16.mxu0 %v4762
    %4890 = vmatpush1.bf16.msra.mxu0 %v4761
    %4891 = vmatprep.subr.bf16.mxu0 %v4764
    %4892 = vmatpush1.bf16.msra.mxu0 %v4763
    %4893 = vmatprep.subr.bf16.mxu0 %v4766
    %4894 = vmatpush1.bf16.msra.mxu0 %v4765
    %4895 = vmatprep.subr.bf16.mxu0 %v4768
    %4896 = vmatpush1.bf16.msra.mxu0 %v4767
    %4897 = vmatprep.subr.bf16.mxu0 %v4770
    %4898 = vmatpush1.bf16.msra.mxu0 %v4769
    %4899 = vmatprep.subr.bf16.mxu0 %v4772
    %4900 = vmatpush1.bf16.msra.mxu0 %v4771
    %4901 = vmatprep.subr.bf16.mxu0 %v4774
    %4902 = vmatpush1.bf16.msra.mxu0 %v4773
    %4903 = vmatprep.subr.bf16.mxu0 %v4776
    %4904 = vmatpush1.bf16.msra.mxu0 %v4775
    %4905 = vmatprep.subr.bf16.mxu0 %v4778
    %4906 = vmatpush1.bf16.msra.mxu0 %v4777
    %4907 = vmatprep.subr.bf16.mxu0 %v4780
    %4908 = vmatpush1.bf16.msra.mxu0 %v4779
    %4909 = vmatprep.mubr.bf16.mxu0 %v4478
    %4910 = vmatmul.mubr.bf16.gmra.mrb[0].mxu0 %v4477
    %v4911 = vpop.f32.mrb[0].mxu0
    %v4912 = vadd.f32 %v4550, %v4911
    %v4913 = vpop.f32.mrb[0].mxu0
    %v4914 = vadd.f32 %v4554, %v4913
    %v4915 = vpop.f32.mrb[0].mxu0
    %v4916 = vpop.f32.mrb[0].mxu0
    %4917 = vdwg.mxu0
    %4918 = vmatprep.subr.bf16.mxu0 %v4782
    %4919 = vmatpush1.bf16.msra.mxu0 %v4781
    %4920 = vmatprep.subr.bf16.mxu0 %v4784
    %4921 = vmatpush1.bf16.msra.mxu0 %v4783
    %4922 = vmatprep.subr.bf16.mxu0 %v4786
    %4923 = vmatpush1.bf16.msra.mxu0 %v4785
    %4924 = vmatprep.subr.bf16.mxu0 %v4788
    %4925 = vmatpush1.bf16.msra.mxu0 %v4787
    %4926 = vmatprep.subr.bf16.mxu0 %v4790
    %4927 = vmatpush1.bf16.msra.mxu0 %v4789
    %4928 = vmatprep.subr.bf16.mxu0 %v4792
    %4929 = vmatpush1.bf16.msra.mxu0 %v4791
    %4930 = vmatprep.subr.bf16.mxu0 %v4794
    %4931 = vmatpush1.bf16.msra.mxu0 %v4793
    %4932 = vmatprep.subr.bf16.mxu0 %v4796
    %4933 = vmatpush1.bf16.msra.mxu0 %v4795
    %4934 = vmatprep.subr.bf16.mxu0 %v4798
    %4935 = vmatpush1.bf16.msra.mxu0 %v4797
    %4936 = vmatprep.subr.bf16.mxu0 %v4800
    %4937 = vmatpush1.bf16.msra.mxu0 %v4799
    %4938 = vmatprep.subr.bf16.mxu0 %v4802
    %4939 = vmatpush1.bf16.msra.mxu0 %v4801
    %4940 = vmatprep.subr.bf16.mxu0 %v4804
    %4941 = vmatpush1.bf16.msra.mxu0 %v4803
    %4942 = vmatprep.subr.bf16.mxu0 %v4806
    %4943 = vmatpush1.bf16.msra.mxu0 %v4805
    %4944 = vmatprep.subr.bf16.mxu0 %v4808
    %4945 = vmatpush1.bf16.msra.mxu0 %v4807
    %4946 = vmatprep.subr.bf16.mxu0 %v4810
    %4947 = vmatpush1.bf16.msra.mxu0 %v4809
    %4948 = vmatprep.subr.bf16.mxu0 %v4812
    %4949 = vmatpush1.bf16.msra.mxu0 %v4811
    %4950 = vmatprep.mubr.bf16.mxu0 %v4480
    %4951 = vmatmul.mubr.bf16.gmra.mrb[0].mxu0 %v4479
    %v4952 = vpop.f32.mrb[0].mxu0
    %v4953 = vadd.f32 %v4912, %v4952
    %v4954 = vpop.f32.mrb[0].mxu0
    %v4955 = vadd.f32 %v4914, %v4954
    %v4956 = vpop.f32.mrb[0].mxu0
    %v4957 = vpop.f32.mrb[0].mxu0
    %4958 = vdwg.mxu0
    %v4959 = vmax.f32 %v4953, 0.0
    %v4960 = vmax.f32 %v4955, 0.0
    %v4961 = vpack.c.bf16 %v4959, %v4959
    %v4962 = vpack.c.bf16 %v4960, %v4960
    %v4963 = vld [vmem:[#allocation13] sm:$0xf]
    %v4964 = vld [vmem:[#allocation13 + $0x4] sm:$0xf]
    %v4965 = vld [vmem:[#allocation13 + $0x8] sm:$0xf]
    %v4966 = vld [vmem:[#allocation13 + $0xc] sm:$0xf]
    %v4967 = vld [vmem:[#allocation13 + $0x10] sm:$0xf]
    %v4968 = vld [vmem:[#allocation13 + $0x14] sm:$0xf]
    %v4969 = vld [vmem:[#allocation13 + $0x18] sm:$0xf]
    %v4970 = vld [vmem:[#allocation13 + $0x1c] sm:$0xf]
    %v4971 = vld [vmem:[#allocation13 + $0x20] sm:$0xf]
    %v4972 = vld [vmem:[#allocation13 + $0x24] sm:$0xf]
    %v4973 = vld [vmem:[#allocation13 + $0x28] sm:$0xf]
    %v4974 = vld [vmem:[#allocation13 + $0x2c] sm:$0xf]
    %v4975 = vld [vmem:[#allocation13 + $0x30] sm:$0xf]
    %v4976 = vld [vmem:[#allocation13 + $0x34] sm:$0xf]
    %v4977 = vld [vmem:[#allocation13 + $0x38] sm:$0xf]
    %v4978 = vld [vmem:[#allocation13 + $0x3c] sm:$0xf]
    %v4979 = vld [vmem:[#allocation13 + $0x40] sm:$0xf]
    %v4980 = vld [vmem:[#allocation13 + $0x44] sm:$0xf]
    %v4981 = vld [vmem:[#allocation13 + $0x48] sm:$0xf]
    %v4982 = vld [vmem:[#allocation13 + $0x4c] sm:$0xf]
    %v4983 = vld [vmem:[#allocation13 + $0x50] sm:$0xf]
    %v4984 = vld [vmem:[#allocation13 + $0x54] sm:$0xf]
    %v4985 = vld [vmem:[#allocation13 + $0x58] sm:$0xf]
    %v4986 = vld [vmem:[#allocation13 + $0x5c] sm:$0xf]
    %v4987 = vld [vmem:[#allocation13 + $0x60] sm:$0xf]
    %v4988 = vld [vmem:[#allocation13 + $0x64] sm:$0xf]
    %v4989 = vld [vmem:[#allocation13 + $0x68] sm:$0xf]
    %v4990 = vld [vmem:[#allocation13 + $0x6c] sm:$0xf]
    %v4991 = vld [vmem:[#allocation13 + $0x70] sm:$0xf]
    %v4992 = vld [vmem:[#allocation13 + $0x74] sm:$0xf]
    %v4993 = vld [vmem:[#allocation13 + $0x78] sm:$0xf]
    %v4994 = vld [vmem:[#allocation13 + $0x7c] sm:$0xf]
    %v4995 = vld [vmem:[#allocation14] sm:$0x1]
    %v4997 = vlaneseq
    %v4998 = vshrl.u32 %v4997, 7
    %v4999 = vsub.s32 0, %v4998
    %v5000 = vrot.slane %v4995, %v4999
    %v5034 = vunpack.c.l.b16 %v4963
    %v5035 = vunpack.c.l.b16 %v4964
    %v5036 = vunpack.c.l.b16 %v4965
    %v5037 = vunpack.c.l.b16 %v4966
    %v5038 = vunpack.c.l.b16 %v4967
    %v5039 = vunpack.c.l.b16 %v4968
    %v5040 = vunpack.c.l.b16 %v4969
    %v5041 = vunpack.c.l.b16 %v4970
    %v5042 = vunpack.c.l.b16 %v4971
    %v5043 = vunpack.c.l.b16 %v4972
    %v5044 = vunpack.c.l.b16 %v4973
    %v5045 = vunpack.c.l.b16 %v4974
    %v5046 = vunpack.c.l.b16 %v4975
    %v5047 = vunpack.c.l.b16 %v4976
    %v5048 = vunpack.c.l.b16 %v4977
    %v5049 = vunpack.c.l.b16 %v4978
    %v5050 = vunpack.c.l.b16 %v4979
    %v5051 = vunpack.c.l.b16 %v4980
    %v5052 = vunpack.c.l.b16 %v4981
    %v5053 = vunpack.c.l.b16 %v4982
    %v5054 = vunpack.c.l.b16 %v4983
    %v5055 = vunpack.c.l.b16 %v4984
    %v5056 = vunpack.c.l.b16 %v4985
    %v5057 = vunpack.c.l.b16 %v4986
    %v5058 = vunpack.c.l.b16 %v4987
    %v5059 = vunpack.c.l.b16 %v4988
    %v5060 = vunpack.c.l.b16 %v4989
    %v5061 = vunpack.c.l.b16 %v4990
    %v5062 = vunpack.c.l.b16 %v4991
    %v5063 = vunpack.c.l.b16 %v4992
    %v5064 = vunpack.c.l.b16 %v4993
    %v5065 = vunpack.c.l.b16 %v4994
    %v5066 = vpack.c.b16 %v5035, %v5034
    %v5067 = vpack.c.b16 %v5037, %v5036
    %v5068 = vpack.c.b16 %v5039, %v5038
    %v5069 = vpack.c.b16 %v5041, %v5040
    %v5070 = vpack.c.b16 %v5043, %v5042
    %v5071 = vpack.c.b16 %v5045, %v5044
    %v5072 = vpack.c.b16 %v5047, %v5046
    %v5073 = vpack.c.b16 %v5049, %v5048
    %v5074 = vpack.c.b16 %v5051, %v5050
    %v5075 = vpack.c.b16 %v5053, %v5052
    %v5076 = vpack.c.b16 %v5055, %v5054
    %v5077 = vpack.c.b16 %v5057, %v5056
    %v5078 = vpack.c.b16 %v5059, %v5058
    %v5079 = vpack.c.b16 %v5061, %v5060
    %v5080 = vpack.c.b16 %v5063, %v5062
    %v5081 = vpack.c.b16 %v5065, %v5064
    %5098 = vmatprep.subr.bf16.mxu0 0
    %5099 = vmatpush1.bf16.msra.mxu0 %v5066
    %5100 = vmatprep.subr.bf16.mxu0 0
    %5101 = vmatpush1.bf16.msra.mxu0 %v5067
    %5102 = vmatprep.subr.bf16.mxu0 0
    %5103 = vmatpush1.bf16.msra.mxu0 %v5068
    %5104 = vmatprep.subr.bf16.mxu0 0
    %5105 = vmatpush1.bf16.msra.mxu0 %v5069
    %5106 = vmatprep.subr.bf16.mxu0 0
    %5107 = vmatpush1.bf16.msra.mxu0 %v5070
    %5108 = vmatprep.subr.bf16.mxu0 0
    %5109 = vmatpush1.bf16.msra.mxu0 %v5071
    %5110 = vmatprep.subr.bf16.mxu0 0
    %5111 = vmatpush1.bf16.msra.mxu0 %v5072
    %5112 = vmatprep.subr.bf16.mxu0 0
    %5113 = vmatpush1.bf16.msra.mxu0 %v5073
    %5114 = vmatprep.subr.bf16.mxu0 0
    %5115 = vmatpush1.bf16.msra.mxu0 %v5074
    %5116 = vmatprep.subr.bf16.mxu0 0
    %5117 = vmatpush1.bf16.msra.mxu0 %v5075
    %5118 = vmatprep.subr.bf16.mxu0 0
    %5119 = vmatpush1.bf16.msra.mxu0 %v5076
    %5120 = vmatprep.subr.bf16.mxu0 0
    %5121 = vmatpush1.bf16.msra.mxu0 %v5077
    %5122 = vmatprep.subr.bf16.mxu0 0
    %5123 = vmatpush1.bf16.msra.mxu0 %v5078
    %5124 = vmatprep.subr.bf16.mxu0 0
    %5125 = vmatpush1.bf16.msra.mxu0 %v5079
    %5126 = vmatprep.subr.bf16.mxu0 0
    %5127 = vmatpush1.bf16.msra.mxu0 %v5080
    %5128 = vmatprep.subr.bf16.mxu0 0
    %5129 = vmatpush1.bf16.msra.mxu0 %v5081
    %5130 = vmatprep.mubr.bf16.mxu0 %v4962
    %5131 = vmatmul.mubr.bf16.gmra.mrb[0].mxu0 %v4961
    %v5132 = vpop.f32.mrb[0].mxu0
    %v5133 = vadd.f32 %v5000, %v5132
    %v5134 = vpop.f32.mrb[0].mxu0
    %v5135 = vpop.f32.mrb[0].mxu0
    %v5136 = vpop.f32.mrb[0].mxu0
    %5137 = vdwg.mxu0
    %v5138 = vmax.f32 %v5133, 0.0
    %v5139 = vpack.c.bf16 %v5138, %v5138
    %v5140 = vld [vmem:[#allocation16] sm:$0xf]
    %v5141 = vld [vmem:[#allocation16 + $0x4] sm:$0xf]
    %v5142 = vld [vmem:[#allocation16 + $0x8] sm:$0xf]
    %v5143 = vld [vmem:[#allocation16 + $0xc] sm:$0xf]
    %v5144 = vld [vmem:[#allocation16 + $0x10] sm:$0xf]
    %v5145 = vld [vmem:[#allocation16 + $0x14] sm:$0xf]
    %v5146 = vld [vmem:[#allocation16 + $0x18] sm:$0xf]
    %v5147 = vld [vmem:[#allocation16 + $0x1c] sm:$0xf]
    %v5148 = vld [vmem:[#allocation16 + $0x20] sm:$0xf]
    %v5149 = vld [vmem:[#allocation16 + $0x24] sm:$0xf]
    %v5150 = vld [vmem:[#allocation16 + $0x28] sm:$0xf]
    %v5151 = vld [vmem:[#allocation16 + $0x2c] sm:$0xf]
    %v5152 = vld [vmem:[#allocation16 + $0x30] sm:$0xf]
    %v5153 = vld [vmem:[#allocation16 + $0x34] sm:$0xf]
    %v5154 = vld [vmem:[#allocation16 + $0x38] sm:$0xf]
    %v5155 = vld [vmem:[#allocation16 + $0x3c] sm:$0xf]
    %v5156 = vld [vmem:[#allocation17] sm:$0x1]
    %v5158 = vlaneseq
    %v5159 = vshrl.u32 %v5158, 7
    %v5160 = vsub.s32 0, %v5159
    %v5161 = vrot.slane %v5156, %v5160
    %v5179 = vunpack.c.l.b16 %v5140
    %v5180 = vunpack.c.l.b16 %v5141
    %v5181 = vunpack.c.l.b16 %v5142
    %v5182 = vunpack.c.l.b16 %v5143
    %v5183 = vunpack.c.l.b16 %v5144
    %v5184 = vunpack.c.l.b16 %v5145
    %v5185 = vunpack.c.l.b16 %v5146
    %v5186 = vunpack.c.l.b16 %v5147
    %v5187 = vunpack.c.l.b16 %v5148
    %v5188 = vunpack.c.l.b16 %v5149
    %v5189 = vunpack.c.l.b16 %v5150
    %v5190 = vunpack.c.l.b16 %v5151
    %v5191 = vunpack.c.l.b16 %v5152
    %v5192 = vunpack.c.l.b16 %v5153
    %v5193 = vunpack.c.l.b16 %v5154
    %v5194 = vunpack.c.l.b16 %v5155
    %v5195 = vpack.c.b16 %v5180, %v5179
    %v5196 = vpack.c.b16 %v5182, %v5181
    %v5197 = vpack.c.b16 %v5184, %v5183
    %v5198 = vpack.c.b16 %v5186, %v5185
    %v5199 = vpack.c.b16 %v5188, %v5187
    %v5200 = vpack.c.b16 %v5190, %v5189
    %v5201 = vpack.c.b16 %v5192, %v5191
    %v5202 = vpack.c.b16 %v5194, %v5193
    %5211 = vmatprep.subr.bf16.mxu0 0
    %5212 = vmatpush1.bf16.msra.mxu0 %v5195
    %5213 = vmatprep.subr.bf16.mxu0 0
    %5214 = vmatpush1.bf16.msra.mxu0 %v5196
    %5215 = vmatprep.subr.bf16.mxu0 0
    %5216 = vmatpush1.bf16.msra.mxu0 %v5197
    %5217 = vmatprep.subr.bf16.mxu0 0
    %5218 = vmatpush1.bf16.msra.mxu0 %v5198
    %5219 = vmatprep.subr.bf16.mxu0 0
    %5220 = vmatpush1.bf16.msra.mxu0 %v5199
    %5221 = vmatprep.subr.bf16.mxu0 0
    %5222 = vmatpush1.bf16.msra.mxu0 %v5200
    %5223 = vmatprep.subr.bf16.mxu0 0
    %5224 = vmatpush1.bf16.msra.mxu0 %v5201
    %5225 = vmatprep.subr.bf16.mxu0 0
    %5226 = vmatpush1.bf16.msra.mxu0 %v5202
    %5227 = vmatprep.subr.bf16.mxu0 0
    %5228 = vmatpush1.bf16.msra.mxu0 0
    %5229 = vmatprep.subr.bf16.mxu0 0
    %5230 = vmatpush1.bf16.msra.mxu0 0
    %5231 = vmatprep.subr.bf16.mxu0 0
    %5232 = vmatpush1.bf16.msra.mxu0 0
    %5233 = vmatprep.subr.bf16.mxu0 0
    %5234 = vmatpush1.bf16.msra.mxu0 0
    %5235 = vmatprep.subr.bf16.mxu0 0
    %5236 = vmatpush1.bf16.msra.mxu0 0
    %5237 = vmatprep.subr.bf16.mxu0 0
    %5238 = vmatpush1.bf16.msra.mxu0 0
    %5239 = vmatprep.subr.bf16.mxu0 0
    %5240 = vmatpush1.bf16.msra.mxu0 0
    %5241 = vmatprep.subr.bf16.mxu0 0
    %5242 = vmatpush1.bf16.msra.mxu0 0
    %5243 = vmatprep.mubr.bf16.mxu0 0
    %5244 = vmatmul.mubr.bf16.gmra.mrb[0].mxu0 %v5139
    %v5245 = vpop.f32.mrb[0].mxu0
    %v5246 = vadd.f32 %v5161, %v5245
    %v5247 = vpop.f32.mrb[0].mxu0
    %v5248 = vpop.f32.mrb[0].mxu0
    %v5249 = vpop.f32.mrb[0].mxu0
    %5250 = vdwg.mxu0
    %5251 = vst [vmem:[#allocation19] sm:$0xff] %v5246
    // Predicated region
    $region86: #{tpu_custom_call.1} parent=1 // pred_check
      _
    $region87: #{tpu_custom_call.1} parent=1 // pred_check_branch
      %5253 = sbr.rel (0) target = $region89
    $region88: #{tpu_custom_call.1} parent=1 // pred_region
      %s5255 = ssub.s32 128, 128
      %5256 = vsyncadd [#allocation4], %s5255
      %s5258 = sshll.u32 [#allocation19], 4
      %s5259 = int_to_ptr.vmem [resolvable:$true] %s5258
      %5261 = dma.vmem_to_hbm [thread:$0]  %s5259, 128, %s11, [#allocation4]
    $region89: #{tpu_custom_call.1} parent=1 // pred_fallthru
      _
    // Predicated region
    $region90: #{tpu_custom_call.1} parent=1 // pred_check
      _
    $region91: #{tpu_custom_call.1} parent=1 // pred_check_branch
      %5263 = sbr.rel (0) target = $region93
    $region92: #{tpu_custom_call.1} parent=1 // pred_region
      %5264 = dma.done [#allocation4], 128
    $region93: #{tpu_custom_call.1} parent=1 // pred_fallthru
      _
    %5265 = vsyncpa [#allocation3], 1
    %5266 = vsyncpa [#allocation6], 1
    %5267 = vsyncpa [#allocation9], 1
    %5268 = vsyncpa [#allocation12], 1
    %5269 = vsyncpa [#allocation15], 1
    %5270 = vsyncpa [#allocation18], 1
    %5271 = vsyncpa [#allocation4], 1

</llo_original>
